<compile_context>
chip_gen: v6e
topology: v6e:2x2x1
jax: 0.10.0
libtpu: 0.0.40
codegen_flags: <defaults>
</compile_context>

<pallas_src>
import numpy as np
import jax
import jax.numpy as jnp
from jax.experimental import pallas as pl
from jax.experimental.pallas import tpu as pltpu

# Flip to jnp.bfloat16 on v6e/v7x to feed the MXU at its bf16 rate (accumulation
# stays f32 via preferred_element_type).  Kept f32 here to match the PyTorch
# reference numerics exactly.
MXU_INPUT_DTYPE = jnp.float32


def _mxu_dot(a, b):
    return jnp.dot(a.astype(MXU_INPUT_DTYPE), b.astype(MXU_INPUT_DTYPE),
                   preferred_element_type=jnp.float32)


# ------------------------------ kernel helpers ------------------------------

def _conv_relu(x, t, b, k, ho_pad):
    """Valid conv (stride 1) via pre-lowered block-Toeplitz weights, fused bias+ReLU.

    x: (cin, h, w) resident activation value, h % 8 == 0.
    t: (cout*ho_pad, k*cin*h) lowered weight matrix (host-built).
    b: (cout, 1, 1) bias.
    Returns (cout, ho_pad, w-k+1); rows >= the valid Ho are don't-care padding.
    """
    cin, h, w = x.shape
    wo = w - k + 1
    cout = t.shape[0] // ho_pad
    # "im2col" without HBM materialization: k shifted column-slabs of the resident
    # input, folded with a no-op reshape (h % 8 == 0) and stacked on sublanes.
    rhs = jnp.concatenate(
        [x[:, :, dj:dj + wo].reshape(cin * h, wo) for dj in range(k)], axis=0)
    y = _mxu_dot(t, rhs)                        # (cout*ho_pad, wo): one MXU matmul
    y = y.reshape(cout, ho_pad, wo) + b         # no-op split: ho_pad % 8 == 0
    return jnp.maximum(y, 0.0)


def _maxpool2x2_into(src, vbuf_ref, dst_ref, valid_h):
    """2x2 / stride-2 max pool of src[:, :valid_h, :] written into dst_ref.

    src: (c, H, W) value; vbuf_ref: (c, Hp_pad, W) scratch; dst_ref: (c, Hp_pad, W//2).
    dst rows >= valid_h//2 come out zero (alignment padding that only ever multiplies
    zero Toeplitz columns downstream).  Only unit-stride slices + ref stores are used.
    """
    c, _, w = src.shape
    hp, wp = valid_h // 2, w // 2
    vbuf_ref[...] = jnp.zeros_like(vbuf_ref)
    for a in range(hp):                                    # vertical pairwise max
        vbuf_ref[:, a:a + 1, :] = jnp.maximum(src[:, 2 * a:2 * a + 1, :],
                                              src[:, 2 * a + 1:2 * a + 2, :])
    yv = vbuf_ref[...]
    for b in range(wp):                                    # horizontal pairwise max
        dst_ref[:, :, b:b + 1] = jnp.maximum(yv[:, :, 2 * b:2 * b + 1],
                                             yv[:, :, 2 * b + 1:2 * b + 2])


# ------------------------------ Pallas kernels ------------------------------

def _conv_stack_kernel(x_ref, t1_ref, b1_ref, t2_ref, b2_ref, o_ref,
                       vbuf1_ref, p1_ref, vbuf2_ref):
    x = x_ref[...]                                                        # (3, 32, 32)
    a1 = _conv_relu(x, t1_ref[...], b1_ref[...], k=5, ho_pad=32)          # (6, 32, 28)
    _maxpool2x2_into(a1, vbuf1_ref, p1_ref, valid_h=28)                   # (6, 16, 14)
    a2 = _conv_relu(p1_ref[...], t2_ref[...], b2_ref[...], k=5, ho_pad=16)  # (16,16,10)
    _maxpool2x2_into(a2, vbuf2_ref, o_ref, valid_h=10)                    # (16, 5, 5)


def _fc_stack_kernel(x_ref, w1_ref, b1_ref, w2_ref, b2_ref, w3_ref, b3_ref, o_ref):
    h = jnp.maximum(_mxu_dot(x_ref[...], w1_ref[...]) + b1_ref[...], 0.0)
    h = jnp.maximum(_mxu_dot(h, w2_ref[...]) + b2_ref[...], 0.0)
    o_ref[...] = (_mxu_dot(h, w3_ref[...]) + b3_ref[...]).astype(o_ref.dtype)


# ------------------------------ pallas_call wrappers ------------------------------

def _conv_stack(p, x):
    n = x.shape[0]
    t1, t2 = p["conv1_t"], p["conv2_t"]
    b1, b2 = p["conv1_b"], p["conv2_b"]
    return pl.pallas_call(
        _conv_stack_kernel,
        out_shape=jax.ShapeDtypeStruct((n, 16, 5, 5), jnp.float32),
        grid=(n,),
        in_specs=[
            pl.BlockSpec((None, 3, 32, 32), lambda i: (i, 0, 0, 0)),
            pl.BlockSpec(t1.shape, lambda i: (0, 0)),       # resident across grid
            pl.BlockSpec(b1.shape, lambda i: (0, 0, 0)),
            pl.BlockSpec(t2.shape, lambda i: (0, 0)),
            pl.BlockSpec(b2.shape, lambda i: (0, 0, 0)),
        ],
        out_specs=pl.BlockSpec((None, 16, 5, 5), lambda i: (i, 0, 0, 0)),
        scratch_shapes=[
            pltpu.VMEM((6, 16, 28), jnp.float32),    # pool-1 vertical buffer
            pltpu.VMEM((6, 16, 14), jnp.float32),    # pooled conv1 (rows padded to 16)
            pltpu.VMEM((16, 5, 10), jnp.float32),    # pool-2 vertical buffer
        ],
        compiler_params=pltpu.CompilerParams(
            dimension_semantics=("parallel",),
            vmem_limit_bytes=32 * 1024 * 1024),
    )(x, t1, b1, t2, b2)


def _fc_stack(p, feats):
    n, kf = feats.shape
    tm = min(n, 256) if n % 8 == 0 else n          # batch tile (multiple of 8 or full)
    w1, b1 = p["fc1_w"], p["fc1_b"]
    w2, b2 = p["fc2_w"], p["fc2_b"]
    w3, b3 = p["fc3_w"], p["fc3_b"]
    nout = w3.shape[1]
    return pl.pallas_call(
        _fc_stack_kernel,
        out_shape=jax.ShapeDtypeStruct((n, nout), jnp.float32),
        grid=(pl.cdiv(n, tm),),
        in_specs=[
            pl.BlockSpec((tm, kf), lambda m: (m, 0)),
            pl.BlockSpec(w1.shape, lambda m: (0, 0)),
            pl.BlockSpec(b1.shape, lambda m: (0, 0)),
            pl.BlockSpec(w2.shape, lambda m: (0, 0)),
            pl.BlockSpec(b2.shape, lambda m: (0, 0)),
            pl.BlockSpec(w3.shape, lambda m: (0, 0)),
            pl.BlockSpec(b3.shape, lambda m: (0, 0)),
        ],
        out_specs=pl.BlockSpec((tm, nout), lambda m: (m, 0)),
        compiler_params=pltpu.CompilerParams(
            dimension_semantics=("parallel",),
            vmem_limit_bytes=32 * 1024 * 1024),
    )(feats, w1, b1, w2, b2, w3, b3)


# ------------------------------ host-side weight prep ------------------------------

def _lower_conv_weight(w, h_in, ho_valid, ho_pad):
    """(cout, cin, kh, kw) PyTorch conv weight -> block-Toeplitz (cout*ho_pad, kw*cin*h_in)
    so that  T @ rhs  (rhs = kw stacked column-slabs of the (cin, h_in, w) input)
    equals the valid convolution, with output rows >= ho_valid identically zero."""
    w = np.asarray(w, np.float32)
    cout, cin, kh, kw = w.shape
    t = np.zeros((cout, ho_pad, kw, cin, h_in), np.float32)
    wt = np.transpose(w, (0, 3, 1, 2))               # (cout, kw, cin, kh)
    for i in range(ho_valid):
        for di in range(kh):
            t[:, i, :, :, i + di] = wt[:, :, :, di]
    return jnp.asarray(t.reshape(cout * ho_pad, kw * cin * h_in))


def prepare_params(p):
    """One-time prep: lowered conv weights, transposed + 128-padded FC weights."""
    def pad2d(a, rows, cols):
        a = np.asarray(a, np.float32)
        out = np.zeros((rows, cols), np.float32)
        out[: a.shape[0], : a.shape[1]] = a
        return jnp.asarray(out)

    return {
        "conv1_t": _lower_conv_weight(p["conv1_w"], h_in=32, ho_valid=28, ho_pad=32),
        "conv1_b": jnp.asarray(p["conv1_b"]).reshape(6, 1, 1),
        "conv2_t": _lower_conv_weight(p["conv2_w"], h_in=16, ho_valid=10, ho_pad=16),
        "conv2_b": jnp.asarray(p["conv2_b"]).reshape(16, 1, 1),
        "fc1_w": pad2d(np.asarray(p["fc1_w"]).T, 400, 128),
        "fc1_b": pad2d(np.asarray(p["fc1_b"]).reshape(1, -1), 1, 128),
        "fc2_w": pad2d(np.asarray(p["fc2_w"]).T, 128, 128),
        "fc2_b": pad2d(np.asarray(p["fc2_b"]).reshape(1, -1), 1, 128),
        "fc3_w": pad2d(np.asarray(p["fc3_w"]).T, 128, 10),
        "fc3_b": pad2d(np.asarray(p["fc3_b"]).reshape(1, -1), 1, 10),
    }


# ------------------------------ model ------------------------------

def init_params(key):
    """Deterministic PyTorch-default-style uniform init."""
    def u(k, shape, fan_in):
        bound = 1.0 / (fan_in ** 0.5)
        return jax.random.uniform(k, shape, jnp.float32, -bound, bound)

    ks = jax.random.split(key, 10)
    return {
        "conv1_w": u(ks[0], (6, 3, 5, 5), 3 * 5 * 5),
        "conv1_b": u(ks[1], (6,), 3 * 5 * 5),
        "conv2_w": u(ks[2], (16, 6, 5, 5), 6 * 5 * 5),
        "conv2_b": u(ks[3], (16,), 6 * 5 * 5),
        "fc1_w":   u(ks[4], (120, 400), 400),
        "fc1_b":   u(ks[5], (120,), 400),
        "fc2_w":   u(ks[6], (84, 120), 120),
        "fc2_b":   u(ks[7], (84,), 120),
        "fc3_w":   u(ks[8], (10, 84), 84),
        "fc3_b":   u(ks[9], (10,), 84),
    }


def net_forward(prepped, x):
    # x: (N, 3, 32, 32) NCHW, matching nn.Conv2d.
    n = x.shape[0]
    feats = _conv_stack(prepped, x)        # (N, 16, 5, 5), conv1/relu/pool/conv2/relu/pool
    feats = feats.reshape(n, 16 * 5 * 5)   # same ordering as x.view(-1, 400) in PyTorch
    return _fc_stack(prepped, feats)       # (N, 10)


def reference_forward(p, x):
    """Pure-JAX reference of the PyTorch module (high precision)."""
    hp = jax.lax.Precision.HIGHEST

    def conv(z, w, b):
        y = jax.lax.conv_general_dilated(
            z, w, window_strides=(1, 1), padding="VALID",
            dimension_numbers=("NCHW", "OIHW", "NCHW"), precision=hp)
        return y + b.reshape(1, -1, 1, 1)

    def pool(z):
        return jax.lax.reduce_window(z, -jnp.inf, jax.lax.max,
                                     (1, 1, 2, 2), (1, 1, 2, 2), "VALID")

    y = pool(jax.nn.relu(conv(x, p["conv1_w"], p["conv1_b"])))
    y = pool(jax.nn.relu(conv(y, p["conv2_w"], p["conv2_b"])))
    y = y.reshape(y.shape[0], -1)
    y = jax.nn.relu(jnp.dot(y, p["fc1_w"].T, precision=hp) + p["fc1_b"])
    y = jax.nn.relu(jnp.dot(y, p["fc2_w"].T, precision=hp) + p["fc2_b"])
    return jnp.dot(y, p["fc3_w"].T, precision=hp) + p["fc3_b"]


if __name__ == "__main__":
    key = jax.random.PRNGKey(0)
    pkey, xkey = jax.random.split(key)
    params = init_params(pkey)
    prepped = prepare_params(params)
    # Spatial must be 32x32 so the flatten to 16*5*5 = 400 matches the module.
    x = jax.random.normal(xkey, (4, 3, 32, 32), dtype=jnp.float32)

    fwd = jax.jit(net_forward)
    out = jax.block_until_ready(fwd(prepped, x))
    assert out.shape == (4, 10) and out.dtype == jnp.float32

    ref = jax.block_until_ready(reference_forward(params, x))
    err = float(jnp.max(jnp.abs(out - ref)))
    assert err < 1e-2, f"mismatch vs reference: {err}"
    print("KERNEL_OK")
</pallas_src>

<mosaic_0001>
module attributes {stable_mosaic.version = 11 : i64} {
  func.func @_conv_stack_kernel(%arg0: i32, %arg1: memref<1x3x32x32xf32, #tpu.memory_space<vmem>>, %arg2: memref<192x480xf32, #tpu.memory_space<vmem>>, %arg3: memref<6x1x1xf32, #tpu.memory_space<vmem>>, %arg4: memref<256x480xf32, #tpu.memory_space<vmem>>, %arg5: memref<16x1x1xf32, #tpu.memory_space<vmem>>, %arg6: memref<1x16x5x5xf32, #tpu.memory_space<vmem>>, %arg7: memref<6x16x28xf32, #tpu.memory_space<vmem>>, %arg8: memref<6x16x14xf32, #tpu.memory_space<vmem>>, %arg9: memref<16x5x10xf32, #tpu.memory_space<vmem>>) attributes {dimension_semantics = [#tpu.dimension_semantics<parallel>], iteration_bounds = array<i64: 4>, scalar_prefetch = 0 : i64, scratch_operands = 3 : i64, tpu.core_type = #tpu.core_type<tc>, window_params = [{transform_indices = @transform_0, window_bounds = array<i64: 1, 3, 32, 32>}, {pipeline_mode = #tpu.pipeline_mode<synchronous>, transform_indices = @transform_1, window_bounds = array<i64: 192, 480>}, {pipeline_mode = #tpu.pipeline_mode<synchronous>, transform_indices = @transform_2, window_bounds = array<i64: 6, 1, 1>}, {pipeline_mode = #tpu.pipeline_mode<synchronous>, transform_indices = @transform_3, window_bounds = array<i64: 256, 480>}, {pipeline_mode = #tpu.pipeline_mode<synchronous>, transform_indices = @transform_4, window_bounds = array<i64: 16, 1, 1>}, {transform_indices = @transform_5, window_bounds = array<i64: 1, 16, 5, 5>}]} {
    %c0 = arith.constant 0 : index
    %c0_0 = arith.constant 0 : index
    %c0_1 = arith.constant 0 : index
    %c0_2 = arith.constant 0 : index
    %0 = vector.load %arg1[%c0, %c0_0, %c0_1, %c0_2] : memref<1x3x32x32xf32, #tpu.memory_space<vmem>>, vector<1x3x32x32xf32>
    %1 = vector.shape_cast %0 : vector<1x3x32x32xf32> to vector<3x32x32xf32>
    %c0_3 = arith.constant 0 : index
    %c0_4 = arith.constant 0 : index
    %2 = vector.load %arg2[%c0_3, %c0_4] : memref<192x480xf32, #tpu.memory_space<vmem>>, vector<192x480xf32>
    %c0_5 = arith.constant 0 : index
    %c0_6 = arith.constant 0 : index
    %c0_7 = arith.constant 0 : index
    %3 = vector.load %arg3[%c0_5, %c0_6, %c0_7] : memref<6x1x1xf32, #tpu.memory_space<vmem>>, vector<6x1x1xf32>
    %4 = vector.extract_strided_slice %1 {offsets = [0, 0, 0], sizes = [3, 32, 28], strides = [1, 1, 1]} : vector<3x32x32xf32> to vector<3x32x28xf32>
    %5 = vector.shape_cast %4 : vector<3x32x28xf32> to vector<96x28xf32>
    %6 = vector.extract_strided_slice %1 {offsets = [0, 0, 1], sizes = [3, 32, 28], strides = [1, 1, 1]} : vector<3x32x32xf32> to vector<3x32x28xf32>
    %7 = vector.shape_cast %6 : vector<3x32x28xf32> to vector<96x28xf32>
    %8 = vector.extract_strided_slice %1 {offsets = [0, 0, 2], sizes = [3, 32, 28], strides = [1, 1, 1]} : vector<3x32x32xf32> to vector<3x32x28xf32>
    %9 = vector.shape_cast %8 : vector<3x32x28xf32> to vector<96x28xf32>
    %10 = vector.extract_strided_slice %1 {offsets = [0, 0, 3], sizes = [3, 32, 28], strides = [1, 1, 1]} : vector<3x32x32xf32> to vector<3x32x28xf32>
    %11 = vector.shape_cast %10 : vector<3x32x28xf32> to vector<96x28xf32>
    %12 = vector.extract_strided_slice %1 {offsets = [0, 0, 4], sizes = [3, 32, 28], strides = [1, 1, 1]} : vector<3x32x32xf32> to vector<3x32x28xf32>
    %13 = vector.shape_cast %12 : vector<3x32x28xf32> to vector<96x28xf32>
    %14 = tpu.concatenate %5, %7, %9, %11, %13 in 0 : vector<96x28xf32>, vector<96x28xf32>, vector<96x28xf32>, vector<96x28xf32>, vector<96x28xf32> -> vector<480x28xf32>
    %cst = arith.constant dense<0.000000e+00> : vector<192x28xf32>
    %15 = tpu.matmul %2, %14, %cst {dimension_numbers = #tpu.dot_dimension_numbers<[1], [0], [0], [1], [0, 0, 1, 1], [], []>} : vector<192x480xf32>, vector<480x28xf32>, vector<192x28xf32> -> vector<192x28xf32>
    %16 = vector.shape_cast %15 : vector<192x28xf32> to vector<6x32x28xf32>
    %17 = vector.broadcast %3 : vector<6x1x1xf32> to vector<6x32x28xf32>
    %18 = arith.addf %16, %17 : vector<6x32x28xf32>
    %cst_8 = arith.constant 0.000000e+00 : f32
    %19 = vector.broadcast %cst_8 : f32 to vector<6x32x28xf32>
    %20 = arith.maximumf %18, %19 : vector<6x32x28xf32>
    %cst_9 = arith.constant 0.000000e+00 : f32
    %21 = vector.broadcast %cst_9 : f32 to vector<6x16x28xf32>
    %c0_10 = arith.constant 0 : index
    %c0_11 = arith.constant 0 : index
    %c0_12 = arith.constant 0 : index
    %22 = vector.load %arg7[%c0_10, %c0_11, %c0_12] : memref<6x16x28xf32, #tpu.memory_space<vmem>>, vector<6x16x28xf32>
    tpu.vector_store %arg7[%c0_10, %c0_11, %c0_12], %21 {strides = array<i32>} : memref<6x16x28xf32, #tpu.memory_space<vmem>>, vector<6x16x28xf32>,
    %23 = vector.extract_strided_slice %20 {offsets = [0, 0, 0], sizes = [6, 1, 28], strides = [1, 1, 1]} : vector<6x32x28xf32> to vector<6x1x28xf32>
    %24 = vector.extract_strided_slice %20 {offsets = [0, 1, 0], sizes = [6, 1, 28], strides = [1, 1, 1]} : vector<6x32x28xf32> to vector<6x1x28xf32>
    %25 = arith.maximumf %23, %24 : vector<6x1x28xf32>
    %c0_13 = arith.constant 0 : index
    %c0_14 = arith.constant 0 : index
    %c0_15 = arith.constant 0 : index
    %26 = vector.load %arg7[%c0_13, %c0_14, %c0_15] : memref<6x16x28xf32, #tpu.memory_space<vmem>>, vector<6x1x28xf32>
    tpu.vector_store %arg7[%c0_13, %c0_14, %c0_15], %25 {strides = array<i32>} : memref<6x16x28xf32, #tpu.memory_space<vmem>>, vector<6x1x28xf32>,
    %27 = vector.extract_strided_slice %20 {offsets = [0, 2, 0], sizes = [6, 1, 28], strides = [1, 1, 1]} : vector<6x32x28xf32> to vector<6x1x28xf32>
    %28 = vector.extract_strided_slice %20 {offsets = [0, 3, 0], sizes = [6, 1, 28], strides = [1, 1, 1]} : vector<6x32x28xf32> to vector<6x1x28xf32>
    %29 = arith.maximumf %27, %28 : vector<6x1x28xf32>
    %c0_16 = arith.constant 0 : index
    %c1 = arith.constant 1 : index
    %c0_17 = arith.constant 0 : index
    %30 = vector.load %arg7[%c0_16, %c1, %c0_17] : memref<6x16x28xf32, #tpu.memory_space<vmem>>, vector<6x1x28xf32>
    tpu.vector_store %arg7[%c0_16, %c1, %c0_17], %29 {strides = array<i32>} : memref<6x16x28xf32, #tpu.memory_space<vmem>>, vector<6x1x28xf32>,
    %31 = vector.extract_strided_slice %20 {offsets = [0, 4, 0], sizes = [6, 1, 28], strides = [1, 1, 1]} : vector<6x32x28xf32> to vector<6x1x28xf32>
    %32 = vector.extract_strided_slice %20 {offsets = [0, 5, 0], sizes = [6, 1, 28], strides = [1, 1, 1]} : vector<6x32x28xf32> to vector<6x1x28xf32>
    %33 = arith.maximumf %31, %32 : vector<6x1x28xf32>
    %c0_18 = arith.constant 0 : index
    %c2 = arith.constant 2 : index
    %c0_19 = arith.constant 0 : index
    %34 = vector.load %arg7[%c0_18, %c2, %c0_19] : memref<6x16x28xf32, #tpu.memory_space<vmem>>, vector<6x1x28xf32>
    tpu.vector_store %arg7[%c0_18, %c2, %c0_19], %33 {strides = array<i32>} : memref<6x16x28xf32, #tpu.memory_space<vmem>>, vector<6x1x28xf32>,
    %35 = vector.extract_strided_slice %20 {offsets = [0, 6, 0], sizes = [6, 1, 28], strides = [1, 1, 1]} : vector<6x32x28xf32> to vector<6x1x28xf32>
    %36 = vector.extract_strided_slice %20 {offsets = [0, 7, 0], sizes = [6, 1, 28], strides = [1, 1, 1]} : vector<6x32x28xf32> to vector<6x1x28xf32>
    %37 = arith.maximumf %35, %36 : vector<6x1x28xf32>
    %c0_20 = arith.constant 0 : index
    %c3 = arith.constant 3 : index
    %c0_21 = arith.constant 0 : index
    %38 = vector.load %arg7[%c0_20, %c3, %c0_21] : memref<6x16x28xf32, #tpu.memory_space<vmem>>, vector<6x1x28xf32>
    tpu.vector_store %arg7[%c0_20, %c3, %c0_21], %37 {strides = array<i32>} : memref<6x16x28xf32, #tpu.memory_space<vmem>>, vector<6x1x28xf32>,
    %39 = vector.extract_strided_slice %20 {offsets = [0, 8, 0], sizes = [6, 1, 28], strides = [1, 1, 1]} : vector<6x32x28xf32> to vector<6x1x28xf32>
    %40 = vector.extract_strided_slice %20 {offsets = [0, 9, 0], sizes = [6, 1, 28], strides = [1, 1, 1]} : vector<6x32x28xf32> to vector<6x1x28xf32>
    %41 = arith.maximumf %39, %40 : vector<6x1x28xf32>
    %c0_22 = arith.constant 0 : index
    %c4 = arith.constant 4 : index
    %c0_23 = arith.constant 0 : index
    %42 = vector.load %arg7[%c0_22, %c4, %c0_23] : memref<6x16x28xf32, #tpu.memory_space<vmem>>, vector<6x1x28xf32>
    tpu.vector_store %arg7[%c0_22, %c4, %c0_23], %41 {strides = array<i32>} : memref<6x16x28xf32, #tpu.memory_space<vmem>>, vector<6x1x28xf32>,
    %43 = vector.extract_strided_slice %20 {offsets = [0, 10, 0], sizes = [6, 1, 28], strides = [1, 1, 1]} : vector<6x32x28xf32> to vector<6x1x28xf32>
    %44 = vector.extract_strided_slice %20 {offsets = [0, 11, 0], sizes = [6, 1, 28], strides = [1, 1, 1]} : vector<6x32x28xf32> to vector<6x1x28xf32>
    %45 = arith.maximumf %43, %44 : vector<6x1x28xf32>
    %c0_24 = arith.constant 0 : index
    %c5 = arith.constant 5 : index
    %c0_25 = arith.constant 0 : index
    %46 = vector.load %arg7[%c0_24, %c5, %c0_25] : memref<6x16x28xf32, #tpu.memory_space<vmem>>, vector<6x1x28xf32>
    tpu.vector_store %arg7[%c0_24, %c5, %c0_25], %45 {strides = array<i32>} : memref<6x16x28xf32, #tpu.memory_space<vmem>>, vector<6x1x28xf32>,
    %47 = vector.extract_strided_slice %20 {offsets = [0, 12, 0], sizes = [6, 1, 28], strides = [1, 1, 1]} : vector<6x32x28xf32> to vector<6x1x28xf32>
    %48 = vector.extract_strided_slice %20 {offsets = [0, 13, 0], sizes = [6, 1, 28], strides = [1, 1, 1]} : vector<6x32x28xf32> to vector<6x1x28xf32>
    %49 = arith.maximumf %47, %48 : vector<6x1x28xf32>
    %c0_26 = arith.constant 0 : index
    %c6 = arith.constant 6 : index
    %c0_27 = arith.constant 0 : index
    %50 = vector.load %arg7[%c0_26, %c6, %c0_27] : memref<6x16x28xf32, #tpu.memory_space<vmem>>, vector<6x1x28xf32>
    tpu.vector_store %arg7[%c0_26, %c6, %c0_27], %49 {strides = array<i32>} : memref<6x16x28xf32, #tpu.memory_space<vmem>>, vector<6x1x28xf32>,
    %51 = vector.extract_strided_slice %20 {offsets = [0, 14, 0], sizes = [6, 1, 28], strides = [1, 1, 1]} : vector<6x32x28xf32> to vector<6x1x28xf32>
    %52 = vector.extract_strided_slice %20 {offsets = [0, 15, 0], sizes = [6, 1, 28], strides = [1, 1, 1]} : vector<6x32x28xf32> to vector<6x1x28xf32>
    %53 = arith.maximumf %51, %52 : vector<6x1x28xf32>
    %c0_28 = arith.constant 0 : index
    %c7 = arith.constant 7 : index
    %c0_29 = arith.constant 0 : index
    %54 = vector.load %arg7[%c0_28, %c7, %c0_29] : memref<6x16x28xf32, #tpu.memory_space<vmem>>, vector<6x1x28xf32>
    tpu.vector_store %arg7[%c0_28, %c7, %c0_29], %53 {strides = array<i32>} : memref<6x16x28xf32, #tpu.memory_space<vmem>>, vector<6x1x28xf32>,
    %55 = vector.extract_strided_slice %20 {offsets = [0, 16, 0], sizes = [6, 1, 28], strides = [1, 1, 1]} : vector<6x32x28xf32> to vector<6x1x28xf32>
    %56 = vector.extract_strided_slice %20 {offsets = [0, 17, 0], sizes = [6, 1, 28], strides = [1, 1, 1]} : vector<6x32x28xf32> to vector<6x1x28xf32>
    %57 = arith.maximumf %55, %56 : vector<6x1x28xf32>
    %c0_30 = arith.constant 0 : index
    %c8 = arith.constant 8 : index
    %c0_31 = arith.constant 0 : index
    %58 = vector.load %arg7[%c0_30, %c8, %c0_31] : memref<6x16x28xf32, #tpu.memory_space<vmem>>, vector<6x1x28xf32>
    tpu.vector_store %arg7[%c0_30, %c8, %c0_31], %57 {strides = array<i32>} : memref<6x16x28xf32, #tpu.memory_space<vmem>>, vector<6x1x28xf32>,
    %59 = vector.extract_strided_slice %20 {offsets = [0, 18, 0], sizes = [6, 1, 28], strides = [1, 1, 1]} : vector<6x32x28xf32> to vector<6x1x28xf32>
    %60 = vector.extract_strided_slice %20 {offsets = [0, 19, 0], sizes = [6, 1, 28], strides = [1, 1, 1]} : vector<6x32x28xf32> to vector<6x1x28xf32>
    %61 = arith.maximumf %59, %60 : vector<6x1x28xf32>
    %c0_32 = arith.constant 0 : index
    %c9 = arith.constant 9 : index
    %c0_33 = arith.constant 0 : index
    %62 = vector.load %arg7[%c0_32, %c9, %c0_33] : memref<6x16x28xf32, #tpu.memory_space<vmem>>, vector<6x1x28xf32>
    tpu.vector_store %arg7[%c0_32, %c9, %c0_33], %61 {strides = array<i32>} : memref<6x16x28xf32, #tpu.memory_space<vmem>>, vector<6x1x28xf32>,
    %63 = vector.extract_strided_slice %20 {offsets = [0, 20, 0], sizes = [6, 1, 28], strides = [1, 1, 1]} : vector<6x32x28xf32> to vector<6x1x28xf32>
    %64 = vector.extract_strided_slice %20 {offsets = [0, 21, 0], sizes = [6, 1, 28], strides = [1, 1, 1]} : vector<6x32x28xf32> to vector<6x1x28xf32>
    %65 = arith.maximumf %63, %64 : vector<6x1x28xf32>
    %c0_34 = arith.constant 0 : index
    %c10 = arith.constant 10 : index
    %c0_35 = arith.constant 0 : index
    %66 = vector.load %arg7[%c0_34, %c10, %c0_35] : memref<6x16x28xf32, #tpu.memory_space<vmem>>, vector<6x1x28xf32>
    tpu.vector_store %arg7[%c0_34, %c10, %c0_35], %65 {strides = array<i32>} : memref<6x16x28xf32, #tpu.memory_space<vmem>>, vector<6x1x28xf32>,
    %67 = vector.extract_strided_slice %20 {offsets = [0, 22, 0], sizes = [6, 1, 28], strides = [1, 1, 1]} : vector<6x32x28xf32> to vector<6x1x28xf32>
    %68 = vector.extract_strided_slice %20 {offsets = [0, 23, 0], sizes = [6, 1, 28], strides = [1, 1, 1]} : vector<6x32x28xf32> to vector<6x1x28xf32>
    %69 = arith.maximumf %67, %68 : vector<6x1x28xf32>
    %c0_36 = arith.constant 0 : index
    %c11 = arith.constant 11 : index
    %c0_37 = arith.constant 0 : index
    %70 = vector.load %arg7[%c0_36, %c11, %c0_37] : memref<6x16x28xf32, #tpu.memory_space<vmem>>, vector<6x1x28xf32>
    tpu.vector_store %arg7[%c0_36, %c11, %c0_37], %69 {strides = array<i32>} : memref<6x16x28xf32, #tpu.memory_space<vmem>>, vector<6x1x28xf32>,
    %71 = vector.extract_strided_slice %20 {offsets = [0, 24, 0], sizes = [6, 1, 28], strides = [1, 1, 1]} : vector<6x32x28xf32> to vector<6x1x28xf32>
    %72 = vector.extract_strided_slice %20 {offsets = [0, 25, 0], sizes = [6, 1, 28], strides = [1, 1, 1]} : vector<6x32x28xf32> to vector<6x1x28xf32>
    %73 = arith.maximumf %71, %72 : vector<6x1x28xf32>
    %c0_38 = arith.constant 0 : index
    %c12 = arith.constant 12 : index
    %c0_39 = arith.constant 0 : index
    %74 = vector.load %arg7[%c0_38, %c12, %c0_39] : memref<6x16x28xf32, #tpu.memory_space<vmem>>, vector<6x1x28xf32>
    tpu.vector_store %arg7[%c0_38, %c12, %c0_39], %73 {strides = array<i32>} : memref<6x16x28xf32, #tpu.memory_space<vmem>>, vector<6x1x28xf32>,
    %75 = vector.extract_strided_slice %20 {offsets = [0, 26, 0], sizes = [6, 1, 28], strides = [1, 1, 1]} : vector<6x32x28xf32> to vector<6x1x28xf32>
    %76 = vector.extract_strided_slice %20 {offsets = [0, 27, 0], sizes = [6, 1, 28], strides = [1, 1, 1]} : vector<6x32x28xf32> to vector<6x1x28xf32>
    %77 = arith.maximumf %75, %76 : vector<6x1x28xf32>
    %c0_40 = arith.constant 0 : index
    %c13 = arith.constant 13 : index
    %c0_41 = arith.constant 0 : index
    %78 = vector.load %arg7[%c0_40, %c13, %c0_41] : memref<6x16x28xf32, #tpu.memory_space<vmem>>, vector<6x1x28xf32>
    tpu.vector_store %arg7[%c0_40, %c13, %c0_41], %77 {strides = array<i32>} : memref<6x16x28xf32, #tpu.memory_space<vmem>>, vector<6x1x28xf32>,
    %c0_42 = arith.constant 0 : index
    %c0_43 = arith.constant 0 : index
    %c0_44 = arith.constant 0 : index
    %79 = vector.load %arg7[%c0_42, %c0_43, %c0_44] : memref<6x16x28xf32, #tpu.memory_space<vmem>>, vector<6x16x28xf32>
    %80 = vector.extract_strided_slice %79 {offsets = [0, 0, 0], sizes = [6, 16, 1], strides = [1, 1, 1]} : vector<6x16x28xf32> to vector<6x16x1xf32>
    %81 = vector.extract_strided_slice %79 {offsets = [0, 0, 1], sizes = [6, 16, 1], strides = [1, 1, 1]} : vector<6x16x28xf32> to vector<6x16x1xf32>
    %82 = arith.maximumf %80, %81 : vector<6x16x1xf32>
    %c0_45 = arith.constant 0 : index
    %c0_46 = arith.constant 0 : index
    %c0_47 = arith.constant 0 : index
    %83 = vector.load %arg8[%c0_45, %c0_46, %c0_47] : memref<6x16x14xf32, #tpu.memory_space<vmem>>, vector<6x16x1xf32>
    tpu.vector_store %arg8[%c0_45, %c0_46, %c0_47], %82 {strides = array<i32>} : memref<6x16x14xf32, #tpu.memory_space<vmem>>, vector<6x16x1xf32>,
    %84 = vector.extract_strided_slice %79 {offsets = [0, 0, 2], sizes = [6, 16, 1], strides = [1, 1, 1]} : vector<6x16x28xf32> to vector<6x16x1xf32>
    %85 = vector.extract_strided_slice %79 {offsets = [0, 0, 3], sizes = [6, 16, 1], strides = [1, 1, 1]} : vector<6x16x28xf32> to vector<6x16x1xf32>
    %86 = arith.maximumf %84, %85 : vector<6x16x1xf32>
    %c0_48 = arith.constant 0 : index
    %c0_49 = arith.constant 0 : index
    %c1_50 = arith.constant 1 : index
    %87 = vector.load %arg8[%c0_48, %c0_49, %c1_50] : memref<6x16x14xf32, #tpu.memory_space<vmem>>, vector<6x16x1xf32>
    tpu.vector_store %arg8[%c0_48, %c0_49, %c1_50], %86 {strides = array<i32>} : memref<6x16x14xf32, #tpu.memory_space<vmem>>, vector<6x16x1xf32>,
    %88 = vector.extract_strided_slice %79 {offsets = [0, 0, 4], sizes = [6, 16, 1], strides = [1, 1, 1]} : vector<6x16x28xf32> to vector<6x16x1xf32>
    %89 = vector.extract_strided_slice %79 {offsets = [0, 0, 5], sizes = [6, 16, 1], strides = [1, 1, 1]} : vector<6x16x28xf32> to vector<6x16x1xf32>
    %90 = arith.maximumf %88, %89 : vector<6x16x1xf32>
    %c0_51 = arith.constant 0 : index
    %c0_52 = arith.constant 0 : index
    %c2_53 = arith.constant 2 : index
    %91 = vector.load %arg8[%c0_51, %c0_52, %c2_53] : memref<6x16x14xf32, #tpu.memory_space<vmem>>, vector<6x16x1xf32>
    tpu.vector_store %arg8[%c0_51, %c0_52, %c2_53], %90 {strides = array<i32>} : memref<6x16x14xf32, #tpu.memory_space<vmem>>, vector<6x16x1xf32>,
    %92 = vector.extract_strided_slice %79 {offsets = [0, 0, 6], sizes = [6, 16, 1], strides = [1, 1, 1]} : vector<6x16x28xf32> to vector<6x16x1xf32>
    %93 = vector.extract_strided_slice %79 {offsets = [0, 0, 7], sizes = [6, 16, 1], strides = [1, 1, 1]} : vector<6x16x28xf32> to vector<6x16x1xf32>
    %94 = arith.maximumf %92, %93 : vector<6x16x1xf32>
    %c0_54 = arith.constant 0 : index
    %c0_55 = arith.constant 0 : index
    %c3_56 = arith.constant 3 : index
    %95 = vector.load %arg8[%c0_54, %c0_55, %c3_56] : memref<6x16x14xf32, #tpu.memory_space<vmem>>, vector<6x16x1xf32>
    tpu.vector_store %arg8[%c0_54, %c0_55, %c3_56], %94 {strides = array<i32>} : memref<6x16x14xf32, #tpu.memory_space<vmem>>, vector<6x16x1xf32>,
    %96 = vector.extract_strided_slice %79 {offsets = [0, 0, 8], sizes = [6, 16, 1], strides = [1, 1, 1]} : vector<6x16x28xf32> to vector<6x16x1xf32>
    %97 = vector.extract_strided_slice %79 {offsets = [0, 0, 9], sizes = [6, 16, 1], strides = [1, 1, 1]} : vector<6x16x28xf32> to vector<6x16x1xf32>
    %98 = arith.maximumf %96, %97 : vector<6x16x1xf32>
    %c0_57 = arith.constant 0 : index
    %c0_58 = arith.constant 0 : index
    %c4_59 = arith.constant 4 : index
    %99 = vector.load %arg8[%c0_57, %c0_58, %c4_59] : memref<6x16x14xf32, #tpu.memory_space<vmem>>, vector<6x16x1xf32>
    tpu.vector_store %arg8[%c0_57, %c0_58, %c4_59], %98 {strides = array<i32>} : memref<6x16x14xf32, #tpu.memory_space<vmem>>, vector<6x16x1xf32>,
    %100 = vector.extract_strided_slice %79 {offsets = [0, 0, 10], sizes = [6, 16, 1], strides = [1, 1, 1]} : vector<6x16x28xf32> to vector<6x16x1xf32>
    %101 = vector.extract_strided_slice %79 {offsets = [0, 0, 11], sizes = [6, 16, 1], strides = [1, 1, 1]} : vector<6x16x28xf32> to vector<6x16x1xf32>
    %102 = arith.maximumf %100, %101 : vector<6x16x1xf32>
    %c0_60 = arith.constant 0 : index
    %c0_61 = arith.constant 0 : index
    %c5_62 = arith.constant 5 : index
    %103 = vector.load %arg8[%c0_60, %c0_61, %c5_62] : memref<6x16x14xf32, #tpu.memory_space<vmem>>, vector<6x16x1xf32>
    tpu.vector_store %arg8[%c0_60, %c0_61, %c5_62], %102 {strides = array<i32>} : memref<6x16x14xf32, #tpu.memory_space<vmem>>, vector<6x16x1xf32>,
    %104 = vector.extract_strided_slice %79 {offsets = [0, 0, 12], sizes = [6, 16, 1], strides = [1, 1, 1]} : vector<6x16x28xf32> to vector<6x16x1xf32>
    %105 = vector.extract_strided_slice %79 {offsets = [0, 0, 13], sizes = [6, 16, 1], strides = [1, 1, 1]} : vector<6x16x28xf32> to vector<6x16x1xf32>
    %106 = arith.maximumf %104, %105 : vector<6x16x1xf32>
    %c0_63 = arith.constant 0 : index
    %c0_64 = arith.constant 0 : index
    %c6_65 = arith.constant 6 : index
    %107 = vector.load %arg8[%c0_63, %c0_64, %c6_65] : memref<6x16x14xf32, #tpu.memory_space<vmem>>, vector<6x16x1xf32>
    tpu.vector_store %arg8[%c0_63, %c0_64, %c6_65], %106 {strides = array<i32>} : memref<6x16x14xf32, #tpu.memory_space<vmem>>, vector<6x16x1xf32>,
    %108 = vector.extract_strided_slice %79 {offsets = [0, 0, 14], sizes = [6, 16, 1], strides = [1, 1, 1]} : vector<6x16x28xf32> to vector<6x16x1xf32>
    %109 = vector.extract_strided_slice %79 {offsets = [0, 0, 15], sizes = [6, 16, 1], strides = [1, 1, 1]} : vector<6x16x28xf32> to vector<6x16x1xf32>
    %110 = arith.maximumf %108, %109 : vector<6x16x1xf32>
    %c0_66 = arith.constant 0 : index
    %c0_67 = arith.constant 0 : index
    %c7_68 = arith.constant 7 : index
    %111 = vector.load %arg8[%c0_66, %c0_67, %c7_68] : memref<6x16x14xf32, #tpu.memory_space<vmem>>, vector<6x16x1xf32>
    tpu.vector_store %arg8[%c0_66, %c0_67, %c7_68], %110 {strides = array<i32>} : memref<6x16x14xf32, #tpu.memory_space<vmem>>, vector<6x16x1xf32>,
    %112 = vector.extract_strided_slice %79 {offsets = [0, 0, 16], sizes = [6, 16, 1], strides = [1, 1, 1]} : vector<6x16x28xf32> to vector<6x16x1xf32>
    %113 = vector.extract_strided_slice %79 {offsets = [0, 0, 17], sizes = [6, 16, 1], strides = [1, 1, 1]} : vector<6x16x28xf32> to vector<6x16x1xf32>
    %114 = arith.maximumf %112, %113 : vector<6x16x1xf32>
    %c0_69 = arith.constant 0 : index
    %c0_70 = arith.constant 0 : index
    %c8_71 = arith.constant 8 : index
    %115 = vector.load %arg8[%c0_69, %c0_70, %c8_71] : memref<6x16x14xf32, #tpu.memory_space<vmem>>, vector<6x16x1xf32>
    tpu.vector_store %arg8[%c0_69, %c0_70, %c8_71], %114 {strides = array<i32>} : memref<6x16x14xf32, #tpu.memory_space<vmem>>, vector<6x16x1xf32>,
    %116 = vector.extract_strided_slice %79 {offsets = [0, 0, 18], sizes = [6, 16, 1], strides = [1, 1, 1]} : vector<6x16x28xf32> to vector<6x16x1xf32>
    %117 = vector.extract_strided_slice %79 {offsets = [0, 0, 19], sizes = [6, 16, 1], strides = [1, 1, 1]} : vector<6x16x28xf32> to vector<6x16x1xf32>
    %118 = arith.maximumf %116, %117 : vector<6x16x1xf32>
    %c0_72 = arith.constant 0 : index
    %c0_73 = arith.constant 0 : index
    %c9_74 = arith.constant 9 : index
    %119 = vector.load %arg8[%c0_72, %c0_73, %c9_74] : memref<6x16x14xf32, #tpu.memory_space<vmem>>, vector<6x16x1xf32>
    tpu.vector_store %arg8[%c0_72, %c0_73, %c9_74], %118 {strides = array<i32>} : memref<6x16x14xf32, #tpu.memory_space<vmem>>, vector<6x16x1xf32>,
    %120 = vector.extract_strided_slice %79 {offsets = [0, 0, 20], sizes = [6, 16, 1], strides = [1, 1, 1]} : vector<6x16x28xf32> to vector<6x16x1xf32>
    %121 = vector.extract_strided_slice %79 {offsets = [0, 0, 21], sizes = [6, 16, 1], strides = [1, 1, 1]} : vector<6x16x28xf32> to vector<6x16x1xf32>
    %122 = arith.maximumf %120, %121 : vector<6x16x1xf32>
    %c0_75 = arith.constant 0 : index
    %c0_76 = arith.constant 0 : index
    %c10_77 = arith.constant 10 : index
    %123 = vector.load %arg8[%c0_75, %c0_76, %c10_77] : memref<6x16x14xf32, #tpu.memory_space<vmem>>, vector<6x16x1xf32>
    tpu.vector_store %arg8[%c0_75, %c0_76, %c10_77], %122 {strides = array<i32>} : memref<6x16x14xf32, #tpu.memory_space<vmem>>, vector<6x16x1xf32>,
    %124 = vector.extract_strided_slice %79 {offsets = [0, 0, 22], sizes = [6, 16, 1], strides = [1, 1, 1]} : vector<6x16x28xf32> to vector<6x16x1xf32>
    %125 = vector.extract_strided_slice %79 {offsets = [0, 0, 23], sizes = [6, 16, 1], strides = [1, 1, 1]} : vector<6x16x28xf32> to vector<6x16x1xf32>
    %126 = arith.maximumf %124, %125 : vector<6x16x1xf32>
    %c0_78 = arith.constant 0 : index
    %c0_79 = arith.constant 0 : index
    %c11_80 = arith.constant 11 : index
    %127 = vector.load %arg8[%c0_78, %c0_79, %c11_80] : memref<6x16x14xf32, #tpu.memory_space<vmem>>, vector<6x16x1xf32>
    tpu.vector_store %arg8[%c0_78, %c0_79, %c11_80], %126 {strides = array<i32>} : memref<6x16x14xf32, #tpu.memory_space<vmem>>, vector<6x16x1xf32>,
    %128 = vector.extract_strided_slice %79 {offsets = [0, 0, 24], sizes = [6, 16, 1], strides = [1, 1, 1]} : vector<6x16x28xf32> to vector<6x16x1xf32>
    %129 = vector.extract_strided_slice %79 {offsets = [0, 0, 25], sizes = [6, 16, 1], strides = [1, 1, 1]} : vector<6x16x28xf32> to vector<6x16x1xf32>
    %130 = arith.maximumf %128, %129 : vector<6x16x1xf32>
    %c0_81 = arith.constant 0 : index
    %c0_82 = arith.constant 0 : index
    %c12_83 = arith.constant 12 : index
    %131 = vector.load %arg8[%c0_81, %c0_82, %c12_83] : memref<6x16x14xf32, #tpu.memory_space<vmem>>, vector<6x16x1xf32>
    tpu.vector_store %arg8[%c0_81, %c0_82, %c12_83], %130 {strides = array<i32>} : memref<6x16x14xf32, #tpu.memory_space<vmem>>, vector<6x16x1xf32>,
    %132 = vector.extract_strided_slice %79 {offsets = [0, 0, 26], sizes = [6, 16, 1], strides = [1, 1, 1]} : vector<6x16x28xf32> to vector<6x16x1xf32>
    %133 = vector.extract_strided_slice %79 {offsets = [0, 0, 27], sizes = [6, 16, 1], strides = [1, 1, 1]} : vector<6x16x28xf32> to vector<6x16x1xf32>
    %134 = arith.maximumf %132, %133 : vector<6x16x1xf32>
    %c0_84 = arith.constant 0 : index
    %c0_85 = arith.constant 0 : index
    %c13_86 = arith.constant 13 : index
    %135 = vector.load %arg8[%c0_84, %c0_85, %c13_86] : memref<6x16x14xf32, #tpu.memory_space<vmem>>, vector<6x16x1xf32>
    tpu.vector_store %arg8[%c0_84, %c0_85, %c13_86], %134 {strides = array<i32>} : memref<6x16x14xf32, #tpu.memory_space<vmem>>, vector<6x16x1xf32>,
    %c0_87 = arith.constant 0 : index
    %c0_88 = arith.constant 0 : index
    %c0_89 = arith.constant 0 : index
    %136 = vector.load %arg8[%c0_87, %c0_88, %c0_89] : memref<6x16x14xf32, #tpu.memory_space<vmem>>, vector<6x16x14xf32>
    %c0_90 = arith.constant 0 : index
    %c0_91 = arith.constant 0 : index
    %137 = vector.load %arg4[%c0_90, %c0_91] : memref<256x480xf32, #tpu.memory_space<vmem>>, vector<256x480xf32>
    %c0_92 = arith.constant 0 : index
    %c0_93 = arith.constant 0 : index
    %c0_94 = arith.constant 0 : index
    %138 = vector.load %arg5[%c0_92, %c0_93, %c0_94] : memref<16x1x1xf32, #tpu.memory_space<vmem>>, vector<16x1x1xf32>
    %139 = vector.extract_strided_slice %136 {offsets = [0, 0, 0], sizes = [6, 16, 10], strides = [1, 1, 1]} : vector<6x16x14xf32> to vector<6x16x10xf32>
    %140 = vector.shape_cast %139 : vector<6x16x10xf32> to vector<96x10xf32>
    %141 = vector.extract_strided_slice %136 {offsets = [0, 0, 1], sizes = [6, 16, 10], strides = [1, 1, 1]} : vector<6x16x14xf32> to vector<6x16x10xf32>
    %142 = vector.shape_cast %141 : vector<6x16x10xf32> to vector<96x10xf32>
    %143 = vector.extract_strided_slice %136 {offsets = [0, 0, 2], sizes = [6, 16, 10], strides = [1, 1, 1]} : vector<6x16x14xf32> to vector<6x16x10xf32>
    %144 = vector.shape_cast %143 : vector<6x16x10xf32> to vector<96x10xf32>
    %145 = vector.extract_strided_slice %136 {offsets = [0, 0, 3], sizes = [6, 16, 10], strides = [1, 1, 1]} : vector<6x16x14xf32> to vector<6x16x10xf32>
    %146 = vector.shape_cast %145 : vector<6x16x10xf32> to vector<96x10xf32>
    %147 = vector.extract_strided_slice %136 {offsets = [0, 0, 4], sizes = [6, 16, 10], strides = [1, 1, 1]} : vector<6x16x14xf32> to vector<6x16x10xf32>
    %148 = vector.shape_cast %147 : vector<6x16x10xf32> to vector<96x10xf32>
    %149 = tpu.concatenate %140, %142, %144, %146, %148 in 0 : vector<96x10xf32>, vector<96x10xf32>, vector<96x10xf32>, vector<96x10xf32>, vector<96x10xf32> -> vector<480x10xf32>
    %cst_95 = arith.constant dense<0.000000e+00> : vector<256x10xf32>
    %150 = tpu.matmul %137, %149, %cst_95 {dimension_numbers = #tpu.dot_dimension_numbers<[1], [0], [0], [1], [0, 0, 1, 1], [], []>} : vector<256x480xf32>, vector<480x10xf32>, vector<256x10xf32> -> vector<256x10xf32>
    %151 = vector.shape_cast %150 : vector<256x10xf32> to vector<16x16x10xf32>
    %152 = vector.broadcast %138 : vector<16x1x1xf32> to vector<16x16x10xf32>
    %153 = arith.addf %151, %152 : vector<16x16x10xf32>
    %cst_96 = arith.constant 0.000000e+00 : f32
    %154 = vector.broadcast %cst_96 : f32 to vector<16x16x10xf32>
    %155 = arith.maximumf %153, %154 : vector<16x16x10xf32>
    %cst_97 = arith.constant 0.000000e+00 : f32
    %156 = vector.broadcast %cst_97 : f32 to vector<16x5x10xf32>
    %c0_98 = arith.constant 0 : index
    %c0_99 = arith.constant 0 : index
    %c0_100 = arith.constant 0 : index
    %157 = vector.load %arg9[%c0_98, %c0_99, %c0_100] : memref<16x5x10xf32, #tpu.memory_space<vmem>>, vector<16x5x10xf32>
    tpu.vector_store %arg9[%c0_98, %c0_99, %c0_100], %156 {strides = array<i32>} : memref<16x5x10xf32, #tpu.memory_space<vmem>>, vector<16x5x10xf32>,
    %158 = vector.extract_strided_slice %155 {offsets = [0, 0, 0], sizes = [16, 1, 10], strides = [1, 1, 1]} : vector<16x16x10xf32> to vector<16x1x10xf32>
    %159 = vector.extract_strided_slice %155 {offsets = [0, 1, 0], sizes = [16, 1, 10], strides = [1, 1, 1]} : vector<16x16x10xf32> to vector<16x1x10xf32>
    %160 = arith.maximumf %158, %159 : vector<16x1x10xf32>
    %c0_101 = arith.constant 0 : index
    %c0_102 = arith.constant 0 : index
    %c0_103 = arith.constant 0 : index
    %161 = vector.load %arg9[%c0_101, %c0_102, %c0_103] : memref<16x5x10xf32, #tpu.memory_space<vmem>>, vector<16x1x10xf32>
    tpu.vector_store %arg9[%c0_101, %c0_102, %c0_103], %160 {strides = array<i32>} : memref<16x5x10xf32, #tpu.memory_space<vmem>>, vector<16x1x10xf32>,
    %162 = vector.extract_strided_slice %155 {offsets = [0, 2, 0], sizes = [16, 1, 10], strides = [1, 1, 1]} : vector<16x16x10xf32> to vector<16x1x10xf32>
    %163 = vector.extract_strided_slice %155 {offsets = [0, 3, 0], sizes = [16, 1, 10], strides = [1, 1, 1]} : vector<16x16x10xf32> to vector<16x1x10xf32>
    %164 = arith.maximumf %162, %163 : vector<16x1x10xf32>
    %c0_104 = arith.constant 0 : index
    %c1_105 = arith.constant 1 : index
    %c0_106 = arith.constant 0 : index
    %165 = vector.load %arg9[%c0_104, %c1_105, %c0_106] : memref<16x5x10xf32, #tpu.memory_space<vmem>>, vector<16x1x10xf32>
    tpu.vector_store %arg9[%c0_104, %c1_105, %c0_106], %164 {strides = array<i32>} : memref<16x5x10xf32, #tpu.memory_space<vmem>>, vector<16x1x10xf32>,
    %166 = vector.extract_strided_slice %155 {offsets = [0, 4, 0], sizes = [16, 1, 10], strides = [1, 1, 1]} : vector<16x16x10xf32> to vector<16x1x10xf32>
    %167 = vector.extract_strided_slice %155 {offsets = [0, 5, 0], sizes = [16, 1, 10], strides = [1, 1, 1]} : vector<16x16x10xf32> to vector<16x1x10xf32>
    %168 = arith.maximumf %166, %167 : vector<16x1x10xf32>
    %c0_107 = arith.constant 0 : index
    %c2_108 = arith.constant 2 : index
    %c0_109 = arith.constant 0 : index
    %169 = vector.load %arg9[%c0_107, %c2_108, %c0_109] : memref<16x5x10xf32, #tpu.memory_space<vmem>>, vector<16x1x10xf32>
    tpu.vector_store %arg9[%c0_107, %c2_108, %c0_109], %168 {strides = array<i32>} : memref<16x5x10xf32, #tpu.memory_space<vmem>>, vector<16x1x10xf32>,
    %170 = vector.extract_strided_slice %155 {offsets = [0, 6, 0], sizes = [16, 1, 10], strides = [1, 1, 1]} : vector<16x16x10xf32> to vector<16x1x10xf32>
    %171 = vector.extract_strided_slice %155 {offsets = [0, 7, 0], sizes = [16, 1, 10], strides = [1, 1, 1]} : vector<16x16x10xf32> to vector<16x1x10xf32>
    %172 = arith.maximumf %170, %171 : vector<16x1x10xf32>
    %c0_110 = arith.constant 0 : index
    %c3_111 = arith.constant 3 : index
    %c0_112 = arith.constant 0 : index
    %173 = vector.load %arg9[%c0_110, %c3_111, %c0_112] : memref<16x5x10xf32, #tpu.memory_space<vmem>>, vector<16x1x10xf32>
    tpu.vector_store %arg9[%c0_110, %c3_111, %c0_112], %172 {strides = array<i32>} : memref<16x5x10xf32, #tpu.memory_space<vmem>>, vector<16x1x10xf32>,
    %174 = vector.extract_strided_slice %155 {offsets = [0, 8, 0], sizes = [16, 1, 10], strides = [1, 1, 1]} : vector<16x16x10xf32> to vector<16x1x10xf32>
    %175 = vector.extract_strided_slice %155 {offsets = [0, 9, 0], sizes = [16, 1, 10], strides = [1, 1, 1]} : vector<16x16x10xf32> to vector<16x1x10xf32>
    %176 = arith.maximumf %174, %175 : vector<16x1x10xf32>
    %c0_113 = arith.constant 0 : index
    %c4_114 = arith.constant 4 : index
    %c0_115 = arith.constant 0 : index
    %177 = vector.load %arg9[%c0_113, %c4_114, %c0_115] : memref<16x5x10xf32, #tpu.memory_space<vmem>>, vector<16x1x10xf32>
    tpu.vector_store %arg9[%c0_113, %c4_114, %c0_115], %176 {strides = array<i32>} : memref<16x5x10xf32, #tpu.memory_space<vmem>>, vector<16x1x10xf32>,
    %c0_116 = arith.constant 0 : index
    %c0_117 = arith.constant 0 : index
    %c0_118 = arith.constant 0 : index
    %178 = vector.load %arg9[%c0_116, %c0_117, %c0_118] : memref<16x5x10xf32, #tpu.memory_space<vmem>>, vector<16x5x10xf32>
    %179 = vector.extract_strided_slice %178 {offsets = [0, 0, 0], sizes = [16, 5, 1], strides = [1, 1, 1]} : vector<16x5x10xf32> to vector<16x5x1xf32>
    %180 = vector.extract_strided_slice %178 {offsets = [0, 0, 1], sizes = [16, 5, 1], strides = [1, 1, 1]} : vector<16x5x10xf32> to vector<16x5x1xf32>
    %181 = arith.maximumf %179, %180 : vector<16x5x1xf32>
    %c0_119 = arith.constant 0 : index
    %c0_120 = arith.constant 0 : index
    %c0_121 = arith.constant 0 : index
    %c0_122 = arith.constant 0 : index
    %182 = vector.load %arg6[%c0_119, %c0_120, %c0_121, %c0_122] : memref<1x16x5x5xf32, #tpu.memory_space<vmem>>, vector<1x16x5x1xf32>
    %183 = vector.shape_cast %182 : vector<1x16x5x1xf32> to vector<16x5x1xf32>
    %184 = vector.shape_cast %181 : vector<16x5x1xf32> to vector<1x16x5x1xf32>
    tpu.vector_store %arg6[%c0_119, %c0_120, %c0_121, %c0_122], %184 {strides = array<i32>} : memref<1x16x5x5xf32, #tpu.memory_space<vmem>>, vector<1x16x5x1xf32>,
    %185 = vector.extract_strided_slice %178 {offsets = [0, 0, 2], sizes = [16, 5, 1], strides = [1, 1, 1]} : vector<16x5x10xf32> to vector<16x5x1xf32>
    %186 = vector.extract_strided_slice %178 {offsets = [0, 0, 3], sizes = [16, 5, 1], strides = [1, 1, 1]} : vector<16x5x10xf32> to vector<16x5x1xf32>
    %187 = arith.maximumf %185, %186 : vector<16x5x1xf32>
    %c0_123 = arith.constant 0 : index
    %c0_124 = arith.constant 0 : index
    %c0_125 = arith.constant 0 : index
    %c1_126 = arith.constant 1 : index
    %188 = vector.load %arg6[%c0_123, %c0_124, %c0_125, %c1_126] : memref<1x16x5x5xf32, #tpu.memory_space<vmem>>, vector<1x16x5x1xf32>
    %189 = vector.shape_cast %188 : vector<1x16x5x1xf32> to vector<16x5x1xf32>
    %190 = vector.shape_cast %187 : vector<16x5x1xf32> to vector<1x16x5x1xf32>
    tpu.vector_store %arg6[%c0_123, %c0_124, %c0_125, %c1_126], %190 {strides = array<i32>} : memref<1x16x5x5xf32, #tpu.memory_space<vmem>>, vector<1x16x5x1xf32>,
    %191 = vector.extract_strided_slice %178 {offsets = [0, 0, 4], sizes = [16, 5, 1], strides = [1, 1, 1]} : vector<16x5x10xf32> to vector<16x5x1xf32>
    %192 = vector.extract_strided_slice %178 {offsets = [0, 0, 5], sizes = [16, 5, 1], strides = [1, 1, 1]} : vector<16x5x10xf32> to vector<16x5x1xf32>
    %193 = arith.maximumf %191, %192 : vector<16x5x1xf32>
    %c0_127 = arith.constant 0 : index
    %c0_128 = arith.constant 0 : index
    %c0_129 = arith.constant 0 : index
    %c2_130 = arith.constant 2 : index
    %194 = vector.load %arg6[%c0_127, %c0_128, %c0_129, %c2_130] : memref<1x16x5x5xf32, #tpu.memory_space<vmem>>, vector<1x16x5x1xf32>
    %195 = vector.shape_cast %194 : vector<1x16x5x1xf32> to vector<16x5x1xf32>
    %196 = vector.shape_cast %193 : vector<16x5x1xf32> to vector<1x16x5x1xf32>
    tpu.vector_store %arg6[%c0_127, %c0_128, %c0_129, %c2_130], %196 {strides = array<i32>} : memref<1x16x5x5xf32, #tpu.memory_space<vmem>>, vector<1x16x5x1xf32>,
    %197 = vector.extract_strided_slice %178 {offsets = [0, 0, 6], sizes = [16, 5, 1], strides = [1, 1, 1]} : vector<16x5x10xf32> to vector<16x5x1xf32>
    %198 = vector.extract_strided_slice %178 {offsets = [0, 0, 7], sizes = [16, 5, 1], strides = [1, 1, 1]} : vector<16x5x10xf32> to vector<16x5x1xf32>
    %199 = arith.maximumf %197, %198 : vector<16x5x1xf32>
    %c0_131 = arith.constant 0 : index
    %c0_132 = arith.constant 0 : index
    %c0_133 = arith.constant 0 : index
    %c3_134 = arith.constant 3 : index
    %200 = vector.load %arg6[%c0_131, %c0_132, %c0_133, %c3_134] : memref<1x16x5x5xf32, #tpu.memory_space<vmem>>, vector<1x16x5x1xf32>
    %201 = vector.shape_cast %200 : vector<1x16x5x1xf32> to vector<16x5x1xf32>
    %202 = vector.shape_cast %199 : vector<16x5x1xf32> to vector<1x16x5x1xf32>
    tpu.vector_store %arg6[%c0_131, %c0_132, %c0_133, %c3_134], %202 {strides = array<i32>} : memref<1x16x5x5xf32, #tpu.memory_space<vmem>>, vector<1x16x5x1xf32>,
    %203 = vector.extract_strided_slice %178 {offsets = [0, 0, 8], sizes = [16, 5, 1], strides = [1, 1, 1]} : vector<16x5x10xf32> to vector<16x5x1xf32>
    %204 = vector.extract_strided_slice %178 {offsets = [0, 0, 9], sizes = [16, 5, 1], strides = [1, 1, 1]} : vector<16x5x10xf32> to vector<16x5x1xf32>
    %205 = arith.maximumf %203, %204 : vector<16x5x1xf32>
    %c0_135 = arith.constant 0 : index
    %c0_136 = arith.constant 0 : index
    %c0_137 = arith.constant 0 : index
    %c4_138 = arith.constant 4 : index
    %206 = vector.load %arg6[%c0_135, %c0_136, %c0_137, %c4_138] : memref<1x16x5x5xf32, #tpu.memory_space<vmem>>, vector<1x16x5x1xf32>
    %207 = vector.shape_cast %206 : vector<1x16x5x1xf32> to vector<16x5x1xf32>
    %208 = vector.shape_cast %205 : vector<16x5x1xf32> to vector<1x16x5x1xf32>
    tpu.vector_store %arg6[%c0_135, %c0_136, %c0_137, %c4_138], %208 {strides = array<i32>} : memref<1x16x5x5xf32, #tpu.memory_space<vmem>>, vector<1x16x5x1xf32>,
    return
  }
  func.func @transform_0(%arg0: i32) -> (i32, i32, i32, i32) {
    %c0_i32 = arith.constant 0 : i32
    %c0_i32_0 = arith.constant 0 : i32
    %c0_i32_1 = arith.constant 0 : i32
    %c0_i32_2 = arith.constant 0 : i32
    return %arg0, %c0_i32, %c0_i32_0, %c0_i32_1 : i32, i32, i32, i32
  }
  func.func @transform_1(%arg0: i32) -> (i32, i32) {
    %c0_i32 = arith.constant 0 : i32
    %c0_i32_0 = arith.constant 0 : i32
    %c0_i32_1 = arith.constant 0 : i32
    return %c0_i32, %c0_i32_0 : i32, i32
  }
  func.func @transform_2(%arg0: i32) -> (i32, i32, i32) {
    %c0_i32 = arith.constant 0 : i32
    %c0_i32_0 = arith.constant 0 : i32
    %c0_i32_1 = arith.constant 0 : i32
    %c0_i32_2 = arith.constant 0 : i32
    return %c0_i32, %c0_i32_0, %c0_i32_1 : i32, i32, i32
  }
  func.func @transform_3(%arg0: i32) -> (i32, i32) {
    %c0_i32 = arith.constant 0 : i32
    %c0_i32_0 = arith.constant 0 : i32
    %c0_i32_1 = arith.constant 0 : i32
    return %c0_i32, %c0_i32_0 : i32, i32
  }
  func.func @transform_4(%arg0: i32) -> (i32, i32, i32) {
    %c0_i32 = arith.constant 0 : i32
    %c0_i32_0 = arith.constant 0 : i32
    %c0_i32_1 = arith.constant 0 : i32
    %c0_i32_2 = arith.constant 0 : i32
    return %c0_i32, %c0_i32_0, %c0_i32_1 : i32, i32, i32
  }
  func.func @transform_5(%arg0: i32) -> (i32, i32, i32, i32) {
    %c0_i32 = arith.constant 0 : i32
    %c0_i32_0 = arith.constant 0 : i32
    %c0_i32_1 = arith.constant 0 : i32
    %c0_i32_2 = arith.constant 0 : i32
    return %arg0, %c0_i32, %c0_i32_0, %c0_i32_1 : i32, i32, i32, i32
  }
}

module attributes {stable_mosaic.version = 11 : i64} {
  func.func @_fc_stack_kernel(%arg0: i32, %arg1: memref<4x400xf32, #tpu.memory_space<vmem>>, %arg2: memref<400x128xf32, #tpu.memory_space<vmem>>, %arg3: memref<1x128xf32, #tpu.memory_space<vmem>>, %arg4: memref<128x128xf32, #tpu.memory_space<vmem>>, %arg5: memref<1x128xf32, #tpu.memory_space<vmem>>, %arg6: memref<128x10xf32, #tpu.memory_space<vmem>>, %arg7: memref<1x10xf32, #tpu.memory_space<vmem>>, %arg8: memref<4x10xf32, #tpu.memory_space<vmem>>) attributes {dimension_semantics = [#tpu.dimension_semantics<parallel>], iteration_bounds = array<i64: 1>, scalar_prefetch = 0 : i64, scratch_operands = 0 : i64, tpu.core_type = #tpu.core_type<tc>, window_params = [{transform_indices = @transform_0, window_bounds = array<i64: 4, 400>}, {pipeline_mode = #tpu.pipeline_mode<synchronous>, transform_indices = @transform_1, window_bounds = array<i64: 400, 128>}, {pipeline_mode = #tpu.pipeline_mode<synchronous>, transform_indices = @transform_2, window_bounds = array<i64: 1, 128>}, {pipeline_mode = #tpu.pipeline_mode<synchronous>, transform_indices = @transform_3, window_bounds = array<i64: 128, 128>}, {pipeline_mode = #tpu.pipeline_mode<synchronous>, transform_indices = @transform_4, window_bounds = array<i64: 1, 128>}, {pipeline_mode = #tpu.pipeline_mode<synchronous>, transform_indices = @transform_5, window_bounds = array<i64: 128, 10>}, {pipeline_mode = #tpu.pipeline_mode<synchronous>, transform_indices = @transform_6, window_bounds = array<i64: 1, 10>}, {transform_indices = @transform_7, window_bounds = array<i64: 4, 10>}]} {
    %c0 = arith.constant 0 : index
    %c0_0 = arith.constant 0 : index
    %0 = vector.load %arg1[%c0, %c0_0] : memref<4x400xf32, #tpu.memory_space<vmem>>, vector<4x400xf32>
    %c0_1 = arith.constant 0 : index
    %c0_2 = arith.constant 0 : index
    %1 = vector.load %arg2[%c0_1, %c0_2] : memref<400x128xf32, #tpu.memory_space<vmem>>, vector<400x128xf32>
    %cst = arith.constant dense<0.000000e+00> : vector<4x128xf32>
    %2 = tpu.matmul %0, %1, %cst {dimension_numbers = #tpu.dot_dimension_numbers<[1], [0], [0], [1], [0, 0, 1, 1], [], []>} : vector<4x400xf32>, vector<400x128xf32>, vector<4x128xf32> -> vector<4x128xf32>
    %c0_3 = arith.constant 0 : index
    %c0_4 = arith.constant 0 : index
    %3 = vector.load %arg3[%c0_3, %c0_4] : memref<1x128xf32, #tpu.memory_space<vmem>>, vector<1x128xf32>
    %4 = vector.broadcast %3 : vector<1x128xf32> to vector<4x128xf32>
    %5 = arith.addf %2, %4 : vector<4x128xf32>
    %cst_5 = arith.constant 0.000000e+00 : f32
    %6 = vector.broadcast %cst_5 : f32 to vector<4x128xf32>
    %7 = arith.maximumf %5, %6 : vector<4x128xf32>
    %c0_6 = arith.constant 0 : index
    %c0_7 = arith.constant 0 : index
    %8 = vector.load %arg4[%c0_6, %c0_7] : memref<128x128xf32, #tpu.memory_space<vmem>>, vector<128x128xf32>
    %cst_8 = arith.constant dense<0.000000e+00> : vector<4x128xf32>
    %9 = tpu.matmul %7, %8, %cst_8 {dimension_numbers = #tpu.dot_dimension_numbers<[1], [0], [0], [1], [0, 0, 1, 1], [], []>} : vector<4x128xf32>, vector<128x128xf32>, vector<4x128xf32> -> vector<4x128xf32>
    %c0_9 = arith.constant 0 : index
    %c0_10 = arith.constant 0 : index
    %10 = vector.load %arg5[%c0_9, %c0_10] : memref<1x128xf32, #tpu.memory_space<vmem>>, vector<1x128xf32>
    %11 = vector.broadcast %10 : vector<1x128xf32> to vector<4x128xf32>
    %12 = arith.addf %9, %11 : vector<4x128xf32>
    %cst_11 = arith.constant 0.000000e+00 : f32
    %13 = vector.broadcast %cst_11 : f32 to vector<4x128xf32>
    %14 = arith.maximumf %12, %13 : vector<4x128xf32>
    %c0_12 = arith.constant 0 : index
    %c0_13 = arith.constant 0 : index
    %15 = vector.load %arg6[%c0_12, %c0_13] : memref<128x10xf32, #tpu.memory_space<vmem>>, vector<128x10xf32>
    %cst_14 = arith.constant dense<0.000000e+00> : vector<4x10xf32>
    %16 = tpu.matmul %14, %15, %cst_14 {dimension_numbers = #tpu.dot_dimension_numbers<[1], [0], [0], [1], [0, 0, 1, 1], [], []>} : vector<4x128xf32>, vector<128x10xf32>, vector<4x10xf32> -> vector<4x10xf32>
    %c0_15 = arith.constant 0 : index
    %c0_16 = arith.constant 0 : index
    %17 = vector.load %arg7[%c0_15, %c0_16] : memref<1x10xf32, #tpu.memory_space<vmem>>, vector<1x10xf32>
    %18 = vector.broadcast %17 : vector<1x10xf32> to vector<4x10xf32>
    %19 = arith.addf %16, %18 : vector<4x10xf32>
    %c0_17 = arith.constant 0 : index
    %c0_18 = arith.constant 0 : index
    %20 = vector.load %arg8[%c0_17, %c0_18] : memref<4x10xf32, #tpu.memory_space<vmem>>, vector<4x10xf32>
    tpu.vector_store %arg8[%c0_17, %c0_18], %19 {strides = array<i32>} : memref<4x10xf32, #tpu.memory_space<vmem>>, vector<4x10xf32>,
    return
  }
  func.func @transform_0(%arg0: i32) -> (i32, i32) {
    %c0_i32 = arith.constant 0 : i32
    %c0_i32_0 = arith.constant 0 : i32
    return %arg0, %c0_i32 : i32, i32
  }
  func.func @transform_1(%arg0: i32) -> (i32, i32) {
    %c0_i32 = arith.constant 0 : i32
    %c0_i32_0 = arith.constant 0 : i32
    %c0_i32_1 = arith.constant 0 : i32
    return %c0_i32, %c0_i32_0 : i32, i32
  }
  func.func @transform_2(%arg0: i32) -> (i32, i32) {
    %c0_i32 = arith.constant 0 : i32
    %c0_i32_0 = arith.constant 0 : i32
    %c0_i32_1 = arith.constant 0 : i32
    return %c0_i32, %c0_i32_0 : i32, i32
  }
  func.func @transform_3(%arg0: i32) -> (i32, i32) {
    %c0_i32 = arith.constant 0 : i32
    %c0_i32_0 = arith.constant 0 : i32
    %c0_i32_1 = arith.constant 0 : i32
    return %c0_i32, %c0_i32_0 : i32, i32
  }
  func.func @transform_4(%arg0: i32) -> (i32, i32) {
    %c0_i32 = arith.constant 0 : i32
    %c0_i32_0 = arith.constant 0 : i32
    %c0_i32_1 = arith.constant 0 : i32
    return %c0_i32, %c0_i32_0 : i32, i32
  }
  func.func @transform_5(%arg0: i32) -> (i32, i32) {
    %c0_i32 = arith.constant 0 : i32
    %c0_i32_0 = arith.constant 0 : i32
    %c0_i32_1 = arith.constant 0 : i32
    return %c0_i32, %c0_i32_0 : i32, i32
  }
  func.func @transform_6(%arg0: i32) -> (i32, i32) {
    %c0_i32 = arith.constant 0 : i32
    %c0_i32_0 = arith.constant 0 : i32
    %c0_i32_1 = arith.constant 0 : i32
    return %c0_i32, %c0_i32_0 : i32, i32
  }
  func.func @transform_7(%arg0: i32) -> (i32, i32) {
    %c0_i32 = arith.constant 0 : i32
    %c0_i32_0 = arith.constant 0 : i32
    return %arg0, %c0_i32 : i32, i32
  }
}

</mosaic_0001>

<llo_original>
// kernel: net_forward.3
$region0: #{net_forward.3}
  #allocation0 [shape = 'u32[]', space=smem, size = 0x4, offset = 0x4, fixed_abs, tag = 'smem constant byte address 0x4 - core index']
  #allocation1 [shape = 'u32[144,128]{1,0:T(1,128)}', space=vmem, size = 0x12000, scoped, tag = 'internal scratch']
  %s0 = inlined_call_operand.vmem [shape: f32[4,400], index: 0, kind: input, shape index: {}]
  %s1 = inlined_call_operand.vmem [shape: f32[400,128], index: 1, kind: input, shape index: {}]
  %s2 = inlined_call_operand.vmem [shape: f32[1,128], index: 2, kind: input, shape index: {}]
  %s3 = inlined_call_operand.vmem [shape: f32[128,128], index: 3, kind: input, shape index: {}]
  %s4 = inlined_call_operand.vmem [shape: f32[1,128], index: 4, kind: input, shape index: {}]
  %s5 = inlined_call_operand.vmem [shape: f32[128,10], index: 5, kind: input, shape index: {}]
  %s6 = inlined_call_operand.vmem [shape: f32[1,10], index: 6, kind: input, shape index: {}]
  %s7 = inlined_call_operand.hbm [shape: f32[4,10], index: 7, kind: output, shape index: {}]
  %s8 = sld [smem:[#allocation0]]
  $region38: #{net_forward.3} parent=0
    _
  %s10 = ssub.s32 1, %s8
  %s11 = scalar_select 0, %s10, %s8
  $region1: #{net_forward.3} parent=0
    #allocation2 [shape = 'u8[2048]{0}', space=vmem, size = 0x800, scoped, tag = 'output window, operand 0, single buffered']
    #allocation3 [shape = 's32[1]{0}', space=sflag, size = 0x4, scoped, tag = 'scoped memory for net_forward.3']
    %12 = vsyncpa [#allocation3], 0
    // Predicated region
    $region2: #{net_forward.3} parent=1 // pred_check
      _
    $region3: #{net_forward.3} parent=1 // pred_check_branch
      %14 = sbr.rel (0) target = $region5
    $region4: #{net_forward.3} parent=1 // pred_region
      _
    $region5: #{net_forward.3} parent=1 // pred_fallthru
      _
    // Predicated region
    $region6: #{net_forward.3} parent=1 // pred_check
      _
    $region7: #{net_forward.3} parent=1 // pred_check_branch
      %16 = sbr.rel (0) target = $region9
    $region8: #{net_forward.3} parent=1 // pred_region
      _
    $region9: #{net_forward.3} parent=1 // pred_fallthru
      _
    // Predicated region
    $region10: #{net_forward.3} parent=1 // pred_check
      _
    $region11: #{net_forward.3} parent=1 // pred_check_branch
      %18 = sbr.rel (0) target = $region13
    $region12: #{net_forward.3} parent=1 // pred_region
      _
    $region13: #{net_forward.3} parent=1 // pred_fallthru
      _
    // Predicated region
    $region14: #{net_forward.3} parent=1 // pred_check
      _
    $region15: #{net_forward.3} parent=1 // pred_check_branch
      %20 = sbr.rel (0) target = $region17
    $region16: #{net_forward.3} parent=1 // pred_region
      _
    $region17: #{net_forward.3} parent=1 // pred_fallthru
      _
    // Predicated region
    $region18: #{net_forward.3} parent=1 // pred_check
      _
    $region19: #{net_forward.3} parent=1 // pred_check_branch
      %22 = sbr.rel (0) target = $region21
    $region20: #{net_forward.3} parent=1 // pred_region
      _
    $region21: #{net_forward.3} parent=1 // pred_fallthru
      _
    // Predicated region
    $region22: #{net_forward.3} parent=1 // pred_check
      _
    $region23: #{net_forward.3} parent=1 // pred_check_branch
      %24 = sbr.rel (0) target = $region25
    $region24: #{net_forward.3} parent=1 // pred_region
      _
    $region25: #{net_forward.3} parent=1 // pred_fallthru
      _
    // Predicated region
    $region26: #{net_forward.3} parent=1 // pred_check
      _
    $region27: #{net_forward.3} parent=1 // pred_check_branch
      %26 = sbr.rel (0) target = $region29
    $region28: #{net_forward.3} parent=1 // pred_region
      _
    $region29: #{net_forward.3} parent=1 // pred_fallthru
      _
    %v27 = vld [vmem:[%s0] sm:$0xff]
    %v28 = vld [vmem:[%s0 + $0x8] sm:$0xff]
    %v29 = vld [vmem:[%s1] sm:$0xff]
    %v30 = vld [vmem:[%s1 + $0x8] sm:$0xff]
    %v31 = vld [vmem:[%s1 + $0x10] sm:$0xff]
    %v32 = vld [vmem:[%s1 + $0x18] sm:$0xff]
    %v33 = vld [vmem:[%s1 + $0x20] sm:$0xff]
    %v34 = vld [vmem:[%s1 + $0x28] sm:$0xff]
    %v35 = vld [vmem:[%s1 + $0x30] sm:$0xff]
    %v36 = vld [vmem:[%s1 + $0x38] sm:$0xff]
    %v37 = vld [vmem:[%s1 + $0x40] sm:$0xff]
    %v38 = vld [vmem:[%s1 + $0x48] sm:$0xff]
    %v39 = vld [vmem:[%s1 + $0x50] sm:$0xff]
    %v40 = vld [vmem:[%s1 + $0x58] sm:$0xff]
    %v41 = vld [vmem:[%s1 + $0x60] sm:$0xff]
    %v42 = vld [vmem:[%s1 + $0x68] sm:$0xff]
    %v43 = vld [vmem:[%s1 + $0x70] sm:$0xff]
    %v44 = vld [vmem:[%s1 + $0x78] sm:$0xff]
    %v45 = vld [vmem:[%s1 + $0x80] sm:$0xff]
    %v46 = vld [vmem:[%s1 + $0x88] sm:$0xff]
    %v47 = vld [vmem:[%s1 + $0x90] sm:$0xff]
    %v48 = vld [vmem:[%s1 + $0x98] sm:$0xff]
    %v49 = vld [vmem:[%s1 + $0xa0] sm:$0xff]
    %v50 = vld [vmem:[%s1 + $0xa8] sm:$0xff]
    %v51 = vld [vmem:[%s1 + $0xb0] sm:$0xff]
    %v52 = vld [vmem:[%s1 + $0xb8] sm:$0xff]
    %v53 = vld [vmem:[%s1 + $0xc0] sm:$0xff]
    %v54 = vld [vmem:[%s1 + $0xc8] sm:$0xff]
    %v55 = vld [vmem:[%s1 + $0xd0] sm:$0xff]
    %v56 = vld [vmem:[%s1 + $0xd8] sm:$0xff]
    %v57 = vld [vmem:[%s1 + $0xe0] sm:$0xff]
    %v58 = vld [vmem:[%s1 + $0xe8] sm:$0xff]
    %v59 = vld [vmem:[%s1 + $0xf0] sm:$0xff]
    %v60 = vld [vmem:[%s1 + $0xf8] sm:$0xff]
    %v61 = vld [vmem:[%s1 + $0x100] sm:$0xff]
    %v62 = vld [vmem:[%s1 + $0x108] sm:$0xff]
    %v63 = vld [vmem:[%s1 + $0x110] sm:$0xff]
    %v64 = vld [vmem:[%s1 + $0x118] sm:$0xff]
    %v65 = vld [vmem:[%s1 + $0x120] sm:$0xff]
    %v66 = vld [vmem:[%s1 + $0x128] sm:$0xff]
    %v67 = vld [vmem:[%s1 + $0x130] sm:$0xff]
    %v68 = vld [vmem:[%s1 + $0x138] sm:$0xff]
    %v69 = vld [vmem:[%s1 + $0x140] sm:$0xff]
    %v70 = vld [vmem:[%s1 + $0x148] sm:$0xff]
    %v71 = vld [vmem:[%s1 + $0x150] sm:$0xff]
    %v72 = vld [vmem:[%s1 + $0x158] sm:$0xff]
    %v73 = vld [vmem:[%s1 + $0x160] sm:$0xff]
    %v74 = vld [vmem:[%s1 + $0x168] sm:$0xff]
    %v75 = vld [vmem:[%s1 + $0x170] sm:$0xff]
    %v76 = vld [vmem:[%s1 + $0x178] sm:$0xff]
    %v77 = vld [vmem:[%s1 + $0x180] sm:$0xff]
    %v78 = vld [vmem:[%s1 + $0x188] sm:$0xff]
    %v79 = vld [vmem:[%s2] sm:$0x1]
    %v81 = vlaneseq
    %v82 = vshrl.u32 %v81, 7
    %v83 = vsub.s32 0, %v82
    %v84 = vrot.slane %v79, %v83
    %v88 = vcombine.high %v27, %v27
    %v89 = vcombine.high %v28, %v28
    %vm91 = vcmask 130048
    %v92 = vsel %vm91, %v89, 0
    %94 = vmatprep.subr.mxu0 0.0
    %95 = vmatpush1.msra.mxu0 %v44
    %96 = vmatprep.subr.mxu0 0.0
    %97 = vmatpush1.msra.mxu0 %v43
    %98 = vmatprep.subr.mxu0 0.0
    %99 = vmatpush1.msra.mxu0 %v42
    %100 = vmatprep.subr.mxu0 0.0
    %101 = vmatpush1.msra.mxu0 %v41
    %102 = vmatprep.subr.mxu0 0.0
    %103 = vmatpush1.msra.mxu0 %v40
    %104 = vmatprep.subr.mxu0 0.0
    %105 = vmatpush1.msra.mxu0 %v39
    %106 = vmatprep.subr.mxu0 0.0
    %107 = vmatpush1.msra.mxu0 %v38
    %108 = vmatprep.subr.mxu0 0.0
    %109 = vmatpush1.msra.mxu0 %v37
    %110 = vmatprep.subr.mxu0 0.0
    %111 = vmatpush1.msra.mxu0 %v36
    %112 = vmatprep.subr.mxu0 0.0
    %113 = vmatpush1.msra.mxu0 %v35
    %114 = vmatprep.subr.mxu0 0.0
    %115 = vmatpush1.msra.mxu0 %v34
    %116 = vmatprep.subr.mxu0 0.0
    %117 = vmatpush1.msra.mxu0 %v33
    %118 = vmatprep.subr.mxu0 0.0
    %119 = vmatpush1.msra.mxu0 %v32
    %120 = vmatprep.subr.mxu0 0.0
    %121 = vmatpush1.msra.mxu0 %v31
    %122 = vmatprep.subr.mxu0 0.0
    %123 = vmatpush1.msra.mxu0 %v30
    %124 = vmatprep.subr.mxu0 0.0
    %125 = vmatpush1.msra.mxu0 %v29
    %126 = vmatprep.subr.mxu0 0.0
    %127 = vmatpush2.msra.mxu0 %v60
    %128 = vmatprep.subr.mxu0 0.0
    %129 = vmatpush2.msra.mxu0 %v59
    %130 = vmatprep.subr.mxu0 0.0
    %131 = vmatpush2.msra.mxu0 %v58
    %132 = vmatprep.subr.mxu0 0.0
    %133 = vmatpush2.msra.mxu0 %v57
    %134 = vmatprep.subr.mxu0 0.0
    %135 = vmatpush2.msra.mxu0 %v56
    %136 = vmatprep.subr.mxu0 0.0
    %137 = vmatpush2.msra.mxu0 %v55
    %138 = vmatprep.subr.mxu0 0.0
    %139 = vmatpush2.msra.mxu0 %v54
    %140 = vmatprep.subr.mxu0 0.0
    %141 = vmatpush2.msra.mxu0 %v53
    %142 = vmatprep.subr.mxu0 0.0
    %143 = vmatpush2.msra.mxu0 %v52
    %144 = vmatprep.subr.mxu0 0.0
    %145 = vmatpush2.msra.mxu0 %v51
    %146 = vmatprep.subr.mxu0 0.0
    %147 = vmatpush2.msra.mxu0 %v50
    %148 = vmatprep.subr.mxu0 0.0
    %149 = vmatpush2.msra.mxu0 %v49
    %150 = vmatprep.subr.mxu0 0.0
    %151 = vmatpush2.msra.mxu0 %v48
    %152 = vmatprep.subr.mxu0 0.0
    %153 = vmatpush2.msra.mxu0 %v47
    %154 = vmatprep.subr.mxu0 0.0
    %155 = vmatpush2.msra.mxu0 %v46
    %156 = vmatprep.subr.mxu0 0.0
    %157 = vmatpush2.msra.mxu0 %v45
    %158 = vmatprep.mubr.f32.mxu0 %v88
    %159 = vmatmul.mubr.f32.gmra.mxu0 %v27
    %v160 = vpop.f32.mrf.mxu0
    %v161 = vadd.f32 %v84, %v160
    %v162 = vpop.f32.mrf.mxu0
    %163 = vdwg.mxu0
    %164 = vmatprep.subr.mxu0 0.0
    %165 = vmatpush1.msra.mxu0 %v76
    %166 = vmatprep.subr.mxu0 0.0
    %167 = vmatpush1.msra.mxu0 %v75
    %168 = vmatprep.subr.mxu0 0.0
    %169 = vmatpush1.msra.mxu0 %v74
    %170 = vmatprep.subr.mxu0 0.0
    %171 = vmatpush1.msra.mxu0 %v73
    %172 = vmatprep.subr.mxu0 0.0
    %173 = vmatpush1.msra.mxu0 %v72
    %174 = vmatprep.subr.mxu0 0.0
    %175 = vmatpush1.msra.mxu0 %v71
    %176 = vmatprep.subr.mxu0 0.0
    %177 = vmatpush1.msra.mxu0 %v70
    %178 = vmatprep.subr.mxu0 0.0
    %179 = vmatpush1.msra.mxu0 %v69
    %180 = vmatprep.subr.mxu0 0.0
    %181 = vmatpush1.msra.mxu0 %v68
    %182 = vmatprep.subr.mxu0 0.0
    %183 = vmatpush1.msra.mxu0 %v67
    %184 = vmatprep.subr.mxu0 0.0
    %185 = vmatpush1.msra.mxu0 %v66
    %186 = vmatprep.subr.mxu0 0.0
    %187 = vmatpush1.msra.mxu0 %v65
    %188 = vmatprep.subr.mxu0 0.0
    %189 = vmatpush1.msra.mxu0 %v64
    %190 = vmatprep.subr.mxu0 0.0
    %191 = vmatpush1.msra.mxu0 %v63
    %192 = vmatprep.subr.mxu0 0.0
    %193 = vmatpush1.msra.mxu0 %v62
    %194 = vmatprep.subr.mxu0 0.0
    %195 = vmatpush1.msra.mxu0 %v61
    %196 = vmatprep.subr.mxu0 0.0
    %197 = vmatpush2.msra.mxu0 0.0
    %198 = vmatprep.subr.mxu0 0.0
    %199 = vmatpush2.msra.mxu0 0.0
    %200 = vmatprep.subr.mxu0 0.0
    %201 = vmatpush2.msra.mxu0 0.0
    %202 = vmatprep.subr.mxu0 0.0
    %203 = vmatpush2.msra.mxu0 0.0
    %204 = vmatprep.subr.mxu0 0.0
    %205 = vmatpush2.msra.mxu0 0.0
    %206 = vmatprep.subr.mxu0 0.0
    %207 = vmatpush2.msra.mxu0 0.0
    %208 = vmatprep.subr.mxu0 0.0
    %209 = vmatpush2.msra.mxu0 0.0
    %210 = vmatprep.subr.mxu0 0.0
    %211 = vmatpush2.msra.mxu0 0.0
    %212 = vmatprep.subr.mxu0 0.0
    %213 = vmatpush2.msra.mxu0 0.0
    %214 = vmatprep.subr.mxu0 0.0
    %215 = vmatpush2.msra.mxu0 0.0
    %216 = vmatprep.subr.mxu0 0.0
    %217 = vmatpush2.msra.mxu0 0.0
    %218 = vmatprep.subr.mxu0 0.0
    %219 = vmatpush2.msra.mxu0 0.0
    %220 = vmatprep.subr.mxu0 0.0
    %221 = vmatpush2.msra.mxu0 0.0
    %222 = vmatprep.subr.mxu0 0.0
    %223 = vmatpush2.msra.mxu0 0.0
    %224 = vmatprep.subr.mxu0 0.0
    %225 = vmatpush2.msra.mxu0 %v78
    %226 = vmatprep.subr.mxu0 0.0
    %227 = vmatpush2.msra.mxu0 %v77
    %228 = vmatprep.mubr.f32.mxu0 %v92
    %229 = vmatmul.mubr.f32.gmra.mxu0 %v28
    %v230 = vpop.f32.mrf.mxu0
    %v231 = vadd.f32 %v161, %v230
    %v232 = vpop.f32.mrf.mxu0
    %233 = vdwg.mxu0
    %v234 = vmax.f32 %v231, 0.0
    %v235 = vld [vmem:[%s3] sm:$0xff]
    %v236 = vld [vmem:[%s3 + $0x8] sm:$0xff]
    %v237 = vld [vmem:[%s3 + $0x10] sm:$0xff]
    %v238 = vld [vmem:[%s3 + $0x18] sm:$0xff]
    %v239 = vld [vmem:[%s3 + $0x20] sm:$0xff]
    %v240 = vld [vmem:[%s3 + $0x28] sm:$0xff]
    %v241 = vld [vmem:[%s3 + $0x30] sm:$0xff]
    %v242 = vld [vmem:[%s3 + $0x38] sm:$0xff]
    %v243 = vld [vmem:[%s3 + $0x40] sm:$0xff]
    %v244 = vld [vmem:[%s3 + $0x48] sm:$0xff]
    %v245 = vld [vmem:[%s3 + $0x50] sm:$0xff]
    %v246 = vld [vmem:[%s3 + $0x58] sm:$0xff]
    %v247 = vld [vmem:[%s3 + $0x60] sm:$0xff]
    %v248 = vld [vmem:[%s3 + $0x68] sm:$0xff]
    %v249 = vld [vmem:[%s3 + $0x70] sm:$0xff]
    %v250 = vld [vmem:[%s3 + $0x78] sm:$0xff]
    %v251 = vld [vmem:[%s4] sm:$0x1]
    %v253 = vlaneseq
    %v254 = vshrl.u32 %v253, 7
    %v255 = vsub.s32 0, %v254
    %v256 = vrot.slane %v251, %v255
    %258 = vmatprep.subr.mxu0 0.0
    %259 = vmatpush1.msra.mxu0 %v250
    %260 = vmatprep.subr.mxu0 0.0
    %261 = vmatpush1.msra.mxu0 %v249
    %262 = vmatprep.subr.mxu0 0.0
    %263 = vmatpush1.msra.mxu0 %v248
    %264 = vmatprep.subr.mxu0 0.0
    %265 = vmatpush1.msra.mxu0 %v247
    %266 = vmatprep.subr.mxu0 0.0
    %267 = vmatpush1.msra.mxu0 %v246
    %268 = vmatprep.subr.mxu0 0.0
    %269 = vmatpush1.msra.mxu0 %v245
    %270 = vmatprep.subr.mxu0 0.0
    %271 = vmatpush1.msra.mxu0 %v244
    %272 = vmatprep.subr.mxu0 0.0
    %273 = vmatpush1.msra.mxu0 %v243
    %274 = vmatprep.subr.mxu0 0.0
    %275 = vmatpush1.msra.mxu0 %v242
    %276 = vmatprep.subr.mxu0 0.0
    %277 = vmatpush1.msra.mxu0 %v241
    %278 = vmatprep.subr.mxu0 0.0
    %279 = vmatpush1.msra.mxu0 %v240
    %280 = vmatprep.subr.mxu0 0.0
    %281 = vmatpush1.msra.mxu0 %v239
    %282 = vmatprep.subr.mxu0 0.0
    %283 = vmatpush1.msra.mxu0 %v238
    %284 = vmatprep.subr.mxu0 0.0
    %285 = vmatpush1.msra.mxu0 %v237
    %286 = vmatprep.subr.mxu0 0.0
    %287 = vmatpush1.msra.mxu0 %v236
    %288 = vmatprep.subr.mxu0 0.0
    %289 = vmatpush1.msra.mxu0 %v235
    %290 = vmatprep.subr.mxu0 0.0
    %291 = vmatpush2.msra.mxu0 0.0
    %292 = vmatprep.subr.mxu0 0.0
    %293 = vmatpush2.msra.mxu0 0.0
    %294 = vmatprep.subr.mxu0 0.0
    %295 = vmatpush2.msra.mxu0 0.0
    %296 = vmatprep.subr.mxu0 0.0
    %297 = vmatpush2.msra.mxu0 0.0
    %298 = vmatprep.subr.mxu0 0.0
    %299 = vmatpush2.msra.mxu0 0.0
    %300 = vmatprep.subr.mxu0 0.0
    %301 = vmatpush2.msra.mxu0 0.0
    %302 = vmatprep.subr.mxu0 0.0
    %303 = vmatpush2.msra.mxu0 0.0
    %304 = vmatprep.subr.mxu0 0.0
    %305 = vmatpush2.msra.mxu0 0.0
    %306 = vmatprep.subr.mxu0 0.0
    %307 = vmatpush2.msra.mxu0 0.0
    %308 = vmatprep.subr.mxu0 0.0
    %309 = vmatpush2.msra.mxu0 0.0
    %310 = vmatprep.subr.mxu0 0.0
    %311 = vmatpush2.msra.mxu0 0.0
    %312 = vmatprep.subr.mxu0 0.0
    %313 = vmatpush2.msra.mxu0 0.0
    %314 = vmatprep.subr.mxu0 0.0
    %315 = vmatpush2.msra.mxu0 0.0
    %316 = vmatprep.subr.mxu0 0.0
    %317 = vmatpush2.msra.mxu0 0.0
    %318 = vmatprep.subr.mxu0 0.0
    %319 = vmatpush2.msra.mxu0 0.0
    %320 = vmatprep.subr.mxu0 0.0
    %321 = vmatpush2.msra.mxu0 0.0
    %322 = vmatprep.mubr.f32.mxu0 0.0
    %323 = vmatmul.mubr.f32.gmra.mxu0 %v234
    %v324 = vpop.f32.mrf.mxu0
    %v325 = vadd.f32 %v256, %v324
    %v326 = vpop.f32.mrf.mxu0
    %327 = vdwg.mxu0
    %v328 = vmax.f32 %v325, 0.0
    %v329 = vld [vmem:[%s5] sm:$0xff]
    %v330 = vld [vmem:[%s5 + $0x8] sm:$0xff]
    %v331 = vld [vmem:[%s5 + $0x10] sm:$0xff]
    %v332 = vld [vmem:[%s5 + $0x18] sm:$0xff]
    %v333 = vld [vmem:[%s5 + $0x20] sm:$0xff]
    %v334 = vld [vmem:[%s5 + $0x28] sm:$0xff]
    %v335 = vld [vmem:[%s5 + $0x30] sm:$0xff]
    %v336 = vld [vmem:[%s5 + $0x38] sm:$0xff]
    %v337 = vld [vmem:[%s5 + $0x40] sm:$0xff]
    %v338 = vld [vmem:[%s5 + $0x48] sm:$0xff]
    %v339 = vld [vmem:[%s5 + $0x50] sm:$0xff]
    %v340 = vld [vmem:[%s5 + $0x58] sm:$0xff]
    %v341 = vld [vmem:[%s5 + $0x60] sm:$0xff]
    %v342 = vld [vmem:[%s5 + $0x68] sm:$0xff]
    %v343 = vld [vmem:[%s5 + $0x70] sm:$0xff]
    %v344 = vld [vmem:[%s5 + $0x78] sm:$0xff]
    %v345 = vld [vmem:[%s6] sm:$0x1]
    %v347 = vlaneseq
    %v348 = vshrl.u32 %v347, 7
    %v349 = vsub.s32 0, %v348
    %v350 = vrot.slane %v345, %v349
    %352 = vmatprep.subr.mxu0 0.0
    %353 = vmatpush1.msra.mxu0 %v344
    %354 = vmatprep.subr.mxu0 0.0
    %355 = vmatpush1.msra.mxu0 %v343
    %356 = vmatprep.subr.mxu0 0.0
    %357 = vmatpush1.msra.mxu0 %v342
    %358 = vmatprep.subr.mxu0 0.0
    %359 = vmatpush1.msra.mxu0 %v341
    %360 = vmatprep.subr.mxu0 0.0
    %361 = vmatpush1.msra.mxu0 %v340
    %362 = vmatprep.subr.mxu0 0.0
    %363 = vmatpush1.msra.mxu0 %v339
    %364 = vmatprep.subr.mxu0 0.0
    %365 = vmatpush1.msra.mxu0 %v338
    %366 = vmatprep.subr.mxu0 0.0
    %367 = vmatpush1.msra.mxu0 %v337
    %368 = vmatprep.subr.mxu0 0.0
    %369 = vmatpush1.msra.mxu0 %v336
    %370 = vmatprep.subr.mxu0 0.0
    %371 = vmatpush1.msra.mxu0 %v335
    %372 = vmatprep.subr.mxu0 0.0
    %373 = vmatpush1.msra.mxu0 %v334
    %374 = vmatprep.subr.mxu0 0.0
    %375 = vmatpush1.msra.mxu0 %v333
    %376 = vmatprep.subr.mxu0 0.0
    %377 = vmatpush1.msra.mxu0 %v332
    %378 = vmatprep.subr.mxu0 0.0
    %379 = vmatpush1.msra.mxu0 %v331
    %380 = vmatprep.subr.mxu0 0.0
    %381 = vmatpush1.msra.mxu0 %v330
    %382 = vmatprep.subr.mxu0 0.0
    %383 = vmatpush1.msra.mxu0 %v329
    %384 = vmatprep.subr.mxu0 0.0
    %385 = vmatpush2.msra.mxu0 0.0
    %386 = vmatprep.subr.mxu0 0.0
    %387 = vmatpush2.msra.mxu0 0.0
    %388 = vmatprep.subr.mxu0 0.0
    %389 = vmatpush2.msra.mxu0 0.0
    %390 = vmatprep.subr.mxu0 0.0
    %391 = vmatpush2.msra.mxu0 0.0
    %392 = vmatprep.subr.mxu0 0.0
    %393 = vmatpush2.msra.mxu0 0.0
    %394 = vmatprep.subr.mxu0 0.0
    %395 = vmatpush2.msra.mxu0 0.0
    %396 = vmatprep.subr.mxu0 0.0
    %397 = vmatpush2.msra.mxu0 0.0
    %398 = vmatprep.subr.mxu0 0.0
    %399 = vmatpush2.msra.mxu0 0.0
    %400 = vmatprep.subr.mxu0 0.0
    %401 = vmatpush2.msra.mxu0 0.0
    %402 = vmatprep.subr.mxu0 0.0
    %403 = vmatpush2.msra.mxu0 0.0
    %404 = vmatprep.subr.mxu0 0.0
    %405 = vmatpush2.msra.mxu0 0.0
    %406 = vmatprep.subr.mxu0 0.0
    %407 = vmatpush2.msra.mxu0 0.0
    %408 = vmatprep.subr.mxu0 0.0
    %409 = vmatpush2.msra.mxu0 0.0
    %410 = vmatprep.subr.mxu0 0.0
    %411 = vmatpush2.msra.mxu0 0.0
    %412 = vmatprep.subr.mxu0 0.0
    %413 = vmatpush2.msra.mxu0 0.0
    %414 = vmatprep.subr.mxu0 0.0
    %415 = vmatpush2.msra.mxu0 0.0
    %416 = vmatprep.mubr.f32.mxu0 0.0
    %417 = vmatmul.mubr.f32.gmra.mxu0 %v328
    %v418 = vpop.f32.mrf.mxu0
    %v419 = vadd.f32 %v350, %v418
    %v420 = vpop.f32.mrf.mxu0
    %421 = vdwg.mxu0
    %vm422 = vcmask 76800
    %423 = vst.msk [vmem:[#allocation2] sm:$0xf] %vm422, %v419
    // Predicated region
    $region30: #{net_forward.3} parent=1 // pred_check
      _
    $region31: #{net_forward.3} parent=1 // pred_check_branch
      %425 = sbr.rel (0) target = $region33
    $region32: #{net_forward.3} parent=1 // pred_region
      %s427 = ssub.s32 64, 64
      %428 = vsyncadd [#allocation3], %s427
      %s430 = sshll.u32 [#allocation2], 4
      %s431 = int_to_ptr.vmem [resolvable:$true] %s430
      %433 = dma.vmem_to_hbm [thread:$0]  %s431, 64, %s7, [#allocation3]
    $region33: #{net_forward.3} parent=1 // pred_fallthru
      _
    // Predicated region
    $region34: #{net_forward.3} parent=1 // pred_check
      _
    $region35: #{net_forward.3} parent=1 // pred_check_branch
      %435 = sbr.rel (0) target = $region37
    $region36: #{net_forward.3} parent=1 // pred_region
      %436 = dma.done [#allocation3], 64
    $region37: #{net_forward.3} parent=1 // pred_fallthru
      _
    %437 = vsyncpa [#allocation3], 1

// kernel: net_forward.2
$region0: #{net_forward.2}
  #allocation0 [shape = 'u32[]', space=smem, size = 0x4, offset = 0x4, fixed_abs, tag = 'smem constant byte address 0x4 - core index']
  #allocation1 [shape = 'u32[144,128]{1,0:T(1,128)}', space=vmem, size = 0x12000, scoped, tag = 'internal scratch']
  #allocation2 [shape = 'f32[6,16,28]{2,1,0:T(8,128)}', space=vmem, size = 0xc000, scoped, tag = 'scratch operand']
  #allocation3 [shape = 'f32[6,16,14]{2,1,0:T(8,128)}', space=vmem, size = 0xc000, scoped, tag = 'scratch operand']
  #allocation4 [shape = 'f32[16,5,10]{2,1,0:T(8,128)}', space=vmem, size = 0x10000, scoped, tag = 'scratch operand']
  %s0 = inlined_call_operand.vmem [shape: f32[4,3,32,32], index: 0, kind: input, shape index: {}]
  %s1 = inlined_call_operand.vmem [shape: f32[192,480], index: 1, kind: input, shape index: {}]
  %s2 = inlined_call_operand.vmem [shape: f32[6,1,1], index: 2, kind: input, shape index: {}]
  %s3 = inlined_call_operand.vmem [shape: f32[256,480], index: 3, kind: input, shape index: {}]
  %s4 = inlined_call_operand.vmem [shape: f32[16,1,1], index: 4, kind: input, shape index: {}]
  %s5 = inlined_call_operand.vmem [shape: f32[4,16,5,5], index: 5, kind: output, shape index: {}]
  %s6 = sld [smem:[#allocation0]]
  $region53: #{net_forward.2} parent=0
    _
  %s8 = ssub.s32 1, %s6
  %s9 = scalar_select 0, %s8, %s6
  loop: start=0, step=1, limit=6
  $region2: #{net_forward.2} parent=0 // loop_pre_header
    _
  $region3: #{net_forward.2} parent=0 // loop_header
    %s11 = sphi 0, %s15
    %p12 = scmp.ge.s32.totalorder %s11, 6
    %s21 = sphi 0, %s23
    %s24 = sphi 0, %s21
    %s25 = sphi 0, %s24
    %s41 = sphi 0, %s25
    %s45 = sphi 0, %s45
    %s47 = sphi 0, %s45
    %s48 = sphi 0, %s47
    %s62 = sphi 0, %s48
    %s66 = sphi 0, %s66
    %s68 = sphi 0, %s66
    %s69 = sphi 0, %s68
    %s83 = sphi 0, %s69
    %s87 = sphi 0, %s87
    %s89 = sphi 0, %s87
    %s90 = sphi 0, %s89
    %s104 = sphi 0, %s90
    %s108 = sphi 0, %s108
    %s110 = sphi 0, %s108
    %s111 = sphi 0, %s110
    %s125 = sphi 0, %s111
    %s131 = sphi 0, %s133
    %s134 = sphi 0, %s131
    %s135 = sphi 0, %s134
    %s151 = sphi 0, %s135
  $region4: #{net_forward.2} parent=0 // loop_header_branch
    %14 = sbr.rel (%p12) target = $region8
  $region5: #{net_forward.2} parent=0 // loop_body
    %s16 = ssub.s32 %s11, 1
    %s17 = ssub.s32 %s11, 2
    %s18 = sadd.s32 %s11, 1
    %s19 = ssub.s32 %s11, %s18
    %p20 = scmp.eq.s32.totalorder %s19, 0
    %s22 = sadd.s32 %s21, 1
    %s23 = scalar_select %p20, %s21, %s22
    %p26 = pneg %p20
    %p27 = scmp.eq.s32.totalorder %s11, 3
    %p28 = por %p26, %p27
    %p29 = scmp.ne.s32.totalorder %s21, %s24
    %p30 = scmp.eq.s32.totalorder %s11, 0
    %p31 = por %p29, %p30
    %p32 = scmp.ne.s32.totalorder %s21, %s24
    %p33 = scmp.eq.s32.totalorder %s16, 3
    %p34 = por %p32, %p33
    %p35 = scmp.ne.s32.totalorder %s24, %s25
    %p36 = scmp.eq.s32.totalorder %s16, 0
    %p37 = por %p35, %p36
    %p38 = scmp.ne.s32.totalorder %s24, %s25
    %p39 = scmp.eq.s32.totalorder %s17, 3
    %p40 = por %p38, %p39
    %p42 = scmp.ne.s32.totalorder %s25, %s41
    %p43 = scmp.eq.s32.totalorder %s17, 0
    %p44 = por %p42, %p43
    %s46 = sadd.s32 %s45, 1
    %p49 = scmp.eq.s32.totalorder %s11, 3
    %p50 = scmp.ne.s32.totalorder %s45, %s47
    %p51 = scmp.eq.s32.totalorder %s11, 0
    %p52 = por %p50, %p51
    %p53 = scmp.ne.s32.totalorder %s45, %s47
    %p54 = scmp.eq.s32.totalorder %s16, 3
    %p55 = por %p53, %p54
    %p56 = scmp.ne.s32.totalorder %s47, %s48
    %p57 = scmp.eq.s32.totalorder %s16, 0
    %p58 = por %p56, %p57
    %p59 = scmp.ne.s32.totalorder %s47, %s48
    %p60 = scmp.eq.s32.totalorder %s17, 3
    %p61 = por %p59, %p60
    %p63 = scmp.ne.s32.totalorder %s48, %s62
    %p64 = scmp.eq.s32.totalorder %s17, 0
    %p65 = por %p63, %p64
    %s67 = sadd.s32 %s66, 1
    %p70 = scmp.eq.s32.totalorder %s11, 3
    %p71 = scmp.ne.s32.totalorder %s66, %s68
    %p72 = scmp.eq.s32.totalorder %s11, 0
    %p73 = por %p71, %p72
    %p74 = scmp.ne.s32.totalorder %s66, %s68
    %p75 = scmp.eq.s32.totalorder %s16, 3
    %p76 = por %p74, %p75
    %p77 = scmp.ne.s32.totalorder %s68, %s69
    %p78 = scmp.eq.s32.totalorder %s16, 0
    %p79 = por %p77, %p78
    %p80 = scmp.ne.s32.totalorder %s68, %s69
    %p81 = scmp.eq.s32.totalorder %s17, 3
    %p82 = por %p80, %p81
    %p84 = scmp.ne.s32.totalorder %s69, %s83
    %p85 = scmp.eq.s32.totalorder %s17, 0
    %p86 = por %p84, %p85
    %s88 = sadd.s32 %s87, 1
    %p91 = scmp.eq.s32.totalorder %s11, 3
    %p92 = scmp.ne.s32.totalorder %s87, %s89
    %p93 = scmp.eq.s32.totalorder %s11, 0
    %p94 = por %p92, %p93
    %p95 = scmp.ne.s32.totalorder %s87, %s89
    %p96 = scmp.eq.s32.totalorder %s16, 3
    %p97 = por %p95, %p96
    %p98 = scmp.ne.s32.totalorder %s89, %s90
    %p99 = scmp.eq.s32.totalorder %s16, 0
    %p100 = por %p98, %p99
    %p101 = scmp.ne.s32.totalorder %s89, %s90
    %p102 = scmp.eq.s32.totalorder %s17, 3
    %p103 = por %p101, %p102
    %p105 = scmp.ne.s32.totalorder %s90, %s104
    %p106 = scmp.eq.s32.totalorder %s17, 0
    %p107 = por %p105, %p106
    %s109 = sadd.s32 %s108, 1
    %p112 = scmp.eq.s32.totalorder %s11, 3
    %p113 = scmp.ne.s32.totalorder %s108, %s110
    %p114 = scmp.eq.s32.totalorder %s11, 0
    %p115 = por %p113, %p114
    %p116 = scmp.ne.s32.totalorder %s108, %s110
    %p117 = scmp.eq.s32.totalorder %s16, 3
    %p118 = por %p116, %p117
    %p119 = scmp.ne.s32.totalorder %s110, %s111
    %p120 = scmp.eq.s32.totalorder %s16, 0
    %p121 = por %p119, %p120
    %p122 = scmp.ne.s32.totalorder %s110, %s111
    %p123 = scmp.eq.s32.totalorder %s17, 3
    %p124 = por %p122, %p123
    %p126 = scmp.ne.s32.totalorder %s111, %s125
    %p127 = scmp.eq.s32.totalorder %s17, 0
    %p128 = por %p126, %p127
    %s129 = ssub.s32 %s11, %s18
    %p130 = scmp.eq.s32.totalorder %s129, 0
    %s132 = sadd.s32 %s131, 1
    %s133 = scalar_select %p130, %s131, %s132
    %p136 = pneg %p130
    %p137 = scmp.eq.s32.totalorder %s11, 3
    %p138 = por %p136, %p137
    %p139 = scmp.ne.s32.totalorder %s131, %s134
    %p140 = scmp.eq.s32.totalorder %s11, 0
    %p141 = por %p139, %p140
    %p142 = scmp.ne.s32.totalorder %s131, %s134
    %p143 = scmp.eq.s32.totalorder %s16, 3
    %p144 = por %p142, %p143
    %p145 = scmp.ne.s32.totalorder %s134, %s135
    %p146 = scmp.eq.s32.totalorder %s16, 0
    %p147 = por %p145, %p146
    %p148 = scmp.ne.s32.totalorder %s134, %s135
    %p149 = scmp.eq.s32.totalorder %s17, 3
    %p150 = por %p148, %p149
    %p152 = scmp.ne.s32.totalorder %s135, %s151
    %p153 = scmp.eq.s32.totalorder %s17, 0
    %p154 = por %p152, %p153
    %p155 = scmp.le.s32.totalorder 1, %s11
    %p156 = scmp.lt.s32.totalorder %s11, 5
    %p157 = pnand %p155, %p156
    %p158 = pneg %p157
    // Predicated region
    $region9: #{net_forward.2} parent=5 // pred_check
      _
    $region10: #{net_forward.2} parent=5 // pred_check_branch
      %160 = sbr.rel (%p157) target = $region12
    $region11: #{net_forward.2} parent=5 // pred_region
      %s161 = ssub.s32 %s11, 1
      // Predicated region
      $region13: #{net_forward.2} parent=11 // pred_check
        %p162 = pneg %p58
      $region14: #{net_forward.2} parent=11 // pred_check_branch
        %164 = sbr.rel (%p162) target = $region16
      $region15: #{net_forward.2} parent=11 // pred_region
        _
      $region16: #{net_forward.2} parent=11 // pred_fallthru
        _
      // Predicated region
      $region17: #{net_forward.2} parent=11 // pred_check
        %p165 = pneg %p79
      $region18: #{net_forward.2} parent=11 // pred_check_branch
        %167 = sbr.rel (%p165) target = $region20
      $region19: #{net_forward.2} parent=11 // pred_region
        _
      $region20: #{net_forward.2} parent=11 // pred_fallthru
        _
      // Predicated region
      $region21: #{net_forward.2} parent=11 // pred_check
        %p168 = pneg %p100
      $region22: #{net_forward.2} parent=11 // pred_check_branch
        %170 = sbr.rel (%p168) target = $region24
      $region23: #{net_forward.2} parent=11 // pred_region
        _
      $region24: #{net_forward.2} parent=11 // pred_fallthru
        _
      // Predicated region
      $region25: #{net_forward.2} parent=11 // pred_check
        %p171 = pneg %p121
      $region26: #{net_forward.2} parent=11 // pred_check_branch
        %173 = sbr.rel (%p171) target = $region28
      $region27: #{net_forward.2} parent=11 // pred_region
        _
      $region28: #{net_forward.2} parent=11 // pred_fallthru
        _
    $region12: #{net_forward.2} parent=5 // pred_fallthru
      _
    %p174 = scmp.lt.s32.totalorder %s11, 4
    // Predicated region
    $region29: #{net_forward.2} parent=5 // pred_check
      %p175 = pneg %p174
    $region30: #{net_forward.2} parent=5 // pred_check_branch
      %177 = sbr.rel (%p175) target = $region32
    $region31: #{net_forward.2} parent=5 // pred_region
      // Predicated region
      $region33: #{net_forward.2} parent=31 // pred_check
        %p178 = pneg %p31
      $region34: #{net_forward.2} parent=31 // pred_check_branch
        %180 = sbr.rel (%p178) target = $region36
      $region35: #{net_forward.2} parent=31 // pred_region
        %p181 = scmp.lt.s32.totalorder %s11, 3
        %s182 = scalar_select %p181, %s11, 3
        %s183 = smul.addr %s182, 12
        %s184 = smul.addr %s183, 8
        %s185 = scalar_lea.vmem %s0, %s184
      $region36: #{net_forward.2} parent=31 // pred_fallthru
        _
    $region32: #{net_forward.2} parent=5 // pred_fallthru
      _
    %p186 = scmp.le.s32.totalorder 1, %s11
    %p187 = scmp.lt.s32.totalorder %s11, 5
    %p188 = pnand %p186, %p187
    %p189 = pneg %p188
    // Predicated region
    $region37: #{net_forward.2} parent=5 // pred_check
      _
    $region38: #{net_forward.2} parent=5 // pred_check_branch
      %191 = sbr.rel (%p188) target = $region40
    $region39: #{net_forward.2} parent=5 // pred_region
      %s192 = ssub.s32 %s11, 1
      %p193 = scmp.lt.s32.totalorder %s16, 3
      %s194 = scalar_select %p193, %s16, 3
      %s195 = smul.addr %s194, 12
      %s196 = smul.addr %s195, 8
      %s197 = scalar_lea.vmem %s0, %s196
      %p198 = pneg %p37
      %p199 = pneg %p34
      %p200 = pneg %p58
      %p201 = pneg %p55
      %p202 = pneg %p79
      %p203 = pneg %p76
      %p204 = pneg %p100
      %p205 = pneg %p97
      %p206 = pneg %p121
      %p207 = pneg %p118
      %p208 = pneg %p147
      %p209 = pneg %p144
      %p210 = scmp.lt.s32.totalorder %s16, 3
      %s211 = scalar_select %p210, %s16, 3
      %s212 = smul.addr %s211, 16
      %s213 = smul.addr %s212, 8
      %s214 = scalar_lea.vmem %s5, %s213
      %p215 = scmp.lt.s32.totalorder %s16, 3
      %s216 = scalar_select %p215, %s16, 3
      %s217 = smul.addr %s216, 12
      %s218 = smul.addr %s217, 8
      %s219 = scalar_lea.vmem %s0, %s218
      %p220 = scmp.lt.s32.totalorder %s16, 3
      %s221 = scalar_select %p220, %s16, 3
      %s222 = smul.addr %s221, 16
      %s223 = smul.addr %s222, 8
      %s224 = scalar_lea.vmem %s5, %s223
      %v225 = vld [vmem:[%s219] sm:$0xff]
      %v226 = vld [vmem:[%s219 + $0x8] sm:$0xff]
      %v227 = vld [vmem:[%s219 + $0x10] sm:$0xff]
      %v228 = vld [vmem:[%s219 + $0x18] sm:$0xff]
      %v229 = vld [vmem:[%s219 + $0x20] sm:$0xff]
      %v230 = vld [vmem:[%s219 + $0x28] sm:$0xff]
      %v231 = vld [vmem:[%s219 + $0x30] sm:$0xff]
      %v232 = vld [vmem:[%s219 + $0x38] sm:$0xff]
      %v233 = vld [vmem:[%s219 + $0x40] sm:$0xff]
      %v234 = vld [vmem:[%s219 + $0x48] sm:$0xff]
      %v235 = vld [vmem:[%s219 + $0x50] sm:$0xff]
      %v236 = vld [vmem:[%s219 + $0x58] sm:$0xff]
      %v237 = vld [vmem:[%s1] sm:$0xff]
      %v238 = vld [vmem:[%s1 + $0x8] sm:$0xff]
      %v239 = vld [vmem:[%s1 + $0x10] sm:$0xff]
      %v240 = vld [vmem:[%s1 + $0x18] sm:$0xff]
      %v241 = vld [vmem:[%s1 + $0x20] sm:$0xff]
      %v242 = vld [vmem:[%s1 + $0x28] sm:$0xff]
      %v243 = vld [vmem:[%s1 + $0x30] sm:$0xff]
      %v244 = vld [vmem:[%s1 + $0x38] sm:$0xff]
      %v245 = vld [vmem:[%s1 + $0x40] sm:$0xff]
      %v246 = vld [vmem:[%s1 + $0x48] sm:$0xff]
      %v247 = vld [vmem:[%s1 + $0x50] sm:$0xff]
      %v248 = vld [vmem:[%s1 + $0x58] sm:$0xff]
      %v249 = vld [vmem:[%s1 + $0x60] sm:$0xff]
      %v250 = vld [vmem:[%s1 + $0x68] sm:$0xff]
      %v251 = vld [vmem:[%s1 + $0x70] sm:$0xff]
      %v252 = vld [vmem:[%s1 + $0x78] sm:$0xff]
      %v253 = vld [vmem:[%s1 + $0x80] sm:$0xff]
      %v254 = vld [vmem:[%s1 + $0x88] sm:$0xff]
      %v255 = vld [vmem:[%s1 + $0x90] sm:$0xff]
      %v256 = vld [vmem:[%s1 + $0x98] sm:$0xff]
      %v257 = vld [vmem:[%s1 + $0xa0] sm:$0xff]
      %v258 = vld [vmem:[%s1 + $0xa8] sm:$0xff]
      %v259 = vld [vmem:[%s1 + $0xb0] sm:$0xff]
      %v260 = vld [vmem:[%s1 + $0xb8] sm:$0xff]
      %v261 = vld [vmem:[%s1 + $0xc0] sm:$0xff]
      %v262 = vld [vmem:[%s1 + $0xc8] sm:$0xff]
      %v263 = vld [vmem:[%s1 + $0xd0] sm:$0xff]
      %v264 = vld [vmem:[%s1 + $0xd8] sm:$0xff]
      %v265 = vld [vmem:[%s1 + $0xe0] sm:$0xff]
      %v266 = vld [vmem:[%s1 + $0xe8] sm:$0xff]
      %v267 = vld [vmem:[%s1 + $0xf0] sm:$0xff]
      %v268 = vld [vmem:[%s1 + $0xf8] sm:$0xff]
      %v269 = vld [vmem:[%s1 + $0x100] sm:$0xff]
      %v270 = vld [vmem:[%s1 + $0x108] sm:$0xff]
      %v271 = vld [vmem:[%s1 + $0x110] sm:$0xff]
      %v272 = vld [vmem:[%s1 + $0x118] sm:$0xff]
      %v273 = vld [vmem:[%s1 + $0x120] sm:$0xff]
      %v274 = vld [vmem:[%s1 + $0x128] sm:$0xff]
      %v275 = vld [vmem:[%s1 + $0x130] sm:$0xff]
      %v276 = vld [vmem:[%s1 + $0x138] sm:$0xff]
      %v277 = vld [vmem:[%s1 + $0x140] sm:$0xff]
      %v278 = vld [vmem:[%s1 + $0x148] sm:$0xff]
      %v279 = vld [vmem:[%s1 + $0x150] sm:$0xff]
      %v280 = vld [vmem:[%s1 + $0x158] sm:$0xff]
      %v281 = vld [vmem:[%s1 + $0x160] sm:$0xff]
      %v282 = vld [vmem:[%s1 + $0x168] sm:$0xff]
      %v283 = vld [vmem:[%s1 + $0x170] sm:$0xff]
      %v284 = vld [vmem:[%s1 + $0x178] sm:$0xff]
      %v285 = vld [vmem:[%s1 + $0x180] sm:$0xff]
      %v286 = vld [vmem:[%s1 + $0x188] sm:$0xff]
      %v287 = vld [vmem:[%s1 + $0x190] sm:$0xff]
      %v288 = vld [vmem:[%s1 + $0x198] sm:$0xff]
      %v289 = vld [vmem:[%s1 + $0x1a0] sm:$0xff]
      %v290 = vld [vmem:[%s1 + $0x1a8] sm:$0xff]
      %v291 = vld [vmem:[%s1 + $0x1b0] sm:$0xff]
      %v292 = vld [vmem:[%s1 + $0x1b8] sm:$0xff]
      %v293 = vld [vmem:[%s1 + $0x1c0] sm:$0xff]
      %v294 = vld [vmem:[%s1 + $0x1c8] sm:$0xff]
      %v295 = vld [vmem:[%s1 + $0x1d0] sm:$0xff]
      %v296 = vld [vmem:[%s1 + $0x1d8] sm:$0xff]
      %v297 = vld [vmem:[%s1 + $0x1e0] sm:$0xff]
      %v298 = vld [vmem:[%s1 + $0x1e8] sm:$0xff]
      %v299 = vld [vmem:[%s1 + $0x1f0] sm:$0xff]
      %v300 = vld [vmem:[%s1 + $0x1f8] sm:$0xff]
      %v301 = vld [vmem:[%s1 + $0x200] sm:$0xff]
      %v302 = vld [vmem:[%s1 + $0x208] sm:$0xff]
      %v303 = vld [vmem:[%s1 + $0x210] sm:$0xff]
      %v304 = vld [vmem:[%s1 + $0x218] sm:$0xff]
      %v305 = vld [vmem:[%s1 + $0x220] sm:$0xff]
      %v306 = vld [vmem:[%s1 + $0x228] sm:$0xff]
      %v307 = vld [vmem:[%s1 + $0x230] sm:$0xff]
      %v308 = vld [vmem:[%s1 + $0x238] sm:$0xff]
      %v309 = vld [vmem:[%s1 + $0x240] sm:$0xff]
      %v310 = vld [vmem:[%s1 + $0x248] sm:$0xff]
      %v311 = vld [vmem:[%s1 + $0x250] sm:$0xff]
      %v312 = vld [vmem:[%s1 + $0x258] sm:$0xff]
      %v313 = vld [vmem:[%s1 + $0x260] sm:$0xff]
      %v314 = vld [vmem:[%s1 + $0x268] sm:$0xff]
      %v315 = vld [vmem:[%s1 + $0x270] sm:$0xff]
      %v316 = vld [vmem:[%s1 + $0x278] sm:$0xff]
      %v317 = vld [vmem:[%s1 + $0x280] sm:$0xff]
      %v318 = vld [vmem:[%s1 + $0x288] sm:$0xff]
      %v319 = vld [vmem:[%s1 + $0x290] sm:$0xff]
      %v320 = vld [vmem:[%s1 + $0x298] sm:$0xff]
      %v321 = vld [vmem:[%s1 + $0x2a0] sm:$0xff]
      %v322 = vld [vmem:[%s1 + $0x2a8] sm:$0xff]
      %v323 = vld [vmem:[%s1 + $0x2b0] sm:$0xff]
      %v324 = vld [vmem:[%s1 + $0x2b8] sm:$0xff]
      %v325 = vld [vmem:[%s1 + $0x2c0] sm:$0xff]
      %v326 = vld [vmem:[%s1 + $0x2c8] sm:$0xff]
      %v327 = vld [vmem:[%s1 + $0x2d0] sm:$0xff]
      %v328 = vld [vmem:[%s1 + $0x2d8] sm:$0xff]
      %v329 = vld [vmem:[%s1 + $0x2e0] sm:$0xff]
      %v330 = vld [vmem:[%s1 + $0x2e8] sm:$0xff]
      %v331 = vld [vmem:[%s1 + $0x2f0] sm:$0xff]
      %v332 = vld [vmem:[%s1 + $0x2f8] sm:$0xff]
      %v333 = vld [vmem:[%s2] sm:$0x1]
      %v334 = vld [vmem:[%s2 + $0x1] sm:$0x1]
      %v335 = vld [vmem:[%s2 + $0x2] sm:$0x1]
      %v336 = vld [vmem:[%s2 + $0x3] sm:$0x1]
      %v337 = vld [vmem:[%s2 + $0x4] sm:$0x1]
      %v338 = vld [vmem:[%s2 + $0x5] sm:$0x1]
      %351 = vrot.lane.b32.xlu0 %v225, 127
      %v352 = vpop.permute.xlu0 %351
      %353 = vrot.lane.b32.xlu0 %v226, 127
      %v354 = vpop.permute.xlu0 %353
      %355 = vrot.lane.b32.xlu0 %v227, 127
      %v356 = vpop.permute.xlu0 %355
      %357 = vrot.lane.b32.xlu0 %v228, 127
      %v358 = vpop.permute.xlu0 %357
      %359 = vrot.lane.b32.xlu0 %v229, 127
      %v360 = vpop.permute.xlu0 %359
      %361 = vrot.lane.b32.xlu0 %v230, 127
      %v362 = vpop.permute.xlu0 %361
      %363 = vrot.lane.b32.xlu0 %v231, 127
      %v364 = vpop.permute.xlu0 %363
      %365 = vrot.lane.b32.xlu0 %v232, 127
      %v366 = vpop.permute.xlu0 %365
      %367 = vrot.lane.b32.xlu0 %v233, 127
      %v368 = vpop.permute.xlu0 %367
      %369 = vrot.lane.b32.xlu0 %v234, 127
      %v370 = vpop.permute.xlu0 %369
      %371 = vrot.lane.b32.xlu0 %v235, 127
      %v372 = vpop.permute.xlu0 %371
      %373 = vrot.lane.b32.xlu0 %v236, 127
      %v374 = vpop.permute.xlu0 %373
      %387 = vrot.lane.b32.xlu0 %v225, 126
      %v388 = vpop.permute.xlu0 %387
      %389 = vrot.lane.b32.xlu0 %v226, 126
      %v390 = vpop.permute.xlu0 %389
      %391 = vrot.lane.b32.xlu0 %v227, 126
      %v392 = vpop.permute.xlu0 %391
      %393 = vrot.lane.b32.xlu0 %v228, 126
      %v394 = vpop.permute.xlu0 %393
      %395 = vrot.lane.b32.xlu0 %v229, 126
      %v396 = vpop.permute.xlu0 %395
      %397 = vrot.lane.b32.xlu0 %v230, 126
      %v398 = vpop.permute.xlu0 %397
      %399 = vrot.lane.b32.xlu0 %v231, 126
      %v400 = vpop.permute.xlu0 %399
      %401 = vrot.lane.b32.xlu0 %v232, 126
      %v402 = vpop.permute.xlu0 %401
      %403 = vrot.lane.b32.xlu0 %v233, 126
      %v404 = vpop.permute.xlu0 %403
      %405 = vrot.lane.b32.xlu0 %v234, 126
      %v406 = vpop.permute.xlu0 %405
      %407 = vrot.lane.b32.xlu0 %v235, 126
      %v408 = vpop.permute.xlu0 %407
      %409 = vrot.lane.b32.xlu0 %v236, 126
      %v410 = vpop.permute.xlu0 %409
      %423 = vrot.lane.b32.xlu0 %v225, 125
      %v424 = vpop.permute.xlu0 %423
      %425 = vrot.lane.b32.xlu0 %v226, 125
      %v426 = vpop.permute.xlu0 %425
      %427 = vrot.lane.b32.xlu0 %v227, 125
      %v428 = vpop.permute.xlu0 %427
      %429 = vrot.lane.b32.xlu0 %v228, 125
      %v430 = vpop.permute.xlu0 %429
      %431 = vrot.lane.b32.xlu0 %v229, 125
      %v432 = vpop.permute.xlu0 %431
      %433 = vrot.lane.b32.xlu0 %v230, 125
      %v434 = vpop.permute.xlu0 %433
      %435 = vrot.lane.b32.xlu0 %v231, 125
      %v436 = vpop.permute.xlu0 %435
      %437 = vrot.lane.b32.xlu0 %v232, 125
      %v438 = vpop.permute.xlu0 %437
      %439 = vrot.lane.b32.xlu0 %v233, 125
      %v440 = vpop.permute.xlu0 %439
      %441 = vrot.lane.b32.xlu0 %v234, 125
      %v442 = vpop.permute.xlu0 %441
      %443 = vrot.lane.b32.xlu0 %v235, 125
      %v444 = vpop.permute.xlu0 %443
      %445 = vrot.lane.b32.xlu0 %v236, 125
      %v446 = vpop.permute.xlu0 %445
      %459 = vrot.lane.b32.xlu0 %v225, 124
      %v460 = vpop.permute.xlu0 %459
      %461 = vrot.lane.b32.xlu0 %v226, 124
      %v462 = vpop.permute.xlu0 %461
      %463 = vrot.lane.b32.xlu0 %v227, 124
      %v464 = vpop.permute.xlu0 %463
      %465 = vrot.lane.b32.xlu0 %v228, 124
      %v466 = vpop.permute.xlu0 %465
      %467 = vrot.lane.b32.xlu0 %v229, 124
      %v468 = vpop.permute.xlu0 %467
      %469 = vrot.lane.b32.xlu0 %v230, 124
      %v470 = vpop.permute.xlu0 %469
      %471 = vrot.lane.b32.xlu0 %v231, 124
      %v472 = vpop.permute.xlu0 %471
      %473 = vrot.lane.b32.xlu0 %v232, 124
      %v474 = vpop.permute.xlu0 %473
      %475 = vrot.lane.b32.xlu0 %v233, 124
      %v476 = vpop.permute.xlu0 %475
      %477 = vrot.lane.b32.xlu0 %v234, 124
      %v478 = vpop.permute.xlu0 %477
      %479 = vrot.lane.b32.xlu0 %v235, 124
      %v480 = vpop.permute.xlu0 %479
      %481 = vrot.lane.b32.xlu0 %v236, 124
      %v482 = vpop.permute.xlu0 %481
      %vm495 = vcmask 785408
      %v497 = vsel %vm495, %v240, 0
      %v500 = vsel %vm495, %v244, 0
      %v503 = vsel %vm495, %v248, 0
      %v506 = vsel %vm495, %v252, 0
      %v509 = vsel %vm495, %v256, 0
      %v512 = vsel %vm495, %v260, 0
      %v515 = vsel %vm495, %v264, 0
      %v518 = vsel %vm495, %v268, 0
      %v521 = vsel %vm495, %v272, 0
      %v524 = vsel %vm495, %v276, 0
      %v527 = vsel %vm495, %v280, 0
      %v530 = vsel %vm495, %v284, 0
      %v533 = vsel %vm495, %v288, 0
      %v536 = vsel %vm495, %v292, 0
      %v539 = vsel %vm495, %v296, 0
      %v542 = vsel %vm495, %v300, 0
      %v545 = vsel %vm495, %v304, 0
      %v548 = vsel %vm495, %v308, 0
      %v551 = vsel %vm495, %v312, 0
      %v554 = vsel %vm495, %v316, 0
      %v557 = vsel %vm495, %v320, 0
      %v560 = vsel %vm495, %v324, 0
      %v563 = vsel %vm495, %v328, 0
      %v566 = vsel %vm495, %v332, 0
      %568 = vmatprep.subr.mxu0 0.0
      %569 = vmatpush1.msra.mxu0 %v358
      %570 = vmatprep.subr.mxu0 0.0
      %571 = vmatpush1.msra.mxu0 %v356
      %572 = vmatprep.subr.mxu0 0.0
      %573 = vmatpush1.msra.mxu0 %v354
      %574 = vmatprep.subr.mxu0 0.0
      %575 = vmatpush1.msra.mxu0 %v352
      %576 = vmatprep.subr.mxu0 0.0
      %577 = vmatpush1.msra.mxu0 %v236
      %578 = vmatprep.subr.mxu0 0.0
      %579 = vmatpush1.msra.mxu0 %v235
      %580 = vmatprep.subr.mxu0 0.0
      %581 = vmatpush1.msra.mxu0 %v234
      %582 = vmatprep.subr.mxu0 0.0
      %583 = vmatpush1.msra.mxu0 %v233
      %584 = vmatprep.subr.mxu0 0.0
      %585 = vmatpush1.msra.mxu0 %v232
      %586 = vmatprep.subr.mxu0 0.0
      %587 = vmatpush1.msra.mxu0 %v231
      %588 = vmatprep.subr.mxu0 0.0
      %589 = vmatpush1.msra.mxu0 %v230
      %590 = vmatprep.subr.mxu0 0.0
      %591 = vmatpush1.msra.mxu0 %v229
      %592 = vmatprep.subr.mxu0 0.0
      %593 = vmatpush1.msra.mxu0 %v228
      %594 = vmatprep.subr.mxu0 0.0
      %595 = vmatpush1.msra.mxu0 %v227
      %596 = vmatprep.subr.mxu0 0.0
      %597 = vmatpush1.msra.mxu0 %v226
      %598 = vmatprep.subr.mxu0 0.0
      %599 = vmatpush1.msra.mxu0 %v225
      %600 = vmatprep.subr.mxu0 0.0
      %601 = vmatpush2.msra.mxu0 %v402
      %602 = vmatprep.subr.mxu0 0.0
      %603 = vmatpush2.msra.mxu0 %v400
      %604 = vmatprep.subr.mxu0 0.0
      %605 = vmatpush2.msra.mxu0 %v398
      %606 = vmatprep.subr.mxu0 0.0
      %607 = vmatpush2.msra.mxu0 %v396
      %608 = vmatprep.subr.mxu0 0.0
      %609 = vmatpush2.msra.mxu0 %v394
      %610 = vmatprep.subr.mxu0 0.0
      %611 = vmatpush2.msra.mxu0 %v392
      %612 = vmatprep.subr.mxu0 0.0
      %613 = vmatpush2.msra.mxu0 %v390
      %614 = vmatprep.subr.mxu0 0.0
      %615 = vmatpush2.msra.mxu0 %v388
      %616 = vmatprep.subr.mxu0 0.0
      %617 = vmatpush2.msra.mxu0 %v374
      %618 = vmatprep.subr.mxu0 0.0
      %619 = vmatpush2.msra.mxu0 %v372
      %620 = vmatprep.subr.mxu0 0.0
      %621 = vmatpush2.msra.mxu0 %v370
      %622 = vmatprep.subr.mxu0 0.0
      %623 = vmatpush2.msra.mxu0 %v368
      %624 = vmatprep.subr.mxu0 0.0
      %625 = vmatpush2.msra.mxu0 %v366
      %626 = vmatprep.subr.mxu0 0.0
      %627 = vmatpush2.msra.mxu0 %v364
      %628 = vmatprep.subr.mxu0 0.0
      %629 = vmatpush2.msra.mxu0 %v362
      %630 = vmatprep.subr.mxu0 0.0
      %631 = vmatpush2.msra.mxu0 %v360
      %632 = vmatprep.mubr.f32.mxu0 %v238
      %633 = vmatmul.mubr.f32.gmra.mxu0 %v237
      %v634 = vpop.f32.mrf.mxu0
      %v635 = vadd.f32 0.0, %v634
      %v636 = vpop.f32.mrf.mxu0
      %637 = vmatprep.mubr.f32.mxu0 %v242
      %638 = vmatmul.mubr.f32.gmra.mxu0 %v241
      %v639 = vpop.f32.mrf.mxu0
      %v640 = vadd.f32 0.0, %v639
      %v641 = vpop.f32.mrf.mxu0
      %642 = vmatprep.mubr.f32.mxu0 %v246
      %643 = vmatmul.mubr.f32.gmra.mxu0 %v245
      %v644 = vpop.f32.mrf.mxu0
      %v645 = vadd.f32 0.0, %v644
      %v646 = vpop.f32.mrf.mxu0
      %647 = vmatprep.mubr.f32.mxu0 %v250
      %648 = vmatmul.mubr.f32.gmra.mxu0 %v249
      %v649 = vpop.f32.mrf.mxu0
      %v650 = vadd.f32 0.0, %v649
      %v651 = vpop.f32.mrf.mxu0
      %652 = vmatprep.mubr.f32.mxu0 %v254
      %653 = vmatmul.mubr.f32.gmra.mxu0 %v253
      %v654 = vpop.f32.mrf.mxu0
      %v655 = vadd.f32 0.0, %v654
      %v656 = vpop.f32.mrf.mxu0
      %657 = vmatprep.mubr.f32.mxu0 %v258
      %658 = vmatmul.mubr.f32.gmra.mxu0 %v257
      %v659 = vpop.f32.mrf.mxu0
      %v660 = vadd.f32 0.0, %v659
      %v661 = vpop.f32.mrf.mxu0
      %662 = vmatprep.mubr.f32.mxu0 %v262
      %663 = vmatmul.mubr.f32.gmra.mxu0 %v261
      %v664 = vpop.f32.mrf.mxu0
      %v665 = vadd.f32 0.0, %v664
      %v666 = vpop.f32.mrf.mxu0
      %667 = vmatprep.mubr.f32.mxu0 %v266
      %668 = vmatmul.mubr.f32.gmra.mxu0 %v265
      %v669 = vpop.f32.mrf.mxu0
      %v670 = vadd.f32 0.0, %v669
      %v671 = vpop.f32.mrf.mxu0
      %672 = vmatprep.mubr.f32.mxu0 %v270
      %673 = vmatmul.mubr.f32.gmra.mxu0 %v269
      %v674 = vpop.f32.mrf.mxu0
      %v675 = vadd.f32 0.0, %v674
      %v676 = vpop.f32.mrf.mxu0
      %677 = vmatprep.mubr.f32.mxu0 %v274
      %678 = vmatmul.mubr.f32.gmra.mxu0 %v273
      %v679 = vpop.f32.mrf.mxu0
      %v680 = vadd.f32 0.0, %v679
      %v681 = vpop.f32.mrf.mxu0
      %682 = vmatprep.mubr.f32.mxu0 %v278
      %683 = vmatmul.mubr.f32.gmra.mxu0 %v277
      %v684 = vpop.f32.mrf.mxu0
      %v685 = vadd.f32 0.0, %v684
      %v686 = vpop.f32.mrf.mxu0
      %687 = vmatprep.mubr.f32.mxu0 %v282
      %688 = vmatmul.mubr.f32.gmra.mxu0 %v281
      %v689 = vpop.f32.mrf.mxu0
      %v690 = vadd.f32 0.0, %v689
      %v691 = vpop.f32.mrf.mxu0
      %692 = vmatprep.mubr.f32.mxu0 %v286
      %693 = vmatmul.mubr.f32.gmra.mxu0 %v285
      %v694 = vpop.f32.mrf.mxu0
      %v695 = vadd.f32 0.0, %v694
      %v696 = vpop.f32.mrf.mxu0
      %697 = vmatprep.mubr.f32.mxu0 %v290
      %698 = vmatmul.mubr.f32.gmra.mxu0 %v289
      %v699 = vpop.f32.mrf.mxu0
      %v700 = vadd.f32 0.0, %v699
      %v701 = vpop.f32.mrf.mxu0
      %702 = vmatprep.mubr.f32.mxu0 %v294
      %703 = vmatmul.mubr.f32.gmra.mxu0 %v293
      %v704 = vpop.f32.mrf.mxu0
      %v705 = vadd.f32 0.0, %v704
      %v706 = vpop.f32.mrf.mxu0
      %707 = vmatprep.mubr.f32.mxu0 %v298
      %708 = vmatmul.mubr.f32.gmra.mxu0 %v297
      %v709 = vpop.f32.mrf.mxu0
      %v710 = vadd.f32 0.0, %v709
      %v711 = vpop.f32.mrf.mxu0
      %712 = vmatprep.mubr.f32.mxu0 %v302
      %713 = vmatmul.mubr.f32.gmra.mxu0 %v301
      %v714 = vpop.f32.mrf.mxu0
      %v715 = vadd.f32 0.0, %v714
      %v716 = vpop.f32.mrf.mxu0
      %717 = vmatprep.mubr.f32.mxu0 %v306
      %718 = vmatmul.mubr.f32.gmra.mxu0 %v305
      %v719 = vpop.f32.mrf.mxu0
      %v720 = vadd.f32 0.0, %v719
      %v721 = vpop.f32.mrf.mxu0
      %722 = vmatprep.mubr.f32.mxu0 %v310
      %723 = vmatmul.mubr.f32.gmra.mxu0 %v309
      %v724 = vpop.f32.mrf.mxu0
      %v725 = vadd.f32 0.0, %v724
      %v726 = vpop.f32.mrf.mxu0
      %727 = vmatprep.mubr.f32.mxu0 %v314
      %728 = vmatmul.mubr.f32.gmra.mxu0 %v313
      %v729 = vpop.f32.mrf.mxu0
      %v730 = vadd.f32 0.0, %v729
      %v731 = vpop.f32.mrf.mxu0
      %732 = vmatprep.mubr.f32.mxu0 %v318
      %733 = vmatmul.mubr.f32.gmra.mxu0 %v317
      %v734 = vpop.f32.mrf.mxu0
      %v735 = vadd.f32 0.0, %v734
      %v736 = vpop.f32.mrf.mxu0
      %737 = vmatprep.mubr.f32.mxu0 %v322
      %738 = vmatmul.mubr.f32.gmra.mxu0 %v321
      %v739 = vpop.f32.mrf.mxu0
      %v740 = vadd.f32 0.0, %v739
      %v741 = vpop.f32.mrf.mxu0
      %742 = vmatprep.mubr.f32.mxu0 %v326
      %743 = vmatmul.mubr.f32.gmra.mxu0 %v325
      %v744 = vpop.f32.mrf.mxu0
      %v745 = vadd.f32 0.0, %v744
      %v746 = vpop.f32.mrf.mxu0
      %747 = vmatprep.mubr.f32.mxu0 %v330
      %748 = vmatmul.mubr.f32.gmra.mxu0 %v329
      %v749 = vpop.f32.mrf.mxu0
      %v750 = vadd.f32 0.0, %v749
      %v751 = vpop.f32.mrf.mxu0
      %752 = vdwg.mxu0
      %753 = vmatprep.subr.mxu0 0.0
      %754 = vmatpush1.msra.mxu0 %v446
      %755 = vmatprep.subr.mxu0 0.0
      %756 = vmatpush1.msra.mxu0 %v444
      %757 = vmatprep.subr.mxu0 0.0
      %758 = vmatpush1.msra.mxu0 %v442
      %759 = vmatprep.subr.mxu0 0.0
      %760 = vmatpush1.msra.mxu0 %v440
      %761 = vmatprep.subr.mxu0 0.0
      %762 = vmatpush1.msra.mxu0 %v438
      %763 = vmatprep.subr.mxu0 0.0
      %764 = vmatpush1.msra.mxu0 %v436
      %765 = vmatprep.subr.mxu0 0.0
      %766 = vmatpush1.msra.mxu0 %v434
      %767 = vmatprep.subr.mxu0 0.0
      %768 = vmatpush1.msra.mxu0 %v432
      %769 = vmatprep.subr.mxu0 0.0
      %770 = vmatpush1.msra.mxu0 %v430
      %771 = vmatprep.subr.mxu0 0.0
      %772 = vmatpush1.msra.mxu0 %v428
      %773 = vmatprep.subr.mxu0 0.0
      %774 = vmatpush1.msra.mxu0 %v426
      %775 = vmatprep.subr.mxu0 0.0
      %776 = vmatpush1.msra.mxu0 %v424
      %777 = vmatprep.subr.mxu0 0.0
      %778 = vmatpush1.msra.mxu0 %v410
      %779 = vmatprep.subr.mxu0 0.0
      %780 = vmatpush1.msra.mxu0 %v408
      %781 = vmatprep.subr.mxu0 0.0
      %782 = vmatpush1.msra.mxu0 %v406
      %783 = vmatprep.subr.mxu0 0.0
      %784 = vmatpush1.msra.mxu0 %v404
      %785 = vmatprep.subr.mxu0 0.0
      %786 = vmatpush2.msra.mxu0 0.0
      %787 = vmatprep.subr.mxu0 0.0
      %788 = vmatpush2.msra.mxu0 0.0
      %789 = vmatprep.subr.mxu0 0.0
      %790 = vmatpush2.msra.mxu0 0.0
      %791 = vmatprep.subr.mxu0 0.0
      %792 = vmatpush2.msra.mxu0 0.0
      %793 = vmatprep.subr.mxu0 0.0
      %794 = vmatpush2.msra.mxu0 %v482
      %795 = vmatprep.subr.mxu0 0.0
      %796 = vmatpush2.msra.mxu0 %v480
      %797 = vmatprep.subr.mxu0 0.0
      %798 = vmatpush2.msra.mxu0 %v478
      %799 = vmatprep.subr.mxu0 0.0
      %800 = vmatpush2.msra.mxu0 %v476
      %801 = vmatprep.subr.mxu0 0.0
      %802 = vmatpush2.msra.mxu0 %v474
      %803 = vmatprep.subr.mxu0 0.0
      %804 = vmatpush2.msra.mxu0 %v472
      %805 = vmatprep.subr.mxu0 0.0
      %806 = vmatpush2.msra.mxu0 %v470
      %807 = vmatprep.subr.mxu0 0.0
      %808 = vmatpush2.msra.mxu0 %v468
      %809 = vmatprep.subr.mxu0 0.0
      %810 = vmatpush2.msra.mxu0 %v466
      %811 = vmatprep.subr.mxu0 0.0
      %812 = vmatpush2.msra.mxu0 %v464
      %813 = vmatprep.subr.mxu0 0.0
      %814 = vmatpush2.msra.mxu0 %v462
      %815 = vmatprep.subr.mxu0 0.0
      %816 = vmatpush2.msra.mxu0 %v460
      %817 = vmatprep.mubr.f32.mxu0 %v497
      %818 = vmatmul.mubr.f32.gmra.mxu0 %v239
      %v819 = vpop.f32.mrf.mxu0
      %v820 = vadd.f32 %v635, %v819
      %v821 = vpop.f32.mrf.mxu0
      %822 = vmatprep.mubr.f32.mxu0 %v500
      %823 = vmatmul.mubr.f32.gmra.mxu0 %v243
      %v824 = vpop.f32.mrf.mxu0
      %v825 = vadd.f32 %v640, %v824
      %v826 = vpop.f32.mrf.mxu0
      %827 = vmatprep.mubr.f32.mxu0 %v503
      %828 = vmatmul.mubr.f32.gmra.mxu0 %v247
      %v829 = vpop.f32.mrf.mxu0
      %v830 = vadd.f32 %v645, %v829
      %v831 = vpop.f32.mrf.mxu0
      %832 = vmatprep.mubr.f32.mxu0 %v506
      %833 = vmatmul.mubr.f32.gmra.mxu0 %v251
      %v834 = vpop.f32.mrf.mxu0
      %v835 = vadd.f32 %v650, %v834
      %v836 = vpop.f32.mrf.mxu0
      %837 = vmatprep.mubr.f32.mxu0 %v509
      %838 = vmatmul.mubr.f32.gmra.mxu0 %v255
      %v839 = vpop.f32.mrf.mxu0
      %v840 = vadd.f32 %v655, %v839
      %v841 = vpop.f32.mrf.mxu0
      %842 = vmatprep.mubr.f32.mxu0 %v512
      %843 = vmatmul.mubr.f32.gmra.mxu0 %v259
      %v844 = vpop.f32.mrf.mxu0
      %v845 = vadd.f32 %v660, %v844
      %v846 = vpop.f32.mrf.mxu0
      %847 = vmatprep.mubr.f32.mxu0 %v515
      %848 = vmatmul.mubr.f32.gmra.mxu0 %v263
      %v849 = vpop.f32.mrf.mxu0
      %v850 = vadd.f32 %v665, %v849
      %v851 = vpop.f32.mrf.mxu0
      %852 = vmatprep.mubr.f32.mxu0 %v518
      %853 = vmatmul.mubr.f32.gmra.mxu0 %v267
      %v854 = vpop.f32.mrf.mxu0
      %v855 = vadd.f32 %v670, %v854
      %v856 = vpop.f32.mrf.mxu0
      %857 = vmatprep.mubr.f32.mxu0 %v521
      %858 = vmatmul.mubr.f32.gmra.mxu0 %v271
      %v859 = vpop.f32.mrf.mxu0
      %v860 = vadd.f32 %v675, %v859
      %v861 = vpop.f32.mrf.mxu0
      %862 = vmatprep.mubr.f32.mxu0 %v524
      %863 = vmatmul.mubr.f32.gmra.mxu0 %v275
      %v864 = vpop.f32.mrf.mxu0
      %v865 = vadd.f32 %v680, %v864
      %v866 = vpop.f32.mrf.mxu0
      %867 = vmatprep.mubr.f32.mxu0 %v527
      %868 = vmatmul.mubr.f32.gmra.mxu0 %v279
      %v869 = vpop.f32.mrf.mxu0
      %v870 = vadd.f32 %v685, %v869
      %v871 = vpop.f32.mrf.mxu0
      %872 = vmatprep.mubr.f32.mxu0 %v530
      %873 = vmatmul.mubr.f32.gmra.mxu0 %v283
      %v874 = vpop.f32.mrf.mxu0
      %v875 = vadd.f32 %v690, %v874
      %v876 = vpop.f32.mrf.mxu0
      %877 = vmatprep.mubr.f32.mxu0 %v533
      %878 = vmatmul.mubr.f32.gmra.mxu0 %v287
      %v879 = vpop.f32.mrf.mxu0
      %v880 = vadd.f32 %v695, %v879
      %v881 = vpop.f32.mrf.mxu0
      %882 = vmatprep.mubr.f32.mxu0 %v536
      %883 = vmatmul.mubr.f32.gmra.mxu0 %v291
      %v884 = vpop.f32.mrf.mxu0
      %v885 = vadd.f32 %v700, %v884
      %v886 = vpop.f32.mrf.mxu0
      %887 = vmatprep.mubr.f32.mxu0 %v539
      %888 = vmatmul.mubr.f32.gmra.mxu0 %v295
      %v889 = vpop.f32.mrf.mxu0
      %v890 = vadd.f32 %v705, %v889
      %v891 = vpop.f32.mrf.mxu0
      %892 = vmatprep.mubr.f32.mxu0 %v542
      %893 = vmatmul.mubr.f32.gmra.mxu0 %v299
      %v894 = vpop.f32.mrf.mxu0
      %v895 = vadd.f32 %v710, %v894
      %v896 = vpop.f32.mrf.mxu0
      %897 = vmatprep.mubr.f32.mxu0 %v545
      %898 = vmatmul.mubr.f32.gmra.mxu0 %v303
      %v899 = vpop.f32.mrf.mxu0
      %v900 = vadd.f32 %v715, %v899
      %v901 = vpop.f32.mrf.mxu0
      %902 = vmatprep.mubr.f32.mxu0 %v548
      %903 = vmatmul.mubr.f32.gmra.mxu0 %v307
      %v904 = vpop.f32.mrf.mxu0
      %v905 = vadd.f32 %v720, %v904
      %v906 = vpop.f32.mrf.mxu0
      %907 = vmatprep.mubr.f32.mxu0 %v551
      %908 = vmatmul.mubr.f32.gmra.mxu0 %v311
      %v909 = vpop.f32.mrf.mxu0
      %v910 = vadd.f32 %v725, %v909
      %v911 = vpop.f32.mrf.mxu0
      %912 = vmatprep.mubr.f32.mxu0 %v554
      %913 = vmatmul.mubr.f32.gmra.mxu0 %v315
      %v914 = vpop.f32.mrf.mxu0
      %v915 = vadd.f32 %v730, %v914
      %v916 = vpop.f32.mrf.mxu0
      %917 = vmatprep.mubr.f32.mxu0 %v557
      %918 = vmatmul.mubr.f32.gmra.mxu0 %v319
      %v919 = vpop.f32.mrf.mxu0
      %v920 = vadd.f32 %v735, %v919
      %v921 = vpop.f32.mrf.mxu0
      %922 = vmatprep.mubr.f32.mxu0 %v560
      %923 = vmatmul.mubr.f32.gmra.mxu0 %v323
      %v924 = vpop.f32.mrf.mxu0
      %v925 = vadd.f32 %v740, %v924
      %v926 = vpop.f32.mrf.mxu0
      %927 = vmatprep.mubr.f32.mxu0 %v563
      %928 = vmatmul.mubr.f32.gmra.mxu0 %v327
      %v929 = vpop.f32.mrf.mxu0
      %v930 = vadd.f32 %v745, %v929
      %v931 = vpop.f32.mrf.mxu0
      %932 = vmatprep.mubr.f32.mxu0 %v566
      %933 = vmatmul.mubr.f32.gmra.mxu0 %v331
      %v934 = vpop.f32.mrf.mxu0
      %v935 = vadd.f32 %v750, %v934
      %v936 = vpop.f32.mrf.mxu0
      %937 = vdwg.mxu0
      %v944 = vlaneseq
      %v945 = vshrl.u32 %v944, 7
      %v946 = vsub.s32 0, %v945
      %v947 = vrot.slane %v333, %v946
      %v948 = vlaneseq
      %v949 = vshrl.u32 %v948, 7
      %v950 = vsub.s32 0, %v949
      %v951 = vrot.slane %v334, %v950
      %v952 = vlaneseq
      %v953 = vshrl.u32 %v952, 7
      %v954 = vsub.s32 0, %v953
      %v955 = vrot.slane %v335, %v954
      %v956 = vlaneseq
      %v957 = vshrl.u32 %v956, 7
      %v958 = vsub.s32 0, %v957
      %v959 = vrot.slane %v336, %v958
      %v960 = vlaneseq
      %v961 = vshrl.u32 %v960, 7
      %v962 = vsub.s32 0, %v961
      %v963 = vrot.slane %v337, %v962
      %v964 = vlaneseq
      %v965 = vshrl.u32 %v964, 7
      %v966 = vsub.s32 0, %v965
      %v967 = vrot.slane %v338, %v966
      %968 = vset.pattern.permute.xlu0 0
      %969 = vperm.xlu0 %968, %v947
      %v970 = vpop.permute.xlu0 %969
      %972 = vset.pattern.permute.xlu0 0
      %973 = vperm.xlu0 %972, %v951
      %v974 = vpop.permute.xlu0 %973
      %976 = vset.pattern.permute.xlu0 0
      %977 = vperm.xlu0 %976, %v955
      %v978 = vpop.permute.xlu0 %977
      %980 = vset.pattern.permute.xlu0 0
      %981 = vperm.xlu0 %980, %v959
      %v982 = vpop.permute.xlu0 %981
      %984 = vset.pattern.permute.xlu0 0
      %985 = vperm.xlu0 %984, %v963
      %v986 = vpop.permute.xlu0 %985
      %988 = vset.pattern.permute.xlu0 0
      %989 = vperm.xlu0 %988, %v967
      %v990 = vpop.permute.xlu0 %989
      %v992 = vadd.f32 %v820, %v970
      %v993 = vadd.f32 %v825, %v970
      %v994 = vadd.f32 %v830, %v970
      %v995 = vadd.f32 %v835, %v970
      %v996 = vadd.f32 %v840, %v974
      %v997 = vadd.f32 %v845, %v974
      %v998 = vadd.f32 %v850, %v974
      %v999 = vadd.f32 %v855, %v974
      %v1000 = vadd.f32 %v860, %v978
      %v1001 = vadd.f32 %v865, %v978
      %v1002 = vadd.f32 %v870, %v978
      %v1003 = vadd.f32 %v875, %v978
      %v1004 = vadd.f32 %v880, %v982
      %v1005 = vadd.f32 %v885, %v982
      %v1006 = vadd.f32 %v890, %v982
      %v1007 = vadd.f32 %v895, %v982
      %v1008 = vadd.f32 %v900, %v986
      %v1009 = vadd.f32 %v905, %v986
      %v1010 = vadd.f32 %v910, %v986
      %v1011 = vadd.f32 %v915, %v986
      %v1012 = vadd.f32 %v920, %v990
      %v1013 = vadd.f32 %v925, %v990
      %v1014 = vadd.f32 %v930, %v990
      %v1015 = vadd.f32 %v935, %v990
      %v1016 = vmax.f32 %v992, 0.0
      %v1017 = vmax.f32 %v993, 0.0
      %v1018 = vmax.f32 %v994, 0.0
      %v1019 = vmax.f32 %v995, 0.0
      %v1020 = vmax.f32 %v996, 0.0
      %v1021 = vmax.f32 %v997, 0.0
      %v1022 = vmax.f32 %v998, 0.0
      %v1023 = vmax.f32 %v999, 0.0
      %v1024 = vmax.f32 %v1000, 0.0
      %v1025 = vmax.f32 %v1001, 0.0
      %v1026 = vmax.f32 %v1002, 0.0
      %v1027 = vmax.f32 %v1003, 0.0
      %v1028 = vmax.f32 %v1004, 0.0
      %v1029 = vmax.f32 %v1005, 0.0
      %v1030 = vmax.f32 %v1006, 0.0
      %v1031 = vmax.f32 %v1007, 0.0
      %v1032 = vmax.f32 %v1008, 0.0
      %v1033 = vmax.f32 %v1009, 0.0
      %v1034 = vmax.f32 %v1010, 0.0
      %v1035 = vmax.f32 %v1011, 0.0
      %v1036 = vmax.f32 %v1012, 0.0
      %v1037 = vmax.f32 %v1013, 0.0
      %v1038 = vmax.f32 %v1014, 0.0
      %v1039 = vmax.f32 %v1015, 0.0
      %vm1040 = vcmask 228352
      %1041 = vst.msk [vmem:[#allocation2] sm:$0xff] %vm1040, 0.0
      %1042 = vst.msk [vmem:[#allocation2 + $0x8] sm:$0xff] %vm1040, 0.0
      %1043 = vst.msk [vmem:[#allocation2 + $0x10] sm:$0xff] %vm1040, 0.0
      %1044 = vst.msk [vmem:[#allocation2 + $0x18] sm:$0xff] %vm1040, 0.0
      %1045 = vst.msk [vmem:[#allocation2 + $0x20] sm:$0xff] %vm1040, 0.0
      %1046 = vst.msk [vmem:[#allocation2 + $0x28] sm:$0xff] %vm1040, 0.0
      %1047 = vst.msk [vmem:[#allocation2 + $0x30] sm:$0xff] %vm1040, 0.0
      %1048 = vst.msk [vmem:[#allocation2 + $0x38] sm:$0xff] %vm1040, 0.0
      %1049 = vst.msk [vmem:[#allocation2 + $0x40] sm:$0xff] %vm1040, 0.0
      %1050 = vst.msk [vmem:[#allocation2 + $0x48] sm:$0xff] %vm1040, 0.0
      %1051 = vst.msk [vmem:[#allocation2 + $0x50] sm:$0xff] %vm1040, 0.0
      %1052 = vst.msk [vmem:[#allocation2 + $0x58] sm:$0xff] %vm1040, 0.0
      %v1059 = vrot.slane %v1016, 1
      %v1060 = vrot.slane %v1020, 1
      %v1061 = vrot.slane %v1024, 1
      %v1062 = vrot.slane %v1028, 1
      %v1063 = vrot.slane %v1032, 1
      %v1064 = vrot.slane %v1036, 1
      %v1071 = vmax.f32 %v1016, %v1059
      %v1072 = vmax.f32 %v1020, %v1060
      %v1073 = vmax.f32 %v1024, %v1061
      %v1074 = vmax.f32 %v1028, %v1062
      %v1075 = vmax.f32 %v1032, %v1063
      %v1076 = vmax.f32 %v1036, %v1064
      %vm1077 = vcmask 221184
      %1078 = vst.msk [vmem:[#allocation2] sm:$0x1] %vm1077, %v1071
      %1079 = vst.msk [vmem:[#allocation2 + $0x10] sm:$0x1] %vm1077, %v1072
      %1080 = vst.msk [vmem:[#allocation2 + $0x20] sm:$0x1] %vm1077, %v1073
      %1081 = vst.msk [vmem:[#allocation2 + $0x30] sm:$0x1] %vm1077, %v1074
      %1082 = vst.msk [vmem:[#allocation2 + $0x40] sm:$0x1] %vm1077, %v1075
      %1083 = vst.msk [vmem:[#allocation2 + $0x50] sm:$0x1] %vm1077, %v1076
      %vm1084 = vcmask 223234
      %1085 = vst.msk [vmem:[#allocation2 - $0x1] sm:$0x4] %vm1084, %v1071
      %1086 = vst.msk [vmem:[#allocation2 + $0xf] sm:$0x4] %vm1084, %v1072
      %1087 = vst.msk [vmem:[#allocation2 + $0x1f] sm:$0x4] %vm1084, %v1073
      %1088 = vst.msk [vmem:[#allocation2 + $0x2f] sm:$0x4] %vm1084, %v1074
      %1089 = vst.msk [vmem:[#allocation2 + $0x3f] sm:$0x4] %vm1084, %v1075
      %1090 = vst.msk [vmem:[#allocation2 + $0x4f] sm:$0x4] %vm1084, %v1076
      %vm1091 = vcmask 225284
      %1092 = vst.msk [vmem:[#allocation2 - $0x2] sm:$0x10] %vm1091, %v1071
      %1093 = vst.msk [vmem:[#allocation2 + $0xe] sm:$0x10] %vm1091, %v1072
      %1094 = vst.msk [vmem:[#allocation2 + $0x1e] sm:$0x10] %vm1091, %v1073
      %1095 = vst.msk [vmem:[#allocation2 + $0x2e] sm:$0x10] %vm1091, %v1074
      %1096 = vst.msk [vmem:[#allocation2 + $0x3e] sm:$0x10] %vm1091, %v1075
      %1097 = vst.msk [vmem:[#allocation2 + $0x4e] sm:$0x10] %vm1091, %v1076
      %vm1098 = vcmask 227334
      %1099 = vst.msk [vmem:[#allocation2 - $0x3] sm:$0x40] %vm1098, %v1071
      %1100 = vst.msk [vmem:[#allocation2 + $0xd] sm:$0x40] %vm1098, %v1072
      %1101 = vst.msk [vmem:[#allocation2 + $0x1d] sm:$0x40] %vm1098, %v1073
      %1102 = vst.msk [vmem:[#allocation2 + $0x2d] sm:$0x40] %vm1098, %v1074
      %1103 = vst.msk [vmem:[#allocation2 + $0x3d] sm:$0x40] %vm1098, %v1075
      %1104 = vst.msk [vmem:[#allocation2 + $0x4d] sm:$0x40] %vm1098, %v1076
      %v1111 = vrot.slane %v1017, 1
      %v1112 = vrot.slane %v1021, 1
      %v1113 = vrot.slane %v1025, 1
      %v1114 = vrot.slane %v1029, 1
      %v1115 = vrot.slane %v1033, 1
      %v1116 = vrot.slane %v1037, 1
      %v1123 = vmax.f32 %v1017, %v1111
      %v1124 = vmax.f32 %v1021, %v1112
      %v1125 = vmax.f32 %v1025, %v1113
      %v1126 = vmax.f32 %v1029, %v1114
      %v1127 = vmax.f32 %v1033, %v1115
      %v1128 = vmax.f32 %v1037, %v1116
      %1129 = vst.msk [vmem:[#allocation2 + $0x4] sm:$0x1] %vm1077, %v1123
      %1130 = vst.msk [vmem:[#allocation2 + $0x14] sm:$0x1] %vm1077, %v1124
      %1131 = vst.msk [vmem:[#allocation2 + $0x24] sm:$0x1] %vm1077, %v1125
      %1132 = vst.msk [vmem:[#allocation2 + $0x34] sm:$0x1] %vm1077, %v1126
      %1133 = vst.msk [vmem:[#allocation2 + $0x44] sm:$0x1] %vm1077, %v1127
      %1134 = vst.msk [vmem:[#allocation2 + $0x54] sm:$0x1] %vm1077, %v1128
      %1135 = vst.msk [vmem:[#allocation2 + $0x3] sm:$0x4] %vm1084, %v1123
      %1136 = vst.msk [vmem:[#allocation2 + $0x13] sm:$0x4] %vm1084, %v1124
      %1137 = vst.msk [vmem:[#allocation2 + $0x23] sm:$0x4] %vm1084, %v1125
      %1138 = vst.msk [vmem:[#allocation2 + $0x33] sm:$0x4] %vm1084, %v1126
      %1139 = vst.msk [vmem:[#allocation2 + $0x43] sm:$0x4] %vm1084, %v1127
      %1140 = vst.msk [vmem:[#allocation2 + $0x53] sm:$0x4] %vm1084, %v1128
      %1141 = vst.msk [vmem:[#allocation2 + $0x2] sm:$0x10] %vm1091, %v1123
      %1142 = vst.msk [vmem:[#allocation2 + $0x12] sm:$0x10] %vm1091, %v1124
      %1143 = vst.msk [vmem:[#allocation2 + $0x22] sm:$0x10] %vm1091, %v1125
      %1144 = vst.msk [vmem:[#allocation2 + $0x32] sm:$0x10] %vm1091, %v1126
      %1145 = vst.msk [vmem:[#allocation2 + $0x42] sm:$0x10] %vm1091, %v1127
      %1146 = vst.msk [vmem:[#allocation2 + $0x52] sm:$0x10] %vm1091, %v1128
      %1147 = vst.msk [vmem:[#allocation2 + $0x1] sm:$0x40] %vm1098, %v1123
      %1148 = vst.msk [vmem:[#allocation2 + $0x11] sm:$0x40] %vm1098, %v1124
      %1149 = vst.msk [vmem:[#allocation2 + $0x21] sm:$0x40] %vm1098, %v1125
      %1150 = vst.msk [vmem:[#allocation2 + $0x31] sm:$0x40] %vm1098, %v1126
      %1151 = vst.msk [vmem:[#allocation2 + $0x41] sm:$0x40] %vm1098, %v1127
      %1152 = vst.msk [vmem:[#allocation2 + $0x51] sm:$0x40] %vm1098, %v1128
      %v1159 = vrot.slane %v1018, 1
      %v1160 = vrot.slane %v1022, 1
      %v1161 = vrot.slane %v1026, 1
      %v1162 = vrot.slane %v1030, 1
      %v1163 = vrot.slane %v1034, 1
      %v1164 = vrot.slane %v1038, 1
      %v1171 = vmax.f32 %v1018, %v1159
      %v1172 = vmax.f32 %v1022, %v1160
      %v1173 = vmax.f32 %v1026, %v1161
      %v1174 = vmax.f32 %v1030, %v1162
      %v1175 = vmax.f32 %v1034, %v1163
      %v1176 = vmax.f32 %v1038, %v1164
      %1177 = vst.msk [vmem:[#allocation2 + $0x8] sm:$0x1] %vm1077, %v1171
      %1178 = vst.msk [vmem:[#allocation2 + $0x18] sm:$0x1] %vm1077, %v1172
      %1179 = vst.msk [vmem:[#allocation2 + $0x28] sm:$0x1] %vm1077, %v1173
      %1180 = vst.msk [vmem:[#allocation2 + $0x38] sm:$0x1] %vm1077, %v1174
      %1181 = vst.msk [vmem:[#allocation2 + $0x48] sm:$0x1] %vm1077, %v1175
      %1182 = vst.msk [vmem:[#allocation2 + $0x58] sm:$0x1] %vm1077, %v1176
      %1183 = vst.msk [vmem:[#allocation2 + $0x7] sm:$0x4] %vm1084, %v1171
      %1184 = vst.msk [vmem:[#allocation2 + $0x17] sm:$0x4] %vm1084, %v1172
      %1185 = vst.msk [vmem:[#allocation2 + $0x27] sm:$0x4] %vm1084, %v1173
      %1186 = vst.msk [vmem:[#allocation2 + $0x37] sm:$0x4] %vm1084, %v1174
      %1187 = vst.msk [vmem:[#allocation2 + $0x47] sm:$0x4] %vm1084, %v1175
      %1188 = vst.msk [vmem:[#allocation2 + $0x57] sm:$0x4] %vm1084, %v1176
      %1189 = vst.msk [vmem:[#allocation2 + $0x6] sm:$0x10] %vm1091, %v1171
      %1190 = vst.msk [vmem:[#allocation2 + $0x16] sm:$0x10] %vm1091, %v1172
      %1191 = vst.msk [vmem:[#allocation2 + $0x26] sm:$0x10] %vm1091, %v1173
      %1192 = vst.msk [vmem:[#allocation2 + $0x36] sm:$0x10] %vm1091, %v1174
      %1193 = vst.msk [vmem:[#allocation2 + $0x46] sm:$0x10] %vm1091, %v1175
      %1194 = vst.msk [vmem:[#allocation2 + $0x56] sm:$0x10] %vm1091, %v1176
      %1195 = vst.msk [vmem:[#allocation2 + $0x5] sm:$0x40] %vm1098, %v1171
      %1196 = vst.msk [vmem:[#allocation2 + $0x15] sm:$0x40] %vm1098, %v1172
      %1197 = vst.msk [vmem:[#allocation2 + $0x25] sm:$0x40] %vm1098, %v1173
      %1198 = vst.msk [vmem:[#allocation2 + $0x35] sm:$0x40] %vm1098, %v1174
      %1199 = vst.msk [vmem:[#allocation2 + $0x45] sm:$0x40] %vm1098, %v1175
      %1200 = vst.msk [vmem:[#allocation2 + $0x55] sm:$0x40] %vm1098, %v1176
      %v1207 = vrot.slane %v1019, 1
      %v1208 = vrot.slane %v1023, 1
      %v1209 = vrot.slane %v1027, 1
      %v1210 = vrot.slane %v1031, 1
      %v1211 = vrot.slane %v1035, 1
      %v1212 = vrot.slane %v1039, 1
      %v1219 = vmax.f32 %v1019, %v1207
      %v1220 = vmax.f32 %v1023, %v1208
      %v1221 = vmax.f32 %v1027, %v1209
      %v1222 = vmax.f32 %v1031, %v1210
      %v1223 = vmax.f32 %v1035, %v1211
      %v1224 = vmax.f32 %v1039, %v1212
      %1225 = vst.msk [vmem:[#allocation2 + $0xc] sm:$0x1] %vm1077, %v1219
      %1226 = vst.msk [vmem:[#allocation2 + $0x1c] sm:$0x1] %vm1077, %v1220
      %1227 = vst.msk [vmem:[#allocation2 + $0x2c] sm:$0x1] %vm1077, %v1221
      %1228 = vst.msk [vmem:[#allocation2 + $0x3c] sm:$0x1] %vm1077, %v1222
      %1229 = vst.msk [vmem:[#allocation2 + $0x4c] sm:$0x1] %vm1077, %v1223
      %1230 = vst.msk [vmem:[#allocation2 + $0x5c] sm:$0x1] %vm1077, %v1224
      %1231 = vst.msk [vmem:[#allocation2 + $0xb] sm:$0x4] %vm1084, %v1219
      %1232 = vst.msk [vmem:[#allocation2 + $0x1b] sm:$0x4] %vm1084, %v1220
      %1233 = vst.msk [vmem:[#allocation2 + $0x2b] sm:$0x4] %vm1084, %v1221
      %1234 = vst.msk [vmem:[#allocation2 + $0x3b] sm:$0x4] %vm1084, %v1222
      %1235 = vst.msk [vmem:[#allocation2 + $0x4b] sm:$0x4] %vm1084, %v1223
      %1236 = vst.msk [vmem:[#allocation2 + $0x5b] sm:$0x4] %vm1084, %v1224
      %v1237 = vld [vmem:[#allocation2] sm:$0xff]
      %v1238 = vld [vmem:[#allocation2 + $0x8] sm:$0xff]
      %v1239 = vld [vmem:[#allocation2 + $0x10] sm:$0xff]
      %v1240 = vld [vmem:[#allocation2 + $0x18] sm:$0xff]
      %v1241 = vld [vmem:[#allocation2 + $0x20] sm:$0xff]
      %v1242 = vld [vmem:[#allocation2 + $0x28] sm:$0xff]
      %v1243 = vld [vmem:[#allocation2 + $0x30] sm:$0xff]
      %v1244 = vld [vmem:[#allocation2 + $0x38] sm:$0xff]
      %v1245 = vld [vmem:[#allocation2 + $0x40] sm:$0xff]
      %v1246 = vld [vmem:[#allocation2 + $0x48] sm:$0xff]
      %v1247 = vld [vmem:[#allocation2 + $0x50] sm:$0xff]
      %v1248 = vld [vmem:[#allocation2 + $0x58] sm:$0xff]
      %1261 = vrot.lane.b32.xlu0 %v1237, 127
      %v1262 = vpop.permute.xlu0 %1261
      %1263 = vrot.lane.b32.xlu0 %v1238, 127
      %v1264 = vpop.permute.xlu0 %1263
      %1265 = vrot.lane.b32.xlu0 %v1239, 127
      %v1266 = vpop.permute.xlu0 %1265
      %1267 = vrot.lane.b32.xlu0 %v1240, 127
      %v1268 = vpop.permute.xlu0 %1267
      %1269 = vrot.lane.b32.xlu0 %v1241, 127
      %v1270 = vpop.permute.xlu0 %1269
      %1271 = vrot.lane.b32.xlu0 %v1242, 127
      %v1272 = vpop.permute.xlu0 %1271
      %1273 = vrot.lane.b32.xlu0 %v1243, 127
      %v1274 = vpop.permute.xlu0 %1273
      %1275 = vrot.lane.b32.xlu0 %v1244, 127
      %v1276 = vpop.permute.xlu0 %1275
      %1277 = vrot.lane.b32.xlu0 %v1245, 127
      %v1278 = vpop.permute.xlu0 %1277
      %1279 = vrot.lane.b32.xlu0 %v1246, 127
      %v1280 = vpop.permute.xlu0 %1279
      %1281 = vrot.lane.b32.xlu0 %v1247, 127
      %v1282 = vpop.permute.xlu0 %1281
      %1283 = vrot.lane.b32.xlu0 %v1248, 127
      %v1284 = vpop.permute.xlu0 %1283
      %v1297 = vmax.f32 %v1237, %v1262
      %v1298 = vmax.f32 %v1238, %v1264
      %v1299 = vmax.f32 %v1239, %v1266
      %v1300 = vmax.f32 %v1240, %v1268
      %v1301 = vmax.f32 %v1241, %v1270
      %v1302 = vmax.f32 %v1242, %v1272
      %v1303 = vmax.f32 %v1243, %v1274
      %v1304 = vmax.f32 %v1244, %v1276
      %v1305 = vmax.f32 %v1245, %v1278
      %v1306 = vmax.f32 %v1246, %v1280
      %v1307 = vmax.f32 %v1247, %v1282
      %v1308 = vmax.f32 %v1248, %v1284
      %vm1309 = vcmask 7168
      %1310 = vst.msk [vmem:[#allocation3] sm:$0xff] %vm1309, %v1297
      %1311 = vst.msk [vmem:[#allocation3 + $0x8] sm:$0xff] %vm1309, %v1298
      %1312 = vst.msk [vmem:[#allocation3 + $0x10] sm:$0xff] %vm1309, %v1299
      %1313 = vst.msk [vmem:[#allocation3 + $0x18] sm:$0xff] %vm1309, %v1300
      %1314 = vst.msk [vmem:[#allocation3 + $0x20] sm:$0xff] %vm1309, %v1301
      %1315 = vst.msk [vmem:[#allocation3 + $0x28] sm:$0xff] %vm1309, %v1302
      %1316 = vst.msk [vmem:[#allocation3 + $0x30] sm:$0xff] %vm1309, %v1303
      %1317 = vst.msk [vmem:[#allocation3 + $0x38] sm:$0xff] %vm1309, %v1304
      %1318 = vst.msk [vmem:[#allocation3 + $0x40] sm:$0xff] %vm1309, %v1305
      %1319 = vst.msk [vmem:[#allocation3 + $0x48] sm:$0xff] %vm1309, %v1306
      %1320 = vst.msk [vmem:[#allocation3 + $0x50] sm:$0xff] %vm1309, %v1307
      %1321 = vst.msk [vmem:[#allocation3 + $0x58] sm:$0xff] %vm1309, %v1308
      %1334 = vrot.lane.b32.xlu0 %v1297, 127
      %v1335 = vpop.permute.xlu0 %1334
      %1336 = vrot.lane.b32.xlu0 %v1298, 127
      %v1337 = vpop.permute.xlu0 %1336
      %1338 = vrot.lane.b32.xlu0 %v1299, 127
      %v1339 = vpop.permute.xlu0 %1338
      %1340 = vrot.lane.b32.xlu0 %v1300, 127
      %v1341 = vpop.permute.xlu0 %1340
      %1342 = vrot.lane.b32.xlu0 %v1301, 127
      %v1343 = vpop.permute.xlu0 %1342
      %1344 = vrot.lane.b32.xlu0 %v1302, 127
      %v1345 = vpop.permute.xlu0 %1344
      %1346 = vrot.lane.b32.xlu0 %v1303, 127
      %v1347 = vpop.permute.xlu0 %1346
      %1348 = vrot.lane.b32.xlu0 %v1304, 127
      %v1349 = vpop.permute.xlu0 %1348
      %1350 = vrot.lane.b32.xlu0 %v1305, 127
      %v1351 = vpop.permute.xlu0 %1350
      %1352 = vrot.lane.b32.xlu0 %v1306, 127
      %v1353 = vpop.permute.xlu0 %1352
      %1354 = vrot.lane.b32.xlu0 %v1307, 127
      %v1355 = vpop.permute.xlu0 %1354
      %1356 = vrot.lane.b32.xlu0 %v1308, 127
      %v1357 = vpop.permute.xlu0 %1356
      %vm1370 = vcmask 15368
      %1371 = vst.msk [vmem:[#allocation3] sm:$0xff] %vm1370, %v1335
      %1372 = vst.msk [vmem:[#allocation3 + $0x8] sm:$0xff] %vm1370, %v1337
      %1373 = vst.msk [vmem:[#allocation3 + $0x10] sm:$0xff] %vm1370, %v1339
      %1374 = vst.msk [vmem:[#allocation3 + $0x18] sm:$0xff] %vm1370, %v1341
      %1375 = vst.msk [vmem:[#allocation3 + $0x20] sm:$0xff] %vm1370, %v1343
      %1376 = vst.msk [vmem:[#allocation3 + $0x28] sm:$0xff] %vm1370, %v1345
      %1377 = vst.msk [vmem:[#allocation3 + $0x30] sm:$0xff] %vm1370, %v1347
      %1378 = vst.msk [vmem:[#allocation3 + $0x38] sm:$0xff] %vm1370, %v1349
      %1379 = vst.msk [vmem:[#allocation3 + $0x40] sm:$0xff] %vm1370, %v1351
      %1380 = vst.msk [vmem:[#allocation3 + $0x48] sm:$0xff] %vm1370, %v1353
      %1381 = vst.msk [vmem:[#allocation3 + $0x50] sm:$0xff] %vm1370, %v1355
      %1382 = vst.msk [vmem:[#allocation3 + $0x58] sm:$0xff] %vm1370, %v1357
      %1383 = vrot.lane.b32.xlu0 %v1297, 126
      %v1384 = vpop.permute.xlu0 %1383
      %1385 = vrot.lane.b32.xlu0 %v1298, 126
      %v1386 = vpop.permute.xlu0 %1385
      %1387 = vrot.lane.b32.xlu0 %v1299, 126
      %v1388 = vpop.permute.xlu0 %1387
      %1389 = vrot.lane.b32.xlu0 %v1300, 126
      %v1390 = vpop.permute.xlu0 %1389
      %1391 = vrot.lane.b32.xlu0 %v1301, 126
      %v1392 = vpop.permute.xlu0 %1391
      %1393 = vrot.lane.b32.xlu0 %v1302, 126
      %v1394 = vpop.permute.xlu0 %1393
      %1395 = vrot.lane.b32.xlu0 %v1303, 126
      %v1396 = vpop.permute.xlu0 %1395
      %1397 = vrot.lane.b32.xlu0 %v1304, 126
      %v1398 = vpop.permute.xlu0 %1397
      %1399 = vrot.lane.b32.xlu0 %v1305, 126
      %v1400 = vpop.permute.xlu0 %1399
      %1401 = vrot.lane.b32.xlu0 %v1306, 126
      %v1402 = vpop.permute.xlu0 %1401
      %1403 = vrot.lane.b32.xlu0 %v1307, 126
      %v1404 = vpop.permute.xlu0 %1403
      %1405 = vrot.lane.b32.xlu0 %v1308, 126
      %v1406 = vpop.permute.xlu0 %1405
      %vm1419 = vcmask 23568
      %1420 = vst.msk [vmem:[#allocation3] sm:$0xff] %vm1419, %v1384
      %1421 = vst.msk [vmem:[#allocation3 + $0x8] sm:$0xff] %vm1419, %v1386
      %1422 = vst.msk [vmem:[#allocation3 + $0x10] sm:$0xff] %vm1419, %v1388
      %1423 = vst.msk [vmem:[#allocation3 + $0x18] sm:$0xff] %vm1419, %v1390
      %1424 = vst.msk [vmem:[#allocation3 + $0x20] sm:$0xff] %vm1419, %v1392
      %1425 = vst.msk [vmem:[#allocation3 + $0x28] sm:$0xff] %vm1419, %v1394
      %1426 = vst.msk [vmem:[#allocation3 + $0x30] sm:$0xff] %vm1419, %v1396
      %1427 = vst.msk [vmem:[#allocation3 + $0x38] sm:$0xff] %vm1419, %v1398
      %1428 = vst.msk [vmem:[#allocation3 + $0x40] sm:$0xff] %vm1419, %v1400
      %1429 = vst.msk [vmem:[#allocation3 + $0x48] sm:$0xff] %vm1419, %v1402
      %1430 = vst.msk [vmem:[#allocation3 + $0x50] sm:$0xff] %vm1419, %v1404
      %1431 = vst.msk [vmem:[#allocation3 + $0x58] sm:$0xff] %vm1419, %v1406
      %1432 = vrot.lane.b32.xlu0 %v1297, 125
      %v1433 = vpop.permute.xlu0 %1432
      %1434 = vrot.lane.b32.xlu0 %v1298, 125
      %v1435 = vpop.permute.xlu0 %1434
      %1436 = vrot.lane.b32.xlu0 %v1299, 125
      %v1437 = vpop.permute.xlu0 %1436
      %1438 = vrot.lane.b32.xlu0 %v1300, 125
      %v1439 = vpop.permute.xlu0 %1438
      %1440 = vrot.lane.b32.xlu0 %v1301, 125
      %v1441 = vpop.permute.xlu0 %1440
      %1442 = vrot.lane.b32.xlu0 %v1302, 125
      %v1443 = vpop.permute.xlu0 %1442
      %1444 = vrot.lane.b32.xlu0 %v1303, 125
      %v1445 = vpop.permute.xlu0 %1444
      %1446 = vrot.lane.b32.xlu0 %v1304, 125
      %v1447 = vpop.permute.xlu0 %1446
      %1448 = vrot.lane.b32.xlu0 %v1305, 125
      %v1449 = vpop.permute.xlu0 %1448
      %1450 = vrot.lane.b32.xlu0 %v1306, 125
      %v1451 = vpop.permute.xlu0 %1450
      %1452 = vrot.lane.b32.xlu0 %v1307, 125
      %v1453 = vpop.permute.xlu0 %1452
      %1454 = vrot.lane.b32.xlu0 %v1308, 125
      %v1455 = vpop.permute.xlu0 %1454
      %vm1468 = vcmask 31768
      %1469 = vst.msk [vmem:[#allocation3] sm:$0xff] %vm1468, %v1433
      %1470 = vst.msk [vmem:[#allocation3 + $0x8] sm:$0xff] %vm1468, %v1435
      %1471 = vst.msk [vmem:[#allocation3 + $0x10] sm:$0xff] %vm1468, %v1437
      %1472 = vst.msk [vmem:[#allocation3 + $0x18] sm:$0xff] %vm1468, %v1439
      %1473 = vst.msk [vmem:[#allocation3 + $0x20] sm:$0xff] %vm1468, %v1441
      %1474 = vst.msk [vmem:[#allocation3 + $0x28] sm:$0xff] %vm1468, %v1443
      %1475 = vst.msk [vmem:[#allocation3 + $0x30] sm:$0xff] %vm1468, %v1445
      %1476 = vst.msk [vmem:[#allocation3 + $0x38] sm:$0xff] %vm1468, %v1447
      %1477 = vst.msk [vmem:[#allocation3 + $0x40] sm:$0xff] %vm1468, %v1449
      %1478 = vst.msk [vmem:[#allocation3 + $0x48] sm:$0xff] %vm1468, %v1451
      %1479 = vst.msk [vmem:[#allocation3 + $0x50] sm:$0xff] %vm1468, %v1453
      %1480 = vst.msk [vmem:[#allocation3 + $0x58] sm:$0xff] %vm1468, %v1455
      %1481 = vrot.lane.b32.xlu0 %v1297, 124
      %v1482 = vpop.permute.xlu0 %1481
      %1483 = vrot.lane.b32.xlu0 %v1298, 124
      %v1484 = vpop.permute.xlu0 %1483
      %1485 = vrot.lane.b32.xlu0 %v1299, 124
      %v1486 = vpop.permute.xlu0 %1485
      %1487 = vrot.lane.b32.xlu0 %v1300, 124
      %v1488 = vpop.permute.xlu0 %1487
      %1489 = vrot.lane.b32.xlu0 %v1301, 124
      %v1490 = vpop.permute.xlu0 %1489
      %1491 = vrot.lane.b32.xlu0 %v1302, 124
      %v1492 = vpop.permute.xlu0 %1491
      %1493 = vrot.lane.b32.xlu0 %v1303, 124
      %v1494 = vpop.permute.xlu0 %1493
      %1495 = vrot.lane.b32.xlu0 %v1304, 124
      %v1496 = vpop.permute.xlu0 %1495
      %1497 = vrot.lane.b32.xlu0 %v1305, 124
      %v1498 = vpop.permute.xlu0 %1497
      %1499 = vrot.lane.b32.xlu0 %v1306, 124
      %v1500 = vpop.permute.xlu0 %1499
      %1501 = vrot.lane.b32.xlu0 %v1307, 124
      %v1502 = vpop.permute.xlu0 %1501
      %1503 = vrot.lane.b32.xlu0 %v1308, 124
      %v1504 = vpop.permute.xlu0 %1503
      %vm1517 = vcmask 39968
      %1518 = vst.msk [vmem:[#allocation3] sm:$0xff] %vm1517, %v1482
      %1519 = vst.msk [vmem:[#allocation3 + $0x8] sm:$0xff] %vm1517, %v1484
      %1520 = vst.msk [vmem:[#allocation3 + $0x10] sm:$0xff] %vm1517, %v1486
      %1521 = vst.msk [vmem:[#allocation3 + $0x18] sm:$0xff] %vm1517, %v1488
      %1522 = vst.msk [vmem:[#allocation3 + $0x20] sm:$0xff] %vm1517, %v1490
      %1523 = vst.msk [vmem:[#allocation3 + $0x28] sm:$0xff] %vm1517, %v1492
      %1524 = vst.msk [vmem:[#allocation3 + $0x30] sm:$0xff] %vm1517, %v1494
      %1525 = vst.msk [vmem:[#allocation3 + $0x38] sm:$0xff] %vm1517, %v1496
      %1526 = vst.msk [vmem:[#allocation3 + $0x40] sm:$0xff] %vm1517, %v1498
      %1527 = vst.msk [vmem:[#allocation3 + $0x48] sm:$0xff] %vm1517, %v1500
      %1528 = vst.msk [vmem:[#allocation3 + $0x50] sm:$0xff] %vm1517, %v1502
      %1529 = vst.msk [vmem:[#allocation3 + $0x58] sm:$0xff] %vm1517, %v1504
      %1530 = vrot.lane.b32.xlu0 %v1297, 123
      %v1531 = vpop.permute.xlu0 %1530
      %1532 = vrot.lane.b32.xlu0 %v1298, 123
      %v1533 = vpop.permute.xlu0 %1532
      %1534 = vrot.lane.b32.xlu0 %v1299, 123
      %v1535 = vpop.permute.xlu0 %1534
      %1536 = vrot.lane.b32.xlu0 %v1300, 123
      %v1537 = vpop.permute.xlu0 %1536
      %1538 = vrot.lane.b32.xlu0 %v1301, 123
      %v1539 = vpop.permute.xlu0 %1538
      %1540 = vrot.lane.b32.xlu0 %v1302, 123
      %v1541 = vpop.permute.xlu0 %1540
      %1542 = vrot.lane.b32.xlu0 %v1303, 123
      %v1543 = vpop.permute.xlu0 %1542
      %1544 = vrot.lane.b32.xlu0 %v1304, 123
      %v1545 = vpop.permute.xlu0 %1544
      %1546 = vrot.lane.b32.xlu0 %v1305, 123
      %v1547 = vpop.permute.xlu0 %1546
      %1548 = vrot.lane.b32.xlu0 %v1306, 123
      %v1549 = vpop.permute.xlu0 %1548
      %1550 = vrot.lane.b32.xlu0 %v1307, 123
      %v1551 = vpop.permute.xlu0 %1550
      %1552 = vrot.lane.b32.xlu0 %v1308, 123
      %v1553 = vpop.permute.xlu0 %1552
      %vm1566 = vcmask 48168
      %1567 = vst.msk [vmem:[#allocation3] sm:$0xff] %vm1566, %v1531
      %1568 = vst.msk [vmem:[#allocation3 + $0x8] sm:$0xff] %vm1566, %v1533
      %1569 = vst.msk [vmem:[#allocation3 + $0x10] sm:$0xff] %vm1566, %v1535
      %1570 = vst.msk [vmem:[#allocation3 + $0x18] sm:$0xff] %vm1566, %v1537
      %1571 = vst.msk [vmem:[#allocation3 + $0x20] sm:$0xff] %vm1566, %v1539
      %1572 = vst.msk [vmem:[#allocation3 + $0x28] sm:$0xff] %vm1566, %v1541
      %1573 = vst.msk [vmem:[#allocation3 + $0x30] sm:$0xff] %vm1566, %v1543
      %1574 = vst.msk [vmem:[#allocation3 + $0x38] sm:$0xff] %vm1566, %v1545
      %1575 = vst.msk [vmem:[#allocation3 + $0x40] sm:$0xff] %vm1566, %v1547
      %1576 = vst.msk [vmem:[#allocation3 + $0x48] sm:$0xff] %vm1566, %v1549
      %1577 = vst.msk [vmem:[#allocation3 + $0x50] sm:$0xff] %vm1566, %v1551
      %1578 = vst.msk [vmem:[#allocation3 + $0x58] sm:$0xff] %vm1566, %v1553
      %1579 = vrot.lane.b32.xlu0 %v1297, 122
      %v1580 = vpop.permute.xlu0 %1579
      %1581 = vrot.lane.b32.xlu0 %v1298, 122
      %v1582 = vpop.permute.xlu0 %1581
      %1583 = vrot.lane.b32.xlu0 %v1299, 122
      %v1584 = vpop.permute.xlu0 %1583
      %1585 = vrot.lane.b32.xlu0 %v1300, 122
      %v1586 = vpop.permute.xlu0 %1585
      %1587 = vrot.lane.b32.xlu0 %v1301, 122
      %v1588 = vpop.permute.xlu0 %1587
      %1589 = vrot.lane.b32.xlu0 %v1302, 122
      %v1590 = vpop.permute.xlu0 %1589
      %1591 = vrot.lane.b32.xlu0 %v1303, 122
      %v1592 = vpop.permute.xlu0 %1591
      %1593 = vrot.lane.b32.xlu0 %v1304, 122
      %v1594 = vpop.permute.xlu0 %1593
      %1595 = vrot.lane.b32.xlu0 %v1305, 122
      %v1596 = vpop.permute.xlu0 %1595
      %1597 = vrot.lane.b32.xlu0 %v1306, 122
      %v1598 = vpop.permute.xlu0 %1597
      %1599 = vrot.lane.b32.xlu0 %v1307, 122
      %v1600 = vpop.permute.xlu0 %1599
      %1601 = vrot.lane.b32.xlu0 %v1308, 122
      %v1602 = vpop.permute.xlu0 %1601
      %vm1615 = vcmask 56368
      %1616 = vst.msk [vmem:[#allocation3] sm:$0xff] %vm1615, %v1580
      %1617 = vst.msk [vmem:[#allocation3 + $0x8] sm:$0xff] %vm1615, %v1582
      %1618 = vst.msk [vmem:[#allocation3 + $0x10] sm:$0xff] %vm1615, %v1584
      %1619 = vst.msk [vmem:[#allocation3 + $0x18] sm:$0xff] %vm1615, %v1586
      %1620 = vst.msk [vmem:[#allocation3 + $0x20] sm:$0xff] %vm1615, %v1588
      %1621 = vst.msk [vmem:[#allocation3 + $0x28] sm:$0xff] %vm1615, %v1590
      %1622 = vst.msk [vmem:[#allocation3 + $0x30] sm:$0xff] %vm1615, %v1592
      %1623 = vst.msk [vmem:[#allocation3 + $0x38] sm:$0xff] %vm1615, %v1594
      %1624 = vst.msk [vmem:[#allocation3 + $0x40] sm:$0xff] %vm1615, %v1596
      %1625 = vst.msk [vmem:[#allocation3 + $0x48] sm:$0xff] %vm1615, %v1598
      %1626 = vst.msk [vmem:[#allocation3 + $0x50] sm:$0xff] %vm1615, %v1600
      %1627 = vst.msk [vmem:[#allocation3 + $0x58] sm:$0xff] %vm1615, %v1602
      %1628 = vrot.lane.b32.xlu0 %v1297, 121
      %v1629 = vpop.permute.xlu0 %1628
      %1630 = vrot.lane.b32.xlu0 %v1298, 121
      %v1631 = vpop.permute.xlu0 %1630
      %1632 = vrot.lane.b32.xlu0 %v1299, 121
      %v1633 = vpop.permute.xlu0 %1632
      %1634 = vrot.lane.b32.xlu0 %v1300, 121
      %v1635 = vpop.permute.xlu0 %1634
      %1636 = vrot.lane.b32.xlu0 %v1301, 121
      %v1637 = vpop.permute.xlu0 %1636
      %1638 = vrot.lane.b32.xlu0 %v1302, 121
      %v1639 = vpop.permute.xlu0 %1638
      %1640 = vrot.lane.b32.xlu0 %v1303, 121
      %v1641 = vpop.permute.xlu0 %1640
      %1642 = vrot.lane.b32.xlu0 %v1304, 121
      %v1643 = vpop.permute.xlu0 %1642
      %1644 = vrot.lane.b32.xlu0 %v1305, 121
      %v1645 = vpop.permute.xlu0 %1644
      %1646 = vrot.lane.b32.xlu0 %v1306, 121
      %v1647 = vpop.permute.xlu0 %1646
      %1648 = vrot.lane.b32.xlu0 %v1307, 121
      %v1649 = vpop.permute.xlu0 %1648
      %1650 = vrot.lane.b32.xlu0 %v1308, 121
      %v1651 = vpop.permute.xlu0 %1650
      %vm1664 = vcmask 64568
      %1665 = vst.msk [vmem:[#allocation3] sm:$0xff] %vm1664, %v1629
      %1666 = vst.msk [vmem:[#allocation3 + $0x8] sm:$0xff] %vm1664, %v1631
      %1667 = vst.msk [vmem:[#allocation3 + $0x10] sm:$0xff] %vm1664, %v1633
      %1668 = vst.msk [vmem:[#allocation3 + $0x18] sm:$0xff] %vm1664, %v1635
      %1669 = vst.msk [vmem:[#allocation3 + $0x20] sm:$0xff] %vm1664, %v1637
      %1670 = vst.msk [vmem:[#allocation3 + $0x28] sm:$0xff] %vm1664, %v1639
      %1671 = vst.msk [vmem:[#allocation3 + $0x30] sm:$0xff] %vm1664, %v1641
      %1672 = vst.msk [vmem:[#allocation3 + $0x38] sm:$0xff] %vm1664, %v1643
      %1673 = vst.msk [vmem:[#allocation3 + $0x40] sm:$0xff] %vm1664, %v1645
      %1674 = vst.msk [vmem:[#allocation3 + $0x48] sm:$0xff] %vm1664, %v1647
      %1675 = vst.msk [vmem:[#allocation3 + $0x50] sm:$0xff] %vm1664, %v1649
      %1676 = vst.msk [vmem:[#allocation3 + $0x58] sm:$0xff] %vm1664, %v1651
      %1677 = vrot.lane.b32.xlu0 %v1297, 120
      %v1678 = vpop.permute.xlu0 %1677
      %1679 = vrot.lane.b32.xlu0 %v1298, 120
      %v1680 = vpop.permute.xlu0 %1679
      %1681 = vrot.lane.b32.xlu0 %v1299, 120
      %v1682 = vpop.permute.xlu0 %1681
      %1683 = vrot.lane.b32.xlu0 %v1300, 120
      %v1684 = vpop.permute.xlu0 %1683
      %1685 = vrot.lane.b32.xlu0 %v1301, 120
      %v1686 = vpop.permute.xlu0 %1685
      %1687 = vrot.lane.b32.xlu0 %v1302, 120
      %v1688 = vpop.permute.xlu0 %1687
      %1689 = vrot.lane.b32.xlu0 %v1303, 120
      %v1690 = vpop.permute.xlu0 %1689
      %1691 = vrot.lane.b32.xlu0 %v1304, 120
      %v1692 = vpop.permute.xlu0 %1691
      %1693 = vrot.lane.b32.xlu0 %v1305, 120
      %v1694 = vpop.permute.xlu0 %1693
      %1695 = vrot.lane.b32.xlu0 %v1306, 120
      %v1696 = vpop.permute.xlu0 %1695
      %1697 = vrot.lane.b32.xlu0 %v1307, 120
      %v1698 = vpop.permute.xlu0 %1697
      %1699 = vrot.lane.b32.xlu0 %v1308, 120
      %v1700 = vpop.permute.xlu0 %1699
      %vm1713 = vcmask 72768
      %1714 = vst.msk [vmem:[#allocation3] sm:$0xff] %vm1713, %v1678
      %1715 = vst.msk [vmem:[#allocation3 + $0x8] sm:$0xff] %vm1713, %v1680
      %1716 = vst.msk [vmem:[#allocation3 + $0x10] sm:$0xff] %vm1713, %v1682
      %1717 = vst.msk [vmem:[#allocation3 + $0x18] sm:$0xff] %vm1713, %v1684
      %1718 = vst.msk [vmem:[#allocation3 + $0x20] sm:$0xff] %vm1713, %v1686
      %1719 = vst.msk [vmem:[#allocation3 + $0x28] sm:$0xff] %vm1713, %v1688
      %1720 = vst.msk [vmem:[#allocation3 + $0x30] sm:$0xff] %vm1713, %v1690
      %1721 = vst.msk [vmem:[#allocation3 + $0x38] sm:$0xff] %vm1713, %v1692
      %1722 = vst.msk [vmem:[#allocation3 + $0x40] sm:$0xff] %vm1713, %v1694
      %1723 = vst.msk [vmem:[#allocation3 + $0x48] sm:$0xff] %vm1713, %v1696
      %1724 = vst.msk [vmem:[#allocation3 + $0x50] sm:$0xff] %vm1713, %v1698
      %1725 = vst.msk [vmem:[#allocation3 + $0x58] sm:$0xff] %vm1713, %v1700
      %1726 = vrot.lane.b32.xlu0 %v1297, 119
      %v1727 = vpop.permute.xlu0 %1726
      %1728 = vrot.lane.b32.xlu0 %v1298, 119
      %v1729 = vpop.permute.xlu0 %1728
      %1730 = vrot.lane.b32.xlu0 %v1299, 119
      %v1731 = vpop.permute.xlu0 %1730
      %1732 = vrot.lane.b32.xlu0 %v1300, 119
      %v1733 = vpop.permute.xlu0 %1732
      %1734 = vrot.lane.b32.xlu0 %v1301, 119
      %v1735 = vpop.permute.xlu0 %1734
      %1736 = vrot.lane.b32.xlu0 %v1302, 119
      %v1737 = vpop.permute.xlu0 %1736
      %1738 = vrot.lane.b32.xlu0 %v1303, 119
      %v1739 = vpop.permute.xlu0 %1738
      %1740 = vrot.lane.b32.xlu0 %v1304, 119
      %v1741 = vpop.permute.xlu0 %1740
      %1742 = vrot.lane.b32.xlu0 %v1305, 119
      %v1743 = vpop.permute.xlu0 %1742
      %1744 = vrot.lane.b32.xlu0 %v1306, 119
      %v1745 = vpop.permute.xlu0 %1744
      %1746 = vrot.lane.b32.xlu0 %v1307, 119
      %v1747 = vpop.permute.xlu0 %1746
      %1748 = vrot.lane.b32.xlu0 %v1308, 119
      %v1749 = vpop.permute.xlu0 %1748
      %vm1762 = vcmask 80968
      %1763 = vst.msk [vmem:[#allocation3] sm:$0xff] %vm1762, %v1727
      %1764 = vst.msk [vmem:[#allocation3 + $0x8] sm:$0xff] %vm1762, %v1729
      %1765 = vst.msk [vmem:[#allocation3 + $0x10] sm:$0xff] %vm1762, %v1731
      %1766 = vst.msk [vmem:[#allocation3 + $0x18] sm:$0xff] %vm1762, %v1733
      %1767 = vst.msk [vmem:[#allocation3 + $0x20] sm:$0xff] %vm1762, %v1735
      %1768 = vst.msk [vmem:[#allocation3 + $0x28] sm:$0xff] %vm1762, %v1737
      %1769 = vst.msk [vmem:[#allocation3 + $0x30] sm:$0xff] %vm1762, %v1739
      %1770 = vst.msk [vmem:[#allocation3 + $0x38] sm:$0xff] %vm1762, %v1741
      %1771 = vst.msk [vmem:[#allocation3 + $0x40] sm:$0xff] %vm1762, %v1743
      %1772 = vst.msk [vmem:[#allocation3 + $0x48] sm:$0xff] %vm1762, %v1745
      %1773 = vst.msk [vmem:[#allocation3 + $0x50] sm:$0xff] %vm1762, %v1747
      %1774 = vst.msk [vmem:[#allocation3 + $0x58] sm:$0xff] %vm1762, %v1749
      %1775 = vrot.lane.b32.xlu0 %v1297, 118
      %v1776 = vpop.permute.xlu0 %1775
      %1777 = vrot.lane.b32.xlu0 %v1298, 118
      %v1778 = vpop.permute.xlu0 %1777
      %1779 = vrot.lane.b32.xlu0 %v1299, 118
      %v1780 = vpop.permute.xlu0 %1779
      %1781 = vrot.lane.b32.xlu0 %v1300, 118
      %v1782 = vpop.permute.xlu0 %1781
      %1783 = vrot.lane.b32.xlu0 %v1301, 118
      %v1784 = vpop.permute.xlu0 %1783
      %1785 = vrot.lane.b32.xlu0 %v1302, 118
      %v1786 = vpop.permute.xlu0 %1785
      %1787 = vrot.lane.b32.xlu0 %v1303, 118
      %v1788 = vpop.permute.xlu0 %1787
      %1789 = vrot.lane.b32.xlu0 %v1304, 118
      %v1790 = vpop.permute.xlu0 %1789
      %1791 = vrot.lane.b32.xlu0 %v1305, 118
      %v1792 = vpop.permute.xlu0 %1791
      %1793 = vrot.lane.b32.xlu0 %v1306, 118
      %v1794 = vpop.permute.xlu0 %1793
      %1795 = vrot.lane.b32.xlu0 %v1307, 118
      %v1796 = vpop.permute.xlu0 %1795
      %1797 = vrot.lane.b32.xlu0 %v1308, 118
      %v1798 = vpop.permute.xlu0 %1797
      %vm1811 = vcmask 89168
      %1812 = vst.msk [vmem:[#allocation3] sm:$0xff] %vm1811, %v1776
      %1813 = vst.msk [vmem:[#allocation3 + $0x8] sm:$0xff] %vm1811, %v1778
      %1814 = vst.msk [vmem:[#allocation3 + $0x10] sm:$0xff] %vm1811, %v1780
      %1815 = vst.msk [vmem:[#allocation3 + $0x18] sm:$0xff] %vm1811, %v1782
      %1816 = vst.msk [vmem:[#allocation3 + $0x20] sm:$0xff] %vm1811, %v1784
      %1817 = vst.msk [vmem:[#allocation3 + $0x28] sm:$0xff] %vm1811, %v1786
      %1818 = vst.msk [vmem:[#allocation3 + $0x30] sm:$0xff] %vm1811, %v1788
      %1819 = vst.msk [vmem:[#allocation3 + $0x38] sm:$0xff] %vm1811, %v1790
      %1820 = vst.msk [vmem:[#allocation3 + $0x40] sm:$0xff] %vm1811, %v1792
      %1821 = vst.msk [vmem:[#allocation3 + $0x48] sm:$0xff] %vm1811, %v1794
      %1822 = vst.msk [vmem:[#allocation3 + $0x50] sm:$0xff] %vm1811, %v1796
      %1823 = vst.msk [vmem:[#allocation3 + $0x58] sm:$0xff] %vm1811, %v1798
      %1824 = vrot.lane.b32.xlu0 %v1297, 117
      %v1825 = vpop.permute.xlu0 %1824
      %1826 = vrot.lane.b32.xlu0 %v1298, 117
      %v1827 = vpop.permute.xlu0 %1826
      %1828 = vrot.lane.b32.xlu0 %v1299, 117
      %v1829 = vpop.permute.xlu0 %1828
      %1830 = vrot.lane.b32.xlu0 %v1300, 117
      %v1831 = vpop.permute.xlu0 %1830
      %1832 = vrot.lane.b32.xlu0 %v1301, 117
      %v1833 = vpop.permute.xlu0 %1832
      %1834 = vrot.lane.b32.xlu0 %v1302, 117
      %v1835 = vpop.permute.xlu0 %1834
      %1836 = vrot.lane.b32.xlu0 %v1303, 117
      %v1837 = vpop.permute.xlu0 %1836
      %1838 = vrot.lane.b32.xlu0 %v1304, 117
      %v1839 = vpop.permute.xlu0 %1838
      %1840 = vrot.lane.b32.xlu0 %v1305, 117
      %v1841 = vpop.permute.xlu0 %1840
      %1842 = vrot.lane.b32.xlu0 %v1306, 117
      %v1843 = vpop.permute.xlu0 %1842
      %1844 = vrot.lane.b32.xlu0 %v1307, 117
      %v1845 = vpop.permute.xlu0 %1844
      %1846 = vrot.lane.b32.xlu0 %v1308, 117
      %v1847 = vpop.permute.xlu0 %1846
      %vm1860 = vcmask 97368
      %1861 = vst.msk [vmem:[#allocation3] sm:$0xff] %vm1860, %v1825
      %1862 = vst.msk [vmem:[#allocation3 + $0x8] sm:$0xff] %vm1860, %v1827
      %1863 = vst.msk [vmem:[#allocation3 + $0x10] sm:$0xff] %vm1860, %v1829
      %1864 = vst.msk [vmem:[#allocation3 + $0x18] sm:$0xff] %vm1860, %v1831
      %1865 = vst.msk [vmem:[#allocation3 + $0x20] sm:$0xff] %vm1860, %v1833
      %1866 = vst.msk [vmem:[#allocation3 + $0x28] sm:$0xff] %vm1860, %v1835
      %1867 = vst.msk [vmem:[#allocation3 + $0x30] sm:$0xff] %vm1860, %v1837
      %1868 = vst.msk [vmem:[#allocation3 + $0x38] sm:$0xff] %vm1860, %v1839
      %1869 = vst.msk [vmem:[#allocation3 + $0x40] sm:$0xff] %vm1860, %v1841
      %1870 = vst.msk [vmem:[#allocation3 + $0x48] sm:$0xff] %vm1860, %v1843
      %1871 = vst.msk [vmem:[#allocation3 + $0x50] sm:$0xff] %vm1860, %v1845
      %1872 = vst.msk [vmem:[#allocation3 + $0x58] sm:$0xff] %vm1860, %v1847
      %1873 = vrot.lane.b32.xlu0 %v1297, 116
      %v1874 = vpop.permute.xlu0 %1873
      %1875 = vrot.lane.b32.xlu0 %v1298, 116
      %v1876 = vpop.permute.xlu0 %1875
      %1877 = vrot.lane.b32.xlu0 %v1299, 116
      %v1878 = vpop.permute.xlu0 %1877
      %1879 = vrot.lane.b32.xlu0 %v1300, 116
      %v1880 = vpop.permute.xlu0 %1879
      %1881 = vrot.lane.b32.xlu0 %v1301, 116
      %v1882 = vpop.permute.xlu0 %1881
      %1883 = vrot.lane.b32.xlu0 %v1302, 116
      %v1884 = vpop.permute.xlu0 %1883
      %1885 = vrot.lane.b32.xlu0 %v1303, 116
      %v1886 = vpop.permute.xlu0 %1885
      %1887 = vrot.lane.b32.xlu0 %v1304, 116
      %v1888 = vpop.permute.xlu0 %1887
      %1889 = vrot.lane.b32.xlu0 %v1305, 116
      %v1890 = vpop.permute.xlu0 %1889
      %1891 = vrot.lane.b32.xlu0 %v1306, 116
      %v1892 = vpop.permute.xlu0 %1891
      %1893 = vrot.lane.b32.xlu0 %v1307, 116
      %v1894 = vpop.permute.xlu0 %1893
      %1895 = vrot.lane.b32.xlu0 %v1308, 116
      %v1896 = vpop.permute.xlu0 %1895
      %vm1909 = vcmask 105568
      %1910 = vst.msk [vmem:[#allocation3] sm:$0xff] %vm1909, %v1874
      %1911 = vst.msk [vmem:[#allocation3 + $0x8] sm:$0xff] %vm1909, %v1876
      %1912 = vst.msk [vmem:[#allocation3 + $0x10] sm:$0xff] %vm1909, %v1878
      %1913 = vst.msk [vmem:[#allocation3 + $0x18] sm:$0xff] %vm1909, %v1880
      %1914 = vst.msk [vmem:[#allocation3 + $0x20] sm:$0xff] %vm1909, %v1882
      %1915 = vst.msk [vmem:[#allocation3 + $0x28] sm:$0xff] %vm1909, %v1884
      %1916 = vst.msk [vmem:[#allocation3 + $0x30] sm:$0xff] %vm1909, %v1886
      %1917 = vst.msk [vmem:[#allocation3 + $0x38] sm:$0xff] %vm1909, %v1888
      %1918 = vst.msk [vmem:[#allocation3 + $0x40] sm:$0xff] %vm1909, %v1890
      %1919 = vst.msk [vmem:[#allocation3 + $0x48] sm:$0xff] %vm1909, %v1892
      %1920 = vst.msk [vmem:[#allocation3 + $0x50] sm:$0xff] %vm1909, %v1894
      %1921 = vst.msk [vmem:[#allocation3 + $0x58] sm:$0xff] %vm1909, %v1896
      %1922 = vrot.lane.b32.xlu0 %v1297, 115
      %v1923 = vpop.permute.xlu0 %1922
      %1924 = vrot.lane.b32.xlu0 %v1298, 115
      %v1925 = vpop.permute.xlu0 %1924
      %1926 = vrot.lane.b32.xlu0 %v1299, 115
      %v1927 = vpop.permute.xlu0 %1926
      %1928 = vrot.lane.b32.xlu0 %v1300, 115
      %v1929 = vpop.permute.xlu0 %1928
      %1930 = vrot.lane.b32.xlu0 %v1301, 115
      %v1931 = vpop.permute.xlu0 %1930
      %1932 = vrot.lane.b32.xlu0 %v1302, 115
      %v1933 = vpop.permute.xlu0 %1932
      %1934 = vrot.lane.b32.xlu0 %v1303, 115
      %v1935 = vpop.permute.xlu0 %1934
      %1936 = vrot.lane.b32.xlu0 %v1304, 115
      %v1937 = vpop.permute.xlu0 %1936
      %1938 = vrot.lane.b32.xlu0 %v1305, 115
      %v1939 = vpop.permute.xlu0 %1938
      %1940 = vrot.lane.b32.xlu0 %v1306, 115
      %v1941 = vpop.permute.xlu0 %1940
      %1942 = vrot.lane.b32.xlu0 %v1307, 115
      %v1943 = vpop.permute.xlu0 %1942
      %1944 = vrot.lane.b32.xlu0 %v1308, 115
      %v1945 = vpop.permute.xlu0 %1944
      %vm1958 = vcmask 113768
      %1959 = vst.msk [vmem:[#allocation3] sm:$0xff] %vm1958, %v1923
      %1960 = vst.msk [vmem:[#allocation3 + $0x8] sm:$0xff] %vm1958, %v1925
      %1961 = vst.msk [vmem:[#allocation3 + $0x10] sm:$0xff] %vm1958, %v1927
      %1962 = vst.msk [vmem:[#allocation3 + $0x18] sm:$0xff] %vm1958, %v1929
      %1963 = vst.msk [vmem:[#allocation3 + $0x20] sm:$0xff] %vm1958, %v1931
      %1964 = vst.msk [vmem:[#allocation3 + $0x28] sm:$0xff] %vm1958, %v1933
      %1965 = vst.msk [vmem:[#allocation3 + $0x30] sm:$0xff] %vm1958, %v1935
      %1966 = vst.msk [vmem:[#allocation3 + $0x38] sm:$0xff] %vm1958, %v1937
      %1967 = vst.msk [vmem:[#allocation3 + $0x40] sm:$0xff] %vm1958, %v1939
      %1968 = vst.msk [vmem:[#allocation3 + $0x48] sm:$0xff] %vm1958, %v1941
      %1969 = vst.msk [vmem:[#allocation3 + $0x50] sm:$0xff] %vm1958, %v1943
      %1970 = vst.msk [vmem:[#allocation3 + $0x58] sm:$0xff] %vm1958, %v1945
      %v1971 = vld [vmem:[#allocation3] sm:$0xff]
      %v1972 = vld [vmem:[#allocation3 + $0x8] sm:$0xff]
      %v1973 = vld [vmem:[#allocation3 + $0x10] sm:$0xff]
      %v1974 = vld [vmem:[#allocation3 + $0x18] sm:$0xff]
      %v1975 = vld [vmem:[#allocation3 + $0x20] sm:$0xff]
      %v1976 = vld [vmem:[#allocation3 + $0x28] sm:$0xff]
      %v1977 = vld [vmem:[#allocation3 + $0x30] sm:$0xff]
      %v1978 = vld [vmem:[#allocation3 + $0x38] sm:$0xff]
      %v1979 = vld [vmem:[#allocation3 + $0x40] sm:$0xff]
      %v1980 = vld [vmem:[#allocation3 + $0x48] sm:$0xff]
      %v1981 = vld [vmem:[#allocation3 + $0x50] sm:$0xff]
      %v1982 = vld [vmem:[#allocation3 + $0x58] sm:$0xff]
      %v1983 = vld [vmem:[%s3] sm:$0xff]
      %v1984 = vld [vmem:[%s3 + $0x8] sm:$0xff]
      %v1985 = vld [vmem:[%s3 + $0x10] sm:$0xff]
      %v1986 = vld [vmem:[%s3 + $0x18] sm:$0xff]
      %v1987 = vld [vmem:[%s3 + $0x20] sm:$0xff]
      %v1988 = vld [vmem:[%s3 + $0x28] sm:$0xff]
      %v1989 = vld [vmem:[%s3 + $0x30] sm:$0xff]
      %v1990 = vld [vmem:[%s3 + $0x38] sm:$0xff]
      %v1991 = vld [vmem:[%s3 + $0x40] sm:$0xff]
      %v1992 = vld [vmem:[%s3 + $0x48] sm:$0xff]
      %v1993 = vld [vmem:[%s3 + $0x50] sm:$0xff]
      %v1994 = vld [vmem:[%s3 + $0x58] sm:$0xff]
      %v1995 = vld [vmem:[%s3 + $0x60] sm:$0xff]
      %v1996 = vld [vmem:[%s3 + $0x68] sm:$0xff]
      %v1997 = vld [vmem:[%s3 + $0x70] sm:$0xff]
      %v1998 = vld [vmem:[%s3 + $0x78] sm:$0xff]
      %v1999 = vld [vmem:[%s3 + $0x80] sm:$0xff]
      %v2000 = vld [vmem:[%s3 + $0x88] sm:$0xff]
      %v2001 = vld [vmem:[%s3 + $0x90] sm:$0xff]
      %v2002 = vld [vmem:[%s3 + $0x98] sm:$0xff]
      %v2003 = vld [vmem:[%s3 + $0xa0] sm:$0xff]
      %v2004 = vld [vmem:[%s3 + $0xa8] sm:$0xff]
      %v2005 = vld [vmem:[%s3 + $0xb0] sm:$0xff]
      %v2006 = vld [vmem:[%s3 + $0xb8] sm:$0xff]
      %v2007 = vld [vmem:[%s3 + $0xc0] sm:$0xff]
      %v2008 = vld [vmem:[%s3 + $0xc8] sm:$0xff]
      %v2009 = vld [vmem:[%s3 + $0xd0] sm:$0xff]
      %v2010 = vld [vmem:[%s3 + $0xd8] sm:$0xff]
      %v2011 = vld [vmem:[%s3 + $0xe0] sm:$0xff]
      %v2012 = vld [vmem:[%s3 + $0xe8] sm:$0xff]
      %v2013 = vld [vmem:[%s3 + $0xf0] sm:$0xff]
      %v2014 = vld [vmem:[%s3 + $0xf8] sm:$0xff]
      %v2015 = vld [vmem:[%s3 + $0x100] sm:$0xff]
      %v2016 = vld [vmem:[%s3 + $0x108] sm:$0xff]
      %v2017 = vld [vmem:[%s3 + $0x110] sm:$0xff]
      %v2018 = vld [vmem:[%s3 + $0x118] sm:$0xff]
      %v2019 = vld [vmem:[%s3 + $0x120] sm:$0xff]
      %v2020 = vld [vmem:[%s3 + $0x128] sm:$0xff]
      %v2021 = vld [vmem:[%s3 + $0x130] sm:$0xff]
      %v2022 = vld [vmem:[%s3 + $0x138] sm:$0xff]
      %v2023 = vld [vmem:[%s3 + $0x140] sm:$0xff]
      %v2024 = vld [vmem:[%s3 + $0x148] sm:$0xff]
      %v2025 = vld [vmem:[%s3 + $0x150] sm:$0xff]
      %v2026 = vld [vmem:[%s3 + $0x158] sm:$0xff]
      %v2027 = vld [vmem:[%s3 + $0x160] sm:$0xff]
      %v2028 = vld [vmem:[%s3 + $0x168] sm:$0xff]
      %v2029 = vld [vmem:[%s3 + $0x170] sm:$0xff]
      %v2030 = vld [vmem:[%s3 + $0x178] sm:$0xff]
      %v2031 = vld [vmem:[%s3 + $0x180] sm:$0xff]
      %v2032 = vld [vmem:[%s3 + $0x188] sm:$0xff]
      %v2033 = vld [vmem:[%s3 + $0x190] sm:$0xff]
      %v2034 = vld [vmem:[%s3 + $0x198] sm:$0xff]
      %v2035 = vld [vmem:[%s3 + $0x1a0] sm:$0xff]
      %v2036 = vld [vmem:[%s3 + $0x1a8] sm:$0xff]
      %v2037 = vld [vmem:[%s3 + $0x1b0] sm:$0xff]
      %v2038 = vld [vmem:[%s3 + $0x1b8] sm:$0xff]
      %v2039 = vld [vmem:[%s3 + $0x1c0] sm:$0xff]
      %v2040 = vld [vmem:[%s3 + $0x1c8] sm:$0xff]
      %v2041 = vld [vmem:[%s3 + $0x1d0] sm:$0xff]
      %v2042 = vld [vmem:[%s3 + $0x1d8] sm:$0xff]
      %v2043 = vld [vmem:[%s3 + $0x1e0] sm:$0xff]
      %v2044 = vld [vmem:[%s3 + $0x1e8] sm:$0xff]
      %v2045 = vld [vmem:[%s3 + $0x1f0] sm:$0xff]
      %v2046 = vld [vmem:[%s3 + $0x1f8] sm:$0xff]
      %v2047 = vld [vmem:[%s3 + $0x200] sm:$0xff]
      %v2048 = vld [vmem:[%s3 + $0x208] sm:$0xff]
      %v2049 = vld [vmem:[%s3 + $0x210] sm:$0xff]
      %v2050 = vld [vmem:[%s3 + $0x218] sm:$0xff]
      %v2051 = vld [vmem:[%s3 + $0x220] sm:$0xff]
      %v2052 = vld [vmem:[%s3 + $0x228] sm:$0xff]
      %v2053 = vld [vmem:[%s3 + $0x230] sm:$0xff]
      %v2054 = vld [vmem:[%s3 + $0x238] sm:$0xff]
      %v2055 = vld [vmem:[%s3 + $0x240] sm:$0xff]
      %v2056 = vld [vmem:[%s3 + $0x248] sm:$0xff]
      %v2057 = vld [vmem:[%s3 + $0x250] sm:$0xff]
      %v2058 = vld [vmem:[%s3 + $0x258] sm:$0xff]
      %v2059 = vld [vmem:[%s3 + $0x260] sm:$0xff]
      %v2060 = vld [vmem:[%s3 + $0x268] sm:$0xff]
      %v2061 = vld [vmem:[%s3 + $0x270] sm:$0xff]
      %v2062 = vld [vmem:[%s3 + $0x278] sm:$0xff]
      %v2063 = vld [vmem:[%s3 + $0x280] sm:$0xff]
      %v2064 = vld [vmem:[%s3 + $0x288] sm:$0xff]
      %v2065 = vld [vmem:[%s3 + $0x290] sm:$0xff]
      %v2066 = vld [vmem:[%s3 + $0x298] sm:$0xff]
      %v2067 = vld [vmem:[%s3 + $0x2a0] sm:$0xff]
      %v2068 = vld [vmem:[%s3 + $0x2a8] sm:$0xff]
      %v2069 = vld [vmem:[%s3 + $0x2b0] sm:$0xff]
      %v2070 = vld [vmem:[%s3 + $0x2b8] sm:$0xff]
      %v2071 = vld [vmem:[%s3 + $0x2c0] sm:$0xff]
      %v2072 = vld [vmem:[%s3 + $0x2c8] sm:$0xff]
      %v2073 = vld [vmem:[%s3 + $0x2d0] sm:$0xff]
      %v2074 = vld [vmem:[%s3 + $0x2d8] sm:$0xff]
      %v2075 = vld [vmem:[%s3 + $0x2e0] sm:$0xff]
      %v2076 = vld [vmem:[%s3 + $0x2e8] sm:$0xff]
      %v2077 = vld [vmem:[%s3 + $0x2f0] sm:$0xff]
      %v2078 = vld [vmem:[%s3 + $0x2f8] sm:$0xff]
      %v2079 = vld [vmem:[%s3 + $0x300] sm:$0xff]
      %v2080 = vld [vmem:[%s3 + $0x308] sm:$0xff]
      %v2081 = vld [vmem:[%s3 + $0x310] sm:$0xff]
      %v2082 = vld [vmem:[%s3 + $0x318] sm:$0xff]
      %v2083 = vld [vmem:[%s3 + $0x320] sm:$0xff]
      %v2084 = vld [vmem:[%s3 + $0x328] sm:$0xff]
      %v2085 = vld [vmem:[%s3 + $0x330] sm:$0xff]
      %v2086 = vld [vmem:[%s3 + $0x338] sm:$0xff]
      %v2087 = vld [vmem:[%s3 + $0x340] sm:$0xff]
      %v2088 = vld [vmem:[%s3 + $0x348] sm:$0xff]
      %v2089 = vld [vmem:[%s3 + $0x350] sm:$0xff]
      %v2090 = vld [vmem:[%s3 + $0x358] sm:$0xff]
      %v2091 = vld [vmem:[%s3 + $0x360] sm:$0xff]
      %v2092 = vld [vmem:[%s3 + $0x368] sm:$0xff]
      %v2093 = vld [vmem:[%s3 + $0x370] sm:$0xff]
      %v2094 = vld [vmem:[%s3 + $0x378] sm:$0xff]
      %v2095 = vld [vmem:[%s3 + $0x380] sm:$0xff]
      %v2096 = vld [vmem:[%s3 + $0x388] sm:$0xff]
      %v2097 = vld [vmem:[%s3 + $0x390] sm:$0xff]
      %v2098 = vld [vmem:[%s3 + $0x398] sm:$0xff]
      %v2099 = vld [vmem:[%s3 + $0x3a0] sm:$0xff]
      %v2100 = vld [vmem:[%s3 + $0x3a8] sm:$0xff]
      %v2101 = vld [vmem:[%s3 + $0x3b0] sm:$0xff]
      %v2102 = vld [vmem:[%s3 + $0x3b8] sm:$0xff]
      %v2103 = vld [vmem:[%s3 + $0x3c0] sm:$0xff]
      %v2104 = vld [vmem:[%s3 + $0x3c8] sm:$0xff]
      %v2105 = vld [vmem:[%s3 + $0x3d0] sm:$0xff]
      %v2106 = vld [vmem:[%s3 + $0x3d8] sm:$0xff]
      %v2107 = vld [vmem:[%s3 + $0x3e0] sm:$0xff]
      %v2108 = vld [vmem:[%s3 + $0x3e8] sm:$0xff]
      %v2109 = vld [vmem:[%s3 + $0x3f0] sm:$0xff]
      %v2110 = vld [vmem:[%s3 + $0x3f8] sm:$0xff]
      %v2111 = vld [vmem:[%s4] sm:$0x1]
      %v2112 = vld [vmem:[%s4 + $0x1] sm:$0x1]
      %v2113 = vld [vmem:[%s4 + $0x2] sm:$0x1]
      %v2114 = vld [vmem:[%s4 + $0x3] sm:$0x1]
      %v2115 = vld [vmem:[%s4 + $0x4] sm:$0x1]
      %v2116 = vld [vmem:[%s4 + $0x5] sm:$0x1]
      %v2117 = vld [vmem:[%s4 + $0x6] sm:$0x1]
      %v2118 = vld [vmem:[%s4 + $0x7] sm:$0x1]
      %v2119 = vld [vmem:[%s4 + $0x8] sm:$0x1]
      %v2120 = vld [vmem:[%s4 + $0x9] sm:$0x1]
      %v2121 = vld [vmem:[%s4 + $0xa] sm:$0x1]
      %v2122 = vld [vmem:[%s4 + $0xb] sm:$0x1]
      %v2123 = vld [vmem:[%s4 + $0xc] sm:$0x1]
      %v2124 = vld [vmem:[%s4 + $0xd] sm:$0x1]
      %v2125 = vld [vmem:[%s4 + $0xe] sm:$0x1]
      %v2126 = vld [vmem:[%s4 + $0xf] sm:$0x1]
      %2139 = vrot.lane.b32.xlu0 %v1971, 127
      %v2140 = vpop.permute.xlu0 %2139
      %2141 = vrot.lane.b32.xlu0 %v1972, 127
      %v2142 = vpop.permute.xlu0 %2141
      %2143 = vrot.lane.b32.xlu0 %v1973, 127
      %v2144 = vpop.permute.xlu0 %2143
      %2145 = vrot.lane.b32.xlu0 %v1974, 127
      %v2146 = vpop.permute.xlu0 %2145
      %2147 = vrot.lane.b32.xlu0 %v1975, 127
      %v2148 = vpop.permute.xlu0 %2147
      %2149 = vrot.lane.b32.xlu0 %v1976, 127
      %v2150 = vpop.permute.xlu0 %2149
      %2151 = vrot.lane.b32.xlu0 %v1977, 127
      %v2152 = vpop.permute.xlu0 %2151
      %2153 = vrot.lane.b32.xlu0 %v1978, 127
      %v2154 = vpop.permute.xlu0 %2153
      %2155 = vrot.lane.b32.xlu0 %v1979, 127
      %v2156 = vpop.permute.xlu0 %2155
      %2157 = vrot.lane.b32.xlu0 %v1980, 127
      %v2158 = vpop.permute.xlu0 %2157
      %2159 = vrot.lane.b32.xlu0 %v1981, 127
      %v2160 = vpop.permute.xlu0 %2159
      %2161 = vrot.lane.b32.xlu0 %v1982, 127
      %v2162 = vpop.permute.xlu0 %2161
      %2175 = vrot.lane.b32.xlu0 %v1971, 126
      %v2176 = vpop.permute.xlu0 %2175
      %2177 = vrot.lane.b32.xlu0 %v1972, 126
      %v2178 = vpop.permute.xlu0 %2177
      %2179 = vrot.lane.b32.xlu0 %v1973, 126
      %v2180 = vpop.permute.xlu0 %2179
      %2181 = vrot.lane.b32.xlu0 %v1974, 126
      %v2182 = vpop.permute.xlu0 %2181
      %2183 = vrot.lane.b32.xlu0 %v1975, 126
      %v2184 = vpop.permute.xlu0 %2183
      %2185 = vrot.lane.b32.xlu0 %v1976, 126
      %v2186 = vpop.permute.xlu0 %2185
      %2187 = vrot.lane.b32.xlu0 %v1977, 126
      %v2188 = vpop.permute.xlu0 %2187
      %2189 = vrot.lane.b32.xlu0 %v1978, 126
      %v2190 = vpop.permute.xlu0 %2189
      %2191 = vrot.lane.b32.xlu0 %v1979, 126
      %v2192 = vpop.permute.xlu0 %2191
      %2193 = vrot.lane.b32.xlu0 %v1980, 126
      %v2194 = vpop.permute.xlu0 %2193
      %2195 = vrot.lane.b32.xlu0 %v1981, 126
      %v2196 = vpop.permute.xlu0 %2195
      %2197 = vrot.lane.b32.xlu0 %v1982, 126
      %v2198 = vpop.permute.xlu0 %2197
      %2211 = vrot.lane.b32.xlu0 %v1971, 125
      %v2212 = vpop.permute.xlu0 %2211
      %2213 = vrot.lane.b32.xlu0 %v1972, 125
      %v2214 = vpop.permute.xlu0 %2213
      %2215 = vrot.lane.b32.xlu0 %v1973, 125
      %v2216 = vpop.permute.xlu0 %2215
      %2217 = vrot.lane.b32.xlu0 %v1974, 125
      %v2218 = vpop.permute.xlu0 %2217
      %2219 = vrot.lane.b32.xlu0 %v1975, 125
      %v2220 = vpop.permute.xlu0 %2219
      %2221 = vrot.lane.b32.xlu0 %v1976, 125
      %v2222 = vpop.permute.xlu0 %2221
      %2223 = vrot.lane.b32.xlu0 %v1977, 125
      %v2224 = vpop.permute.xlu0 %2223
      %2225 = vrot.lane.b32.xlu0 %v1978, 125
      %v2226 = vpop.permute.xlu0 %2225
      %2227 = vrot.lane.b32.xlu0 %v1979, 125
      %v2228 = vpop.permute.xlu0 %2227
      %2229 = vrot.lane.b32.xlu0 %v1980, 125
      %v2230 = vpop.permute.xlu0 %2229
      %2231 = vrot.lane.b32.xlu0 %v1981, 125
      %v2232 = vpop.permute.xlu0 %2231
      %2233 = vrot.lane.b32.xlu0 %v1982, 125
      %v2234 = vpop.permute.xlu0 %2233
      %2247 = vrot.lane.b32.xlu0 %v1971, 124
      %v2248 = vpop.permute.xlu0 %2247
      %2249 = vrot.lane.b32.xlu0 %v1972, 124
      %v2250 = vpop.permute.xlu0 %2249
      %2251 = vrot.lane.b32.xlu0 %v1973, 124
      %v2252 = vpop.permute.xlu0 %2251
      %2253 = vrot.lane.b32.xlu0 %v1974, 124
      %v2254 = vpop.permute.xlu0 %2253
      %2255 = vrot.lane.b32.xlu0 %v1975, 124
      %v2256 = vpop.permute.xlu0 %2255
      %2257 = vrot.lane.b32.xlu0 %v1976, 124
      %v2258 = vpop.permute.xlu0 %2257
      %2259 = vrot.lane.b32.xlu0 %v1977, 124
      %v2260 = vpop.permute.xlu0 %2259
      %2261 = vrot.lane.b32.xlu0 %v1978, 124
      %v2262 = vpop.permute.xlu0 %2261
      %2263 = vrot.lane.b32.xlu0 %v1979, 124
      %v2264 = vpop.permute.xlu0 %2263
      %2265 = vrot.lane.b32.xlu0 %v1980, 124
      %v2266 = vpop.permute.xlu0 %2265
      %2267 = vrot.lane.b32.xlu0 %v1981, 124
      %v2268 = vpop.permute.xlu0 %2267
      %2269 = vrot.lane.b32.xlu0 %v1982, 124
      %v2270 = vpop.permute.xlu0 %2269
      %v2284 = vsel %vm495, %v1986, 0
      %v2287 = vsel %vm495, %v1990, 0
      %v2290 = vsel %vm495, %v1994, 0
      %v2293 = vsel %vm495, %v1998, 0
      %v2296 = vsel %vm495, %v2002, 0
      %v2299 = vsel %vm495, %v2006, 0
      %v2302 = vsel %vm495, %v2010, 0
      %v2305 = vsel %vm495, %v2014, 0
      %v2308 = vsel %vm495, %v2018, 0
      %v2311 = vsel %vm495, %v2022, 0
      %v2314 = vsel %vm495, %v2026, 0
      %v2317 = vsel %vm495, %v2030, 0
      %v2320 = vsel %vm495, %v2034, 0
      %v2323 = vsel %vm495, %v2038, 0
      %v2326 = vsel %vm495, %v2042, 0
      %v2329 = vsel %vm495, %v2046, 0
      %v2332 = vsel %vm495, %v2050, 0
      %v2335 = vsel %vm495, %v2054, 0
      %v2338 = vsel %vm495, %v2058, 0
      %v2341 = vsel %vm495, %v2062, 0
      %v2344 = vsel %vm495, %v2066, 0
      %v2347 = vsel %vm495, %v2070, 0
      %v2350 = vsel %vm495, %v2074, 0
      %v2353 = vsel %vm495, %v2078, 0
      %v2356 = vsel %vm495, %v2082, 0
      %v2359 = vsel %vm495, %v2086, 0
      %v2362 = vsel %vm495, %v2090, 0
      %v2365 = vsel %vm495, %v2094, 0
      %v2368 = vsel %vm495, %v2098, 0
      %v2371 = vsel %vm495, %v2102, 0
      %v2374 = vsel %vm495, %v2106, 0
      %v2377 = vsel %vm495, %v2110, 0
      %2379 = vmatprep.subr.mxu0 0.0
      %2380 = vmatpush1.msra.mxu0 %v2146
      %2381 = vmatprep.subr.mxu0 0.0
      %2382 = vmatpush1.msra.mxu0 %v2144
      %2383 = vmatprep.subr.mxu0 0.0
      %2384 = vmatpush1.msra.mxu0 %v2142
      %2385 = vmatprep.subr.mxu0 0.0
      %2386 = vmatpush1.msra.mxu0 %v2140
      %2387 = vmatprep.subr.mxu0 0.0
      %2388 = vmatpush1.msra.mxu0 %v1982
      %2389 = vmatprep.subr.mxu0 0.0
      %2390 = vmatpush1.msra.mxu0 %v1981
      %2391 = vmatprep.subr.mxu0 0.0
      %2392 = vmatpush1.msra.mxu0 %v1980
      %2393 = vmatprep.subr.mxu0 0.0
      %2394 = vmatpush1.msra.mxu0 %v1979
      %2395 = vmatprep.subr.mxu0 0.0
      %2396 = vmatpush1.msra.mxu0 %v1978
      %2397 = vmatprep.subr.mxu0 0.0
      %2398 = vmatpush1.msra.mxu0 %v1977
      %2399 = vmatprep.subr.mxu0 0.0
      %2400 = vmatpush1.msra.mxu0 %v1976
      %2401 = vmatprep.subr.mxu0 0.0
      %2402 = vmatpush1.msra.mxu0 %v1975
      %2403 = vmatprep.subr.mxu0 0.0
      %2404 = vmatpush1.msra.mxu0 %v1974
      %2405 = vmatprep.subr.mxu0 0.0
      %2406 = vmatpush1.msra.mxu0 %v1973
      %2407 = vmatprep.subr.mxu0 0.0
      %2408 = vmatpush1.msra.mxu0 %v1972
      %2409 = vmatprep.subr.mxu0 0.0
      %2410 = vmatpush1.msra.mxu0 %v1971
      %2411 = vmatprep.subr.mxu0 0.0
      %2412 = vmatpush2.msra.mxu0 %v2190
      %2413 = vmatprep.subr.mxu0 0.0
      %2414 = vmatpush2.msra.mxu0 %v2188
      %2415 = vmatprep.subr.mxu0 0.0
      %2416 = vmatpush2.msra.mxu0 %v2186
      %2417 = vmatprep.subr.mxu0 0.0
      %2418 = vmatpush2.msra.mxu0 %v2184
      %2419 = vmatprep.subr.mxu0 0.0
      %2420 = vmatpush2.msra.mxu0 %v2182
      %2421 = vmatprep.subr.mxu0 0.0
      %2422 = vmatpush2.msra.mxu0 %v2180
      %2423 = vmatprep.subr.mxu0 0.0
      %2424 = vmatpush2.msra.mxu0 %v2178
      %2425 = vmatprep.subr.mxu0 0.0
      %2426 = vmatpush2.msra.mxu0 %v2176
      %2427 = vmatprep.subr.mxu0 0.0
      %2428 = vmatpush2.msra.mxu0 %v2162
      %2429 = vmatprep.subr.mxu0 0.0
      %2430 = vmatpush2.msra.mxu0 %v2160
      %2431 = vmatprep.subr.mxu0 0.0
      %2432 = vmatpush2.msra.mxu0 %v2158
      %2433 = vmatprep.subr.mxu0 0.0
      %2434 = vmatpush2.msra.mxu0 %v2156
      %2435 = vmatprep.subr.mxu0 0.0
      %2436 = vmatpush2.msra.mxu0 %v2154
      %2437 = vmatprep.subr.mxu0 0.0
      %2438 = vmatpush2.msra.mxu0 %v2152
      %2439 = vmatprep.subr.mxu0 0.0
      %2440 = vmatpush2.msra.mxu0 %v2150
      %2441 = vmatprep.subr.mxu0 0.0
      %2442 = vmatpush2.msra.mxu0 %v2148
      %2443 = vmatprep.mubr.f32.mxu0 %v1984
      %2444 = vmatmul.mubr.f32.gmra.mxu0 %v1983
      %v2445 = vpop.f32.mrf.mxu0
      %v2446 = vadd.f32 0.0, %v2445
      %v2447 = vpop.f32.mrf.mxu0
      %2448 = vmatprep.mubr.f32.mxu0 %v1988
      %2449 = vmatmul.mubr.f32.gmra.mxu0 %v1987
      %v2450 = vpop.f32.mrf.mxu0
      %v2451 = vadd.f32 0.0, %v2450
      %v2452 = vpop.f32.mrf.mxu0
      %2453 = vmatprep.mubr.f32.mxu0 %v1992
      %2454 = vmatmul.mubr.f32.gmra.mxu0 %v1991
      %v2455 = vpop.f32.mrf.mxu0
      %v2456 = vadd.f32 0.0, %v2455
      %v2457 = vpop.f32.mrf.mxu0
      %2458 = vmatprep.mubr.f32.mxu0 %v1996
      %2459 = vmatmul.mubr.f32.gmra.mxu0 %v1995
      %v2460 = vpop.f32.mrf.mxu0
      %v2461 = vadd.f32 0.0, %v2460
      %v2462 = vpop.f32.mrf.mxu0
      %2463 = vmatprep.mubr.f32.mxu0 %v2000
      %2464 = vmatmul.mubr.f32.gmra.mxu0 %v1999
      %v2465 = vpop.f32.mrf.mxu0
      %v2466 = vadd.f32 0.0, %v2465
      %v2467 = vpop.f32.mrf.mxu0
      %2468 = vmatprep.mubr.f32.mxu0 %v2004
      %2469 = vmatmul.mubr.f32.gmra.mxu0 %v2003
      %v2470 = vpop.f32.mrf.mxu0
      %v2471 = vadd.f32 0.0, %v2470
      %v2472 = vpop.f32.mrf.mxu0
      %2473 = vmatprep.mubr.f32.mxu0 %v2008
      %2474 = vmatmul.mubr.f32.gmra.mxu0 %v2007
      %v2475 = vpop.f32.mrf.mxu0
      %v2476 = vadd.f32 0.0, %v2475
      %v2477 = vpop.f32.mrf.mxu0
      %2478 = vmatprep.mubr.f32.mxu0 %v2012
      %2479 = vmatmul.mubr.f32.gmra.mxu0 %v2011
      %v2480 = vpop.f32.mrf.mxu0
      %v2481 = vadd.f32 0.0, %v2480
      %v2482 = vpop.f32.mrf.mxu0
      %2483 = vmatprep.mubr.f32.mxu0 %v2016
      %2484 = vmatmul.mubr.f32.gmra.mxu0 %v2015
      %v2485 = vpop.f32.mrf.mxu0
      %v2486 = vadd.f32 0.0, %v2485
      %v2487 = vpop.f32.mrf.mxu0
      %2488 = vmatprep.mubr.f32.mxu0 %v2020
      %2489 = vmatmul.mubr.f32.gmra.mxu0 %v2019
      %v2490 = vpop.f32.mrf.mxu0
      %v2491 = vadd.f32 0.0, %v2490
      %v2492 = vpop.f32.mrf.mxu0
      %2493 = vmatprep.mubr.f32.mxu0 %v2024
      %2494 = vmatmul.mubr.f32.gmra.mxu0 %v2023
      %v2495 = vpop.f32.mrf.mxu0
      %v2496 = vadd.f32 0.0, %v2495
      %v2497 = vpop.f32.mrf.mxu0
      %2498 = vmatprep.mubr.f32.mxu0 %v2028
      %2499 = vmatmul.mubr.f32.gmra.mxu0 %v2027
      %v2500 = vpop.f32.mrf.mxu0
      %v2501 = vadd.f32 0.0, %v2500
      %v2502 = vpop.f32.mrf.mxu0
      %2503 = vmatprep.mubr.f32.mxu0 %v2032
      %2504 = vmatmul.mubr.f32.gmra.mxu0 %v2031
      %v2505 = vpop.f32.mrf.mxu0
      %v2506 = vadd.f32 0.0, %v2505
      %v2507 = vpop.f32.mrf.mxu0
      %2508 = vmatprep.mubr.f32.mxu0 %v2036
      %2509 = vmatmul.mubr.f32.gmra.mxu0 %v2035
      %v2510 = vpop.f32.mrf.mxu0
      %v2511 = vadd.f32 0.0, %v2510
      %v2512 = vpop.f32.mrf.mxu0
      %2513 = vmatprep.mubr.f32.mxu0 %v2040
      %2514 = vmatmul.mubr.f32.gmra.mxu0 %v2039
      %v2515 = vpop.f32.mrf.mxu0
      %v2516 = vadd.f32 0.0, %v2515
      %v2517 = vpop.f32.mrf.mxu0
      %2518 = vmatprep.mubr.f32.mxu0 %v2044
      %2519 = vmatmul.mubr.f32.gmra.mxu0 %v2043
      %v2520 = vpop.f32.mrf.mxu0
      %v2521 = vadd.f32 0.0, %v2520
      %v2522 = vpop.f32.mrf.mxu0
      %2523 = vmatprep.mubr.f32.mxu0 %v2048
      %2524 = vmatmul.mubr.f32.gmra.mxu0 %v2047
      %v2525 = vpop.f32.mrf.mxu0
      %v2526 = vadd.f32 0.0, %v2525
      %v2527 = vpop.f32.mrf.mxu0
      %2528 = vmatprep.mubr.f32.mxu0 %v2052
      %2529 = vmatmul.mubr.f32.gmra.mxu0 %v2051
      %v2530 = vpop.f32.mrf.mxu0
      %v2531 = vadd.f32 0.0, %v2530
      %v2532 = vpop.f32.mrf.mxu0
      %2533 = vmatprep.mubr.f32.mxu0 %v2056
      %2534 = vmatmul.mubr.f32.gmra.mxu0 %v2055
      %v2535 = vpop.f32.mrf.mxu0
      %v2536 = vadd.f32 0.0, %v2535
      %v2537 = vpop.f32.mrf.mxu0
      %2538 = vmatprep.mubr.f32.mxu0 %v2060
      %2539 = vmatmul.mubr.f32.gmra.mxu0 %v2059
      %v2540 = vpop.f32.mrf.mxu0
      %v2541 = vadd.f32 0.0, %v2540
      %v2542 = vpop.f32.mrf.mxu0
      %2543 = vmatprep.mubr.f32.mxu0 %v2064
      %2544 = vmatmul.mubr.f32.gmra.mxu0 %v2063
      %v2545 = vpop.f32.mrf.mxu0
      %v2546 = vadd.f32 0.0, %v2545
      %v2547 = vpop.f32.mrf.mxu0
      %2548 = vmatprep.mubr.f32.mxu0 %v2068
      %2549 = vmatmul.mubr.f32.gmra.mxu0 %v2067
      %v2550 = vpop.f32.mrf.mxu0
      %v2551 = vadd.f32 0.0, %v2550
      %v2552 = vpop.f32.mrf.mxu0
      %2553 = vmatprep.mubr.f32.mxu0 %v2072
      %2554 = vmatmul.mubr.f32.gmra.mxu0 %v2071
      %v2555 = vpop.f32.mrf.mxu0
      %v2556 = vadd.f32 0.0, %v2555
      %v2557 = vpop.f32.mrf.mxu0
      %2558 = vmatprep.mubr.f32.mxu0 %v2076
      %2559 = vmatmul.mubr.f32.gmra.mxu0 %v2075
      %v2560 = vpop.f32.mrf.mxu0
      %v2561 = vadd.f32 0.0, %v2560
      %v2562 = vpop.f32.mrf.mxu0
      %2563 = vmatprep.mubr.f32.mxu0 %v2080
      %2564 = vmatmul.mubr.f32.gmra.mxu0 %v2079
      %v2565 = vpop.f32.mrf.mxu0
      %v2566 = vadd.f32 0.0, %v2565
      %v2567 = vpop.f32.mrf.mxu0
      %2568 = vmatprep.mubr.f32.mxu0 %v2084
      %2569 = vmatmul.mubr.f32.gmra.mxu0 %v2083
      %v2570 = vpop.f32.mrf.mxu0
      %v2571 = vadd.f32 0.0, %v2570
      %v2572 = vpop.f32.mrf.mxu0
      %2573 = vmatprep.mubr.f32.mxu0 %v2088
      %2574 = vmatmul.mubr.f32.gmra.mxu0 %v2087
      %v2575 = vpop.f32.mrf.mxu0
      %v2576 = vadd.f32 0.0, %v2575
      %v2577 = vpop.f32.mrf.mxu0
      %2578 = vmatprep.mubr.f32.mxu0 %v2092
      %2579 = vmatmul.mubr.f32.gmra.mxu0 %v2091
      %v2580 = vpop.f32.mrf.mxu0
      %v2581 = vadd.f32 0.0, %v2580
      %v2582 = vpop.f32.mrf.mxu0
      %2583 = vmatprep.mubr.f32.mxu0 %v2096
      %2584 = vmatmul.mubr.f32.gmra.mxu0 %v2095
      %v2585 = vpop.f32.mrf.mxu0
      %v2586 = vadd.f32 0.0, %v2585
      %v2587 = vpop.f32.mrf.mxu0
      %2588 = vmatprep.mubr.f32.mxu0 %v2100
      %2589 = vmatmul.mubr.f32.gmra.mxu0 %v2099
      %v2590 = vpop.f32.mrf.mxu0
      %v2591 = vadd.f32 0.0, %v2590
      %v2592 = vpop.f32.mrf.mxu0
      %2593 = vmatprep.mubr.f32.mxu0 %v2104
      %2594 = vmatmul.mubr.f32.gmra.mxu0 %v2103
      %v2595 = vpop.f32.mrf.mxu0
      %v2596 = vadd.f32 0.0, %v2595
      %v2597 = vpop.f32.mrf.mxu0
      %2598 = vmatprep.mubr.f32.mxu0 %v2108
      %2599 = vmatmul.mubr.f32.gmra.mxu0 %v2107
      %v2600 = vpop.f32.mrf.mxu0
      %v2601 = vadd.f32 0.0, %v2600
      %v2602 = vpop.f32.mrf.mxu0
      %2603 = vdwg.mxu0
      %2604 = vmatprep.subr.mxu0 0.0
      %2605 = vmatpush1.msra.mxu0 %v2234
      %2606 = vmatprep.subr.mxu0 0.0
      %2607 = vmatpush1.msra.mxu0 %v2232
      %2608 = vmatprep.subr.mxu0 0.0
      %2609 = vmatpush1.msra.mxu0 %v2230
      %2610 = vmatprep.subr.mxu0 0.0
      %2611 = vmatpush1.msra.mxu0 %v2228
      %2612 = vmatprep.subr.mxu0 0.0
      %2613 = vmatpush1.msra.mxu0 %v2226
      %2614 = vmatprep.subr.mxu0 0.0
      %2615 = vmatpush1.msra.mxu0 %v2224
      %2616 = vmatprep.subr.mxu0 0.0
      %2617 = vmatpush1.msra.mxu0 %v2222
      %2618 = vmatprep.subr.mxu0 0.0
      %2619 = vmatpush1.msra.mxu0 %v2220
      %2620 = vmatprep.subr.mxu0 0.0
      %2621 = vmatpush1.msra.mxu0 %v2218
      %2622 = vmatprep.subr.mxu0 0.0
      %2623 = vmatpush1.msra.mxu0 %v2216
      %2624 = vmatprep.subr.mxu0 0.0
      %2625 = vmatpush1.msra.mxu0 %v2214
      %2626 = vmatprep.subr.mxu0 0.0
      %2627 = vmatpush1.msra.mxu0 %v2212
      %2628 = vmatprep.subr.mxu0 0.0
      %2629 = vmatpush1.msra.mxu0 %v2198
      %2630 = vmatprep.subr.mxu0 0.0
      %2631 = vmatpush1.msra.mxu0 %v2196
      %2632 = vmatprep.subr.mxu0 0.0
      %2633 = vmatpush1.msra.mxu0 %v2194
      %2634 = vmatprep.subr.mxu0 0.0
      %2635 = vmatpush1.msra.mxu0 %v2192
      %2636 = vmatprep.subr.mxu0 0.0
      %2637 = vmatpush2.msra.mxu0 0.0
      %2638 = vmatprep.subr.mxu0 0.0
      %2639 = vmatpush2.msra.mxu0 0.0
      %2640 = vmatprep.subr.mxu0 0.0
      %2641 = vmatpush2.msra.mxu0 0.0
      %2642 = vmatprep.subr.mxu0 0.0
      %2643 = vmatpush2.msra.mxu0 0.0
      %2644 = vmatprep.subr.mxu0 0.0
      %2645 = vmatpush2.msra.mxu0 %v2270
      %2646 = vmatprep.subr.mxu0 0.0
      %2647 = vmatpush2.msra.mxu0 %v2268
      %2648 = vmatprep.subr.mxu0 0.0
      %2649 = vmatpush2.msra.mxu0 %v2266
      %2650 = vmatprep.subr.mxu0 0.0
      %2651 = vmatpush2.msra.mxu0 %v2264
      %2652 = vmatprep.subr.mxu0 0.0
      %2653 = vmatpush2.msra.mxu0 %v2262
      %2654 = vmatprep.subr.mxu0 0.0
      %2655 = vmatpush2.msra.mxu0 %v2260
      %2656 = vmatprep.subr.mxu0 0.0
      %2657 = vmatpush2.msra.mxu0 %v2258
      %2658 = vmatprep.subr.mxu0 0.0
      %2659 = vmatpush2.msra.mxu0 %v2256
      %2660 = vmatprep.subr.mxu0 0.0
      %2661 = vmatpush2.msra.mxu0 %v2254
      %2662 = vmatprep.subr.mxu0 0.0
      %2663 = vmatpush2.msra.mxu0 %v2252
      %2664 = vmatprep.subr.mxu0 0.0
      %2665 = vmatpush2.msra.mxu0 %v2250
      %2666 = vmatprep.subr.mxu0 0.0
      %2667 = vmatpush2.msra.mxu0 %v2248
      %2668 = vmatprep.mubr.f32.mxu0 %v2284
      %2669 = vmatmul.mubr.f32.gmra.mxu0 %v1985
      %v2670 = vpop.f32.mrf.mxu0
      %v2671 = vadd.f32 %v2446, %v2670
      %v2672 = vpop.f32.mrf.mxu0
      %2673 = vmatprep.mubr.f32.mxu0 %v2287
      %2674 = vmatmul.mubr.f32.gmra.mxu0 %v1989
      %v2675 = vpop.f32.mrf.mxu0
      %v2676 = vadd.f32 %v2451, %v2675
      %v2677 = vpop.f32.mrf.mxu0
      %2678 = vmatprep.mubr.f32.mxu0 %v2290
      %2679 = vmatmul.mubr.f32.gmra.mxu0 %v1993
      %v2680 = vpop.f32.mrf.mxu0
      %v2681 = vadd.f32 %v2456, %v2680
      %v2682 = vpop.f32.mrf.mxu0
      %2683 = vmatprep.mubr.f32.mxu0 %v2293
      %2684 = vmatmul.mubr.f32.gmra.mxu0 %v1997
      %v2685 = vpop.f32.mrf.mxu0
      %v2686 = vadd.f32 %v2461, %v2685
      %v2687 = vpop.f32.mrf.mxu0
      %2688 = vmatprep.mubr.f32.mxu0 %v2296
      %2689 = vmatmul.mubr.f32.gmra.mxu0 %v2001
      %v2690 = vpop.f32.mrf.mxu0
      %v2691 = vadd.f32 %v2466, %v2690
      %v2692 = vpop.f32.mrf.mxu0
      %2693 = vmatprep.mubr.f32.mxu0 %v2299
      %2694 = vmatmul.mubr.f32.gmra.mxu0 %v2005
      %v2695 = vpop.f32.mrf.mxu0
      %v2696 = vadd.f32 %v2471, %v2695
      %v2697 = vpop.f32.mrf.mxu0
      %2698 = vmatprep.mubr.f32.mxu0 %v2302
      %2699 = vmatmul.mubr.f32.gmra.mxu0 %v2009
      %v2700 = vpop.f32.mrf.mxu0
      %v2701 = vadd.f32 %v2476, %v2700
      %v2702 = vpop.f32.mrf.mxu0
      %2703 = vmatprep.mubr.f32.mxu0 %v2305
      %2704 = vmatmul.mubr.f32.gmra.mxu0 %v2013
      %v2705 = vpop.f32.mrf.mxu0
      %v2706 = vadd.f32 %v2481, %v2705
      %v2707 = vpop.f32.mrf.mxu0
      %2708 = vmatprep.mubr.f32.mxu0 %v2308
      %2709 = vmatmul.mubr.f32.gmra.mxu0 %v2017
      %v2710 = vpop.f32.mrf.mxu0
      %v2711 = vadd.f32 %v2486, %v2710
      %v2712 = vpop.f32.mrf.mxu0
      %2713 = vmatprep.mubr.f32.mxu0 %v2311
      %2714 = vmatmul.mubr.f32.gmra.mxu0 %v2021
      %v2715 = vpop.f32.mrf.mxu0
      %v2716 = vadd.f32 %v2491, %v2715
      %v2717 = vpop.f32.mrf.mxu0
      %2718 = vmatprep.mubr.f32.mxu0 %v2314
      %2719 = vmatmul.mubr.f32.gmra.mxu0 %v2025
      %v2720 = vpop.f32.mrf.mxu0
      %v2721 = vadd.f32 %v2496, %v2720
      %v2722 = vpop.f32.mrf.mxu0
      %2723 = vmatprep.mubr.f32.mxu0 %v2317
      %2724 = vmatmul.mubr.f32.gmra.mxu0 %v2029
      %v2725 = vpop.f32.mrf.mxu0
      %v2726 = vadd.f32 %v2501, %v2725
      %v2727 = vpop.f32.mrf.mxu0
      %2728 = vmatprep.mubr.f32.mxu0 %v2320
      %2729 = vmatmul.mubr.f32.gmra.mxu0 %v2033
      %v2730 = vpop.f32.mrf.mxu0
      %v2731 = vadd.f32 %v2506, %v2730
      %v2732 = vpop.f32.mrf.mxu0
      %2733 = vmatprep.mubr.f32.mxu0 %v2323
      %2734 = vmatmul.mubr.f32.gmra.mxu0 %v2037
      %v2735 = vpop.f32.mrf.mxu0
      %v2736 = vadd.f32 %v2511, %v2735
      %v2737 = vpop.f32.mrf.mxu0
      %2738 = vmatprep.mubr.f32.mxu0 %v2326
      %2739 = vmatmul.mubr.f32.gmra.mxu0 %v2041
      %v2740 = vpop.f32.mrf.mxu0
      %v2741 = vadd.f32 %v2516, %v2740
      %v2742 = vpop.f32.mrf.mxu0
      %2743 = vmatprep.mubr.f32.mxu0 %v2329
      %2744 = vmatmul.mubr.f32.gmra.mxu0 %v2045
      %v2745 = vpop.f32.mrf.mxu0
      %v2746 = vadd.f32 %v2521, %v2745
      %v2747 = vpop.f32.mrf.mxu0
      %2748 = vmatprep.mubr.f32.mxu0 %v2332
      %2749 = vmatmul.mubr.f32.gmra.mxu0 %v2049
      %v2750 = vpop.f32.mrf.mxu0
      %v2751 = vadd.f32 %v2526, %v2750
      %v2752 = vpop.f32.mrf.mxu0
      %2753 = vmatprep.mubr.f32.mxu0 %v2335
      %2754 = vmatmul.mubr.f32.gmra.mxu0 %v2053
      %v2755 = vpop.f32.mrf.mxu0
      %v2756 = vadd.f32 %v2531, %v2755
      %v2757 = vpop.f32.mrf.mxu0
      %2758 = vmatprep.mubr.f32.mxu0 %v2338
      %2759 = vmatmul.mubr.f32.gmra.mxu0 %v2057
      %v2760 = vpop.f32.mrf.mxu0
      %v2761 = vadd.f32 %v2536, %v2760
      %v2762 = vpop.f32.mrf.mxu0
      %2763 = vmatprep.mubr.f32.mxu0 %v2341
      %2764 = vmatmul.mubr.f32.gmra.mxu0 %v2061
      %v2765 = vpop.f32.mrf.mxu0
      %v2766 = vadd.f32 %v2541, %v2765
      %v2767 = vpop.f32.mrf.mxu0
      %2768 = vmatprep.mubr.f32.mxu0 %v2344
      %2769 = vmatmul.mubr.f32.gmra.mxu0 %v2065
      %v2770 = vpop.f32.mrf.mxu0
      %v2771 = vadd.f32 %v2546, %v2770
      %v2772 = vpop.f32.mrf.mxu0
      %2773 = vmatprep.mubr.f32.mxu0 %v2347
      %2774 = vmatmul.mubr.f32.gmra.mxu0 %v2069
      %v2775 = vpop.f32.mrf.mxu0
      %v2776 = vadd.f32 %v2551, %v2775
      %v2777 = vpop.f32.mrf.mxu0
      %2778 = vmatprep.mubr.f32.mxu0 %v2350
      %2779 = vmatmul.mubr.f32.gmra.mxu0 %v2073
      %v2780 = vpop.f32.mrf.mxu0
      %v2781 = vadd.f32 %v2556, %v2780
      %v2782 = vpop.f32.mrf.mxu0
      %2783 = vmatprep.mubr.f32.mxu0 %v2353
      %2784 = vmatmul.mubr.f32.gmra.mxu0 %v2077
      %v2785 = vpop.f32.mrf.mxu0
      %v2786 = vadd.f32 %v2561, %v2785
      %v2787 = vpop.f32.mrf.mxu0
      %2788 = vmatprep.mubr.f32.mxu0 %v2356
      %2789 = vmatmul.mubr.f32.gmra.mxu0 %v2081
      %v2790 = vpop.f32.mrf.mxu0
      %v2791 = vadd.f32 %v2566, %v2790
      %v2792 = vpop.f32.mrf.mxu0
      %2793 = vmatprep.mubr.f32.mxu0 %v2359
      %2794 = vmatmul.mubr.f32.gmra.mxu0 %v2085
      %v2795 = vpop.f32.mrf.mxu0
      %v2796 = vadd.f32 %v2571, %v2795
      %v2797 = vpop.f32.mrf.mxu0
      %2798 = vmatprep.mubr.f32.mxu0 %v2362
      %2799 = vmatmul.mubr.f32.gmra.mxu0 %v2089
      %v2800 = vpop.f32.mrf.mxu0
      %v2801 = vadd.f32 %v2576, %v2800
      %v2802 = vpop.f32.mrf.mxu0
      %2803 = vmatprep.mubr.f32.mxu0 %v2365
      %2804 = vmatmul.mubr.f32.gmra.mxu0 %v2093
      %v2805 = vpop.f32.mrf.mxu0
      %v2806 = vadd.f32 %v2581, %v2805
      %v2807 = vpop.f32.mrf.mxu0
      %2808 = vmatprep.mubr.f32.mxu0 %v2368
      %2809 = vmatmul.mubr.f32.gmra.mxu0 %v2097
      %v2810 = vpop.f32.mrf.mxu0
      %v2811 = vadd.f32 %v2586, %v2810
      %v2812 = vpop.f32.mrf.mxu0
      %2813 = vmatprep.mubr.f32.mxu0 %v2371
      %2814 = vmatmul.mubr.f32.gmra.mxu0 %v2101
      %v2815 = vpop.f32.mrf.mxu0
      %v2816 = vadd.f32 %v2591, %v2815
      %v2817 = vpop.f32.mrf.mxu0
      %2818 = vmatprep.mubr.f32.mxu0 %v2374
      %2819 = vmatmul.mubr.f32.gmra.mxu0 %v2105
      %v2820 = vpop.f32.mrf.mxu0
      %v2821 = vadd.f32 %v2596, %v2820
      %v2822 = vpop.f32.mrf.mxu0
      %2823 = vmatprep.mubr.f32.mxu0 %v2377
      %2824 = vmatmul.mubr.f32.gmra.mxu0 %v2109
      %v2825 = vpop.f32.mrf.mxu0
      %v2826 = vadd.f32 %v2601, %v2825
      %v2827 = vpop.f32.mrf.mxu0
      %2828 = vdwg.mxu0
      %v2845 = vlaneseq
      %v2846 = vshrl.u32 %v2845, 7
      %v2847 = vsub.s32 0, %v2846
      %v2848 = vrot.slane %v2111, %v2847
      %v2849 = vlaneseq
      %v2850 = vshrl.u32 %v2849, 7
      %v2851 = vsub.s32 0, %v2850
      %v2852 = vrot.slane %v2112, %v2851
      %v2853 = vlaneseq
      %v2854 = vshrl.u32 %v2853, 7
      %v2855 = vsub.s32 0, %v2854
      %v2856 = vrot.slane %v2113, %v2855
      %v2857 = vlaneseq
      %v2858 = vshrl.u32 %v2857, 7
      %v2859 = vsub.s32 0, %v2858
      %v2860 = vrot.slane %v2114, %v2859
      %v2861 = vlaneseq
      %v2862 = vshrl.u32 %v2861, 7
      %v2863 = vsub.s32 0, %v2862
      %v2864 = vrot.slane %v2115, %v2863
      %v2865 = vlaneseq
      %v2866 = vshrl.u32 %v2865, 7
      %v2867 = vsub.s32 0, %v2866
      %v2868 = vrot.slane %v2116, %v2867
      %v2869 = vlaneseq
      %v2870 = vshrl.u32 %v2869, 7
      %v2871 = vsub.s32 0, %v2870
      %v2872 = vrot.slane %v2117, %v2871
      %v2873 = vlaneseq
      %v2874 = vshrl.u32 %v2873, 7
      %v2875 = vsub.s32 0, %v2874
      %v2876 = vrot.slane %v2118, %v2875
      %v2877 = vlaneseq
      %v2878 = vshrl.u32 %v2877, 7
      %v2879 = vsub.s32 0, %v2878
      %v2880 = vrot.slane %v2119, %v2879
      %v2881 = vlaneseq
      %v2882 = vshrl.u32 %v2881, 7
      %v2883 = vsub.s32 0, %v2882
      %v2884 = vrot.slane %v2120, %v2883
      %v2885 = vlaneseq
      %v2886 = vshrl.u32 %v2885, 7
      %v2887 = vsub.s32 0, %v2886
      %v2888 = vrot.slane %v2121, %v2887
      %v2889 = vlaneseq
      %v2890 = vshrl.u32 %v2889, 7
      %v2891 = vsub.s32 0, %v2890
      %v2892 = vrot.slane %v2122, %v2891
      %v2893 = vlaneseq
      %v2894 = vshrl.u32 %v2893, 7
      %v2895 = vsub.s32 0, %v2894
      %v2896 = vrot.slane %v2123, %v2895
      %v2897 = vlaneseq
      %v2898 = vshrl.u32 %v2897, 7
      %v2899 = vsub.s32 0, %v2898
      %v2900 = vrot.slane %v2124, %v2899
      %v2901 = vlaneseq
      %v2902 = vshrl.u32 %v2901, 7
      %v2903 = vsub.s32 0, %v2902
      %v2904 = vrot.slane %v2125, %v2903
      %v2905 = vlaneseq
      %v2906 = vshrl.u32 %v2905, 7
      %v2907 = vsub.s32 0, %v2906
      %v2908 = vrot.slane %v2126, %v2907
      %2909 = vset.pattern.permute.xlu0 0
      %2910 = vperm.xlu0 %2909, %v2848
      %v2911 = vpop.permute.xlu0 %2910
      %2913 = vset.pattern.permute.xlu0 0
      %2914 = vperm.xlu0 %2913, %v2852
      %v2915 = vpop.permute.xlu0 %2914
      %2917 = vset.pattern.permute.xlu0 0
      %2918 = vperm.xlu0 %2917, %v2856
      %v2919 = vpop.permute.xlu0 %2918
      %2921 = vset.pattern.permute.xlu0 0
      %2922 = vperm.xlu0 %2921, %v2860
      %v2923 = vpop.permute.xlu0 %2922
      %2925 = vset.pattern.permute.xlu0 0
      %2926 = vperm.xlu0 %2925, %v2864
      %v2927 = vpop.permute.xlu0 %2926
      %2929 = vset.pattern.permute.xlu0 0
      %2930 = vperm.xlu0 %2929, %v2868
      %v2931 = vpop.permute.xlu0 %2930
      %2933 = vset.pattern.permute.xlu0 0
      %2934 = vperm.xlu0 %2933, %v2872
      %v2935 = vpop.permute.xlu0 %2934
      %2937 = vset.pattern.permute.xlu0 0
      %2938 = vperm.xlu0 %2937, %v2876
      %v2939 = vpop.permute.xlu0 %2938
      %2941 = vset.pattern.permute.xlu0 0
      %2942 = vperm.xlu0 %2941, %v2880
      %v2943 = vpop.permute.xlu0 %2942
      %2945 = vset.pattern.permute.xlu0 0
      %2946 = vperm.xlu0 %2945, %v2884
      %v2947 = vpop.permute.xlu0 %2946
      %2949 = vset.pattern.permute.xlu0 0
      %2950 = vperm.xlu0 %2949, %v2888
      %v2951 = vpop.permute.xlu0 %2950
      %2953 = vset.pattern.permute.xlu0 0
      %2954 = vperm.xlu0 %2953, %v2892
      %v2955 = vpop.permute.xlu0 %2954
      %2957 = vset.pattern.permute.xlu0 0
      %2958 = vperm.xlu0 %2957, %v2896
      %v2959 = vpop.permute.xlu0 %2958
      %2961 = vset.pattern.permute.xlu0 0
      %2962 = vperm.xlu0 %2961, %v2900
      %v2963 = vpop.permute.xlu0 %2962
      %2965 = vset.pattern.permute.xlu0 0
      %2966 = vperm.xlu0 %2965, %v2904
      %v2967 = vpop.permute.xlu0 %2966
      %2969 = vset.pattern.permute.xlu0 0
      %2970 = vperm.xlu0 %2969, %v2908
      %v2971 = vpop.permute.xlu0 %2970
      %v2973 = vadd.f32 %v2671, %v2911
      %v2974 = vadd.f32 %v2676, %v2911
      %v2975 = vadd.f32 %v2681, %v2915
      %v2976 = vadd.f32 %v2686, %v2915
      %v2977 = vadd.f32 %v2691, %v2919
      %v2978 = vadd.f32 %v2696, %v2919
      %v2979 = vadd.f32 %v2701, %v2923
      %v2980 = vadd.f32 %v2706, %v2923
      %v2981 = vadd.f32 %v2711, %v2927
      %v2982 = vadd.f32 %v2716, %v2927
      %v2983 = vadd.f32 %v2721, %v2931
      %v2984 = vadd.f32 %v2726, %v2931
      %v2985 = vadd.f32 %v2731, %v2935
      %v2986 = vadd.f32 %v2736, %v2935
      %v2987 = vadd.f32 %v2741, %v2939
      %v2988 = vadd.f32 %v2746, %v2939
      %v2989 = vadd.f32 %v2751, %v2943
      %v2990 = vadd.f32 %v2756, %v2943
      %v2991 = vadd.f32 %v2761, %v2947
      %v2992 = vadd.f32 %v2766, %v2947
      %v2993 = vadd.f32 %v2771, %v2951
      %v2994 = vadd.f32 %v2776, %v2951
      %v2995 = vadd.f32 %v2781, %v2955
      %v2996 = vadd.f32 %v2786, %v2955
      %v2997 = vadd.f32 %v2791, %v2959
      %v2998 = vadd.f32 %v2796, %v2959
      %v2999 = vadd.f32 %v2801, %v2963
      %v3000 = vadd.f32 %v2806, %v2963
      %v3001 = vadd.f32 %v2811, %v2967
      %v3002 = vadd.f32 %v2816, %v2967
      %v3003 = vadd.f32 %v2821, %v2971
      %v3004 = vadd.f32 %v2826, %v2971
      %v3005 = vmax.f32 %v2973, 0.0
      %v3006 = vmax.f32 %v2974, 0.0
      %v3007 = vmax.f32 %v2975, 0.0
      %v3008 = vmax.f32 %v2976, 0.0
      %v3009 = vmax.f32 %v2977, 0.0
      %v3010 = vmax.f32 %v2978, 0.0
      %v3011 = vmax.f32 %v2979, 0.0
      %v3012 = vmax.f32 %v2980, 0.0
      %v3013 = vmax.f32 %v2981, 0.0
      %v3014 = vmax.f32 %v2982, 0.0
      %v3015 = vmax.f32 %v2983, 0.0
      %v3016 = vmax.f32 %v2984, 0.0
      %v3017 = vmax.f32 %v2985, 0.0
      %v3018 = vmax.f32 %v2986, 0.0
      %v3019 = vmax.f32 %v2987, 0.0
      %v3020 = vmax.f32 %v2988, 0.0
      %v3021 = vmax.f32 %v2989, 0.0
      %v3022 = vmax.f32 %v2990, 0.0
      %v3023 = vmax.f32 %v2991, 0.0
      %v3024 = vmax.f32 %v2992, 0.0
      %v3025 = vmax.f32 %v2993, 0.0
      %v3026 = vmax.f32 %v2994, 0.0
      %v3027 = vmax.f32 %v2995, 0.0
      %v3028 = vmax.f32 %v2996, 0.0
      %v3029 = vmax.f32 %v2997, 0.0
      %v3030 = vmax.f32 %v2998, 0.0
      %v3031 = vmax.f32 %v2999, 0.0
      %v3032 = vmax.f32 %v3000, 0.0
      %v3033 = vmax.f32 %v3001, 0.0
      %v3034 = vmax.f32 %v3002, 0.0
      %v3035 = vmax.f32 %v3003, 0.0
      %v3036 = vmax.f32 %v3004, 0.0
      %vm3037 = vcmask 77824
      %3038 = vst.msk [vmem:[#allocation4] sm:$0x1f] %vm3037, 0.0
      %3039 = vst.msk [vmem:[#allocation4 + $0x8] sm:$0x1f] %vm3037, 0.0
      %3040 = vst.msk [vmem:[#allocation4 + $0x10] sm:$0x1f] %vm3037, 0.0
      %3041 = vst.msk [vmem:[#allocation4 + $0x18] sm:$0x1f] %vm3037, 0.0
      %3042 = vst.msk [vmem:[#allocation4 + $0x20] sm:$0x1f] %vm3037, 0.0
      %3043 = vst.msk [vmem:[#allocation4 + $0x28] sm:$0x1f] %vm3037, 0.0
      %3044 = vst.msk [vmem:[#allocation4 + $0x30] sm:$0x1f] %vm3037, 0.0
      %3045 = vst.msk [vmem:[#allocation4 + $0x38] sm:$0x1f] %vm3037, 0.0
      %3046 = vst.msk [vmem:[#allocation4 + $0x40] sm:$0x1f] %vm3037, 0.0
      %3047 = vst.msk [vmem:[#allocation4 + $0x48] sm:$0x1f] %vm3037, 0.0
      %3048 = vst.msk [vmem:[#allocation4 + $0x50] sm:$0x1f] %vm3037, 0.0
      %3049 = vst.msk [vmem:[#allocation4 + $0x58] sm:$0x1f] %vm3037, 0.0
      %3050 = vst.msk [vmem:[#allocation4 + $0x60] sm:$0x1f] %vm3037, 0.0
      %3051 = vst.msk [vmem:[#allocation4 + $0x68] sm:$0x1f] %vm3037, 0.0
      %3052 = vst.msk [vmem:[#allocation4 + $0x70] sm:$0x1f] %vm3037, 0.0
      %3053 = vst.msk [vmem:[#allocation4 + $0x78] sm:$0x1f] %vm3037, 0.0
      %v3070 = vrot.slane %v3005, 1
      %v3071 = vrot.slane %v3007, 1
      %v3072 = vrot.slane %v3009, 1
      %v3073 = vrot.slane %v3011, 1
      %v3074 = vrot.slane %v3013, 1
      %v3075 = vrot.slane %v3015, 1
      %v3076 = vrot.slane %v3017, 1
      %v3077 = vrot.slane %v3019, 1
      %v3078 = vrot.slane %v3021, 1
      %v3079 = vrot.slane %v3023, 1
      %v3080 = vrot.slane %v3025, 1
      %v3081 = vrot.slane %v3027, 1
      %v3082 = vrot.slane %v3029, 1
      %v3083 = vrot.slane %v3031, 1
      %v3084 = vrot.slane %v3033, 1
      %v3085 = vrot.slane %v3035, 1
      %v3102 = vmax.f32 %v3005, %v3070
      %v3103 = vmax.f32 %v3007, %v3071
      %v3104 = vmax.f32 %v3009, %v3072
      %v3105 = vmax.f32 %v3011, %v3073
      %v3106 = vmax.f32 %v3013, %v3074
      %v3107 = vmax.f32 %v3015, %v3075
      %v3108 = vmax.f32 %v3017, %v3076
      %v3109 = vmax.f32 %v3019, %v3077
      %v3110 = vmax.f32 %v3021, %v3078
      %v3111 = vmax.f32 %v3023, %v3079
      %v3112 = vmax.f32 %v3025, %v3080
      %v3113 = vmax.f32 %v3027, %v3081
      %v3114 = vmax.f32 %v3029, %v3082
      %v3115 = vmax.f32 %v3031, %v3083
      %v3116 = vmax.f32 %v3033, %v3084
      %v3117 = vmax.f32 %v3035, %v3085
      %vm3118 = vcmask 73728
      %3119 = vst.msk [vmem:[#allocation4] sm:$0x1] %vm3118, %v3102
      %3120 = vst.msk [vmem:[#allocation4 + $0x8] sm:$0x1] %vm3118, %v3103
      %3121 = vst.msk [vmem:[#allocation4 + $0x10] sm:$0x1] %vm3118, %v3104
      %3122 = vst.msk [vmem:[#allocation4 + $0x18] sm:$0x1] %vm3118, %v3105
      %3123 = vst.msk [vmem:[#allocation4 + $0x20] sm:$0x1] %vm3118, %v3106
      %3124 = vst.msk [vmem:[#allocation4 + $0x28] sm:$0x1] %vm3118, %v3107
      %3125 = vst.msk [vmem:[#allocation4 + $0x30] sm:$0x1] %vm3118, %v3108
      %3126 = vst.msk [vmem:[#allocation4 + $0x38] sm:$0x1] %vm3118, %v3109
      %3127 = vst.msk [vmem:[#allocation4 + $0x40] sm:$0x1] %vm3118, %v3110
      %3128 = vst.msk [vmem:[#allocation4 + $0x48] sm:$0x1] %vm3118, %v3111
      %3129 = vst.msk [vmem:[#allocation4 + $0x50] sm:$0x1] %vm3118, %v3112
      %3130 = vst.msk [vmem:[#allocation4 + $0x58] sm:$0x1] %vm3118, %v3113
      %3131 = vst.msk [vmem:[#allocation4 + $0x60] sm:$0x1] %vm3118, %v3114
      %3132 = vst.msk [vmem:[#allocation4 + $0x68] sm:$0x1] %vm3118, %v3115
      %3133 = vst.msk [vmem:[#allocation4 + $0x70] sm:$0x1] %vm3118, %v3116
      %3134 = vst.msk [vmem:[#allocation4 + $0x78] sm:$0x1] %vm3118, %v3117
      %vm3135 = vcmask 75778
      %3136 = vst.msk [vmem:[#allocation4 - $0x1] sm:$0x4] %vm3135, %v3102
      %3137 = vst.msk [vmem:[#allocation4 + $0x7] sm:$0x4] %vm3135, %v3103
      %3138 = vst.msk [vmem:[#allocation4 + $0xf] sm:$0x4] %vm3135, %v3104
      %3139 = vst.msk [vmem:[#allocation4 + $0x17] sm:$0x4] %vm3135, %v3105
      %3140 = vst.msk [vmem:[#allocation4 + $0x1f] sm:$0x4] %vm3135, %v3106
      %3141 = vst.msk [vmem:[#allocation4 + $0x27] sm:$0x4] %vm3135, %v3107
      %3142 = vst.msk [vmem:[#allocation4 + $0x2f] sm:$0x4] %vm3135, %v3108
      %3143 = vst.msk [vmem:[#allocation4 + $0x37] sm:$0x4] %vm3135, %v3109
      %3144 = vst.msk [vmem:[#allocation4 + $0x3f] sm:$0x4] %vm3135, %v3110
      %3145 = vst.msk [vmem:[#allocation4 + $0x47] sm:$0x4] %vm3135, %v3111
      %3146 = vst.msk [vmem:[#allocation4 + $0x4f] sm:$0x4] %vm3135, %v3112
      %3147 = vst.msk [vmem:[#allocation4 + $0x57] sm:$0x4] %vm3135, %v3113
      %3148 = vst.msk [vmem:[#allocation4 + $0x5f] sm:$0x4] %vm3135, %v3114
      %3149 = vst.msk [vmem:[#allocation4 + $0x67] sm:$0x4] %vm3135, %v3115
      %3150 = vst.msk [vmem:[#allocation4 + $0x6f] sm:$0x4] %vm3135, %v3116
      %3151 = vst.msk [vmem:[#allocation4 + $0x77] sm:$0x4] %vm3135, %v3117
      %vm3152 = vcmask 77828
      %3153 = vst.msk [vmem:[#allocation4 - $0x2] sm:$0x10] %vm3152, %v3102
      %3154 = vst.msk [vmem:[#allocation4 + $0x6] sm:$0x10] %vm3152, %v3103
      %3155 = vst.msk [vmem:[#allocation4 + $0xe] sm:$0x10] %vm3152, %v3104
      %3156 = vst.msk [vmem:[#allocation4 + $0x16] sm:$0x10] %vm3152, %v3105
      %3157 = vst.msk [vmem:[#allocation4 + $0x1e] sm:$0x10] %vm3152, %v3106
      %3158 = vst.msk [vmem:[#allocation4 + $0x26] sm:$0x10] %vm3152, %v3107
      %3159 = vst.msk [vmem:[#allocation4 + $0x2e] sm:$0x10] %vm3152, %v3108
      %3160 = vst.msk [vmem:[#allocation4 + $0x36] sm:$0x10] %vm3152, %v3109
      %3161 = vst.msk [vmem:[#allocation4 + $0x3e] sm:$0x10] %vm3152, %v3110
      %3162 = vst.msk [vmem:[#allocation4 + $0x46] sm:$0x10] %vm3152, %v3111
      %3163 = vst.msk [vmem:[#allocation4 + $0x4e] sm:$0x10] %vm3152, %v3112
      %3164 = vst.msk [vmem:[#allocation4 + $0x56] sm:$0x10] %vm3152, %v3113
      %3165 = vst.msk [vmem:[#allocation4 + $0x5e] sm:$0x10] %vm3152, %v3114
      %3166 = vst.msk [vmem:[#allocation4 + $0x66] sm:$0x10] %vm3152, %v3115
      %3167 = vst.msk [vmem:[#allocation4 + $0x6e] sm:$0x10] %vm3152, %v3116
      %3168 = vst.msk [vmem:[#allocation4 + $0x76] sm:$0x10] %vm3152, %v3117
      %vm3169 = vcmask 79878
      %3170 = vst.msk [vmem:[#allocation4 - $0x3] sm:$0x40] %vm3169, %v3102
      %3171 = vst.msk [vmem:[#allocation4 + $0x5] sm:$0x40] %vm3169, %v3103
      %3172 = vst.msk [vmem:[#allocation4 + $0xd] sm:$0x40] %vm3169, %v3104
      %3173 = vst.msk [vmem:[#allocation4 + $0x15] sm:$0x40] %vm3169, %v3105
      %3174 = vst.msk [vmem:[#allocation4 + $0x1d] sm:$0x40] %vm3169, %v3106
      %3175 = vst.msk [vmem:[#allocation4 + $0x25] sm:$0x40] %vm3169, %v3107
      %3176 = vst.msk [vmem:[#allocation4 + $0x2d] sm:$0x40] %vm3169, %v3108
      %3177 = vst.msk [vmem:[#allocation4 + $0x35] sm:$0x40] %vm3169, %v3109
      %3178 = vst.msk [vmem:[#allocation4 + $0x3d] sm:$0x40] %vm3169, %v3110
      %3179 = vst.msk [vmem:[#allocation4 + $0x45] sm:$0x40] %vm3169, %v3111
      %3180 = vst.msk [vmem:[#allocation4 + $0x4d] sm:$0x40] %vm3169, %v3112
      %3181 = vst.msk [vmem:[#allocation4 + $0x55] sm:$0x40] %vm3169, %v3113
      %3182 = vst.msk [vmem:[#allocation4 + $0x5d] sm:$0x40] %vm3169, %v3114
      %3183 = vst.msk [vmem:[#allocation4 + $0x65] sm:$0x40] %vm3169, %v3115
      %3184 = vst.msk [vmem:[#allocation4 + $0x6d] sm:$0x40] %vm3169, %v3116
      %3185 = vst.msk [vmem:[#allocation4 + $0x75] sm:$0x40] %vm3169, %v3117
      %v3202 = vrot.slane %v3006, 1
      %v3203 = vrot.slane %v3008, 1
      %v3204 = vrot.slane %v3010, 1
      %v3205 = vrot.slane %v3012, 1
      %v3206 = vrot.slane %v3014, 1
      %v3207 = vrot.slane %v3016, 1
      %v3208 = vrot.slane %v3018, 1
      %v3209 = vrot.slane %v3020, 1
      %v3210 = vrot.slane %v3022, 1
      %v3211 = vrot.slane %v3024, 1
      %v3212 = vrot.slane %v3026, 1
      %v3213 = vrot.slane %v3028, 1
      %v3214 = vrot.slane %v3030, 1
      %v3215 = vrot.slane %v3032, 1
      %v3216 = vrot.slane %v3034, 1
      %v3217 = vrot.slane %v3036, 1
      %v3234 = vmax.f32 %v3006, %v3202
      %v3235 = vmax.f32 %v3008, %v3203
      %v3236 = vmax.f32 %v3010, %v3204
      %v3237 = vmax.f32 %v3012, %v3205
      %v3238 = vmax.f32 %v3014, %v3206
      %v3239 = vmax.f32 %v3016, %v3207
      %v3240 = vmax.f32 %v3018, %v3208
      %v3241 = vmax.f32 %v3020, %v3209
      %v3242 = vmax.f32 %v3022, %v3210
      %v3243 = vmax.f32 %v3024, %v3211
      %v3244 = vmax.f32 %v3026, %v3212
      %v3245 = vmax.f32 %v3028, %v3213
      %v3246 = vmax.f32 %v3030, %v3214
      %v3247 = vmax.f32 %v3032, %v3215
      %v3248 = vmax.f32 %v3034, %v3216
      %v3249 = vmax.f32 %v3036, %v3217
      %3250 = vst.msk [vmem:[#allocation4 + $0x4] sm:$0x1] %vm3118, %v3234
      %3251 = vst.msk [vmem:[#allocation4 + $0xc] sm:$0x1] %vm3118, %v3235
      %3252 = vst.msk [vmem:[#allocation4 + $0x14] sm:$0x1] %vm3118, %v3236
      %3253 = vst.msk [vmem:[#allocation4 + $0x1c] sm:$0x1] %vm3118, %v3237
      %3254 = vst.msk [vmem:[#allocation4 + $0x24] sm:$0x1] %vm3118, %v3238
      %3255 = vst.msk [vmem:[#allocation4 + $0x2c] sm:$0x1] %vm3118, %v3239
      %3256 = vst.msk [vmem:[#allocation4 + $0x34] sm:$0x1] %vm3118, %v3240
      %3257 = vst.msk [vmem:[#allocation4 + $0x3c] sm:$0x1] %vm3118, %v3241
      %3258 = vst.msk [vmem:[#allocation4 + $0x44] sm:$0x1] %vm3118, %v3242
      %3259 = vst.msk [vmem:[#allocation4 + $0x4c] sm:$0x1] %vm3118, %v3243
      %3260 = vst.msk [vmem:[#allocation4 + $0x54] sm:$0x1] %vm3118, %v3244
      %3261 = vst.msk [vmem:[#allocation4 + $0x5c] sm:$0x1] %vm3118, %v3245
      %3262 = vst.msk [vmem:[#allocation4 + $0x64] sm:$0x1] %vm3118, %v3246
      %3263 = vst.msk [vmem:[#allocation4 + $0x6c] sm:$0x1] %vm3118, %v3247
      %3264 = vst.msk [vmem:[#allocation4 + $0x74] sm:$0x1] %vm3118, %v3248
      %3265 = vst.msk [vmem:[#allocation4 + $0x7c] sm:$0x1] %vm3118, %v3249
      %v3266 = vld [vmem:[#allocation4] sm:$0x1f]
      %v3267 = vld [vmem:[#allocation4 + $0x8] sm:$0x1f]
      %v3268 = vld [vmem:[#allocation4 + $0x10] sm:$0x1f]
      %v3269 = vld [vmem:[#allocation4 + $0x18] sm:$0x1f]
      %v3270 = vld [vmem:[#allocation4 + $0x20] sm:$0x1f]
      %v3271 = vld [vmem:[#allocation4 + $0x28] sm:$0x1f]
      %v3272 = vld [vmem:[#allocation4 + $0x30] sm:$0x1f]
      %v3273 = vld [vmem:[#allocation4 + $0x38] sm:$0x1f]
      %v3274 = vld [vmem:[#allocation4 + $0x40] sm:$0x1f]
      %v3275 = vld [vmem:[#allocation4 + $0x48] sm:$0x1f]
      %v3276 = vld [vmem:[#allocation4 + $0x50] sm:$0x1f]
      %v3277 = vld [vmem:[#allocation4 + $0x58] sm:$0x1f]
      %v3278 = vld [vmem:[#allocation4 + $0x60] sm:$0x1f]
      %v3279 = vld [vmem:[#allocation4 + $0x68] sm:$0x1f]
      %v3280 = vld [vmem:[#allocation4 + $0x70] sm:$0x1f]
      %v3281 = vld [vmem:[#allocation4 + $0x78] sm:$0x1f]
      %3298 = vrot.lane.b32.xlu0 %v3266, 127
      %v3299 = vpop.permute.xlu0 %3298
      %3300 = vrot.lane.b32.xlu0 %v3267, 127
      %v3301 = vpop.permute.xlu0 %3300
      %3302 = vrot.lane.b32.xlu0 %v3268, 127
      %v3303 = vpop.permute.xlu0 %3302
      %3304 = vrot.lane.b32.xlu0 %v3269, 127
      %v3305 = vpop.permute.xlu0 %3304
      %3306 = vrot.lane.b32.xlu0 %v3270, 127
      %v3307 = vpop.permute.xlu0 %3306
      %3308 = vrot.lane.b32.xlu0 %v3271, 127
      %v3309 = vpop.permute.xlu0 %3308
      %3310 = vrot.lane.b32.xlu0 %v3272, 127
      %v3311 = vpop.permute.xlu0 %3310
      %3312 = vrot.lane.b32.xlu0 %v3273, 127
      %v3313 = vpop.permute.xlu0 %3312
      %3314 = vrot.lane.b32.xlu0 %v3274, 127
      %v3315 = vpop.permute.xlu0 %3314
      %3316 = vrot.lane.b32.xlu0 %v3275, 127
      %v3317 = vpop.permute.xlu0 %3316
      %3318 = vrot.lane.b32.xlu0 %v3276, 127
      %v3319 = vpop.permute.xlu0 %3318
      %3320 = vrot.lane.b32.xlu0 %v3277, 127
      %v3321 = vpop.permute.xlu0 %3320
      %3322 = vrot.lane.b32.xlu0 %v3278, 127
      %v3323 = vpop.permute.xlu0 %3322
      %3324 = vrot.lane.b32.xlu0 %v3279, 127
      %v3325 = vpop.permute.xlu0 %3324
      %3326 = vrot.lane.b32.xlu0 %v3280, 127
      %v3327 = vpop.permute.xlu0 %3326
      %3328 = vrot.lane.b32.xlu0 %v3281, 127
      %v3329 = vpop.permute.xlu0 %3328
      %v3346 = vmax.f32 %v3266, %v3299
      %v3347 = vmax.f32 %v3267, %v3301
      %v3348 = vmax.f32 %v3268, %v3303
      %v3349 = vmax.f32 %v3269, %v3305
      %v3350 = vmax.f32 %v3270, %v3307
      %v3351 = vmax.f32 %v3271, %v3309
      %v3352 = vmax.f32 %v3272, %v3311
      %v3353 = vmax.f32 %v3273, %v3313
      %v3354 = vmax.f32 %v3274, %v3315
      %v3355 = vmax.f32 %v3275, %v3317
      %v3356 = vmax.f32 %v3276, %v3319
      %v3357 = vmax.f32 %v3277, %v3321
      %v3358 = vmax.f32 %v3278, %v3323
      %v3359 = vmax.f32 %v3279, %v3325
      %v3360 = vmax.f32 %v3280, %v3327
      %v3361 = vmax.f32 %v3281, %v3329
      %vm3362 = vcmask 4096
      %3363 = vst.msk [vmem:[%s224] sm:$0x1f] %vm3362, %v3346
      %3364 = vst.msk [vmem:[%s224 + $0x8] sm:$0x1f] %vm3362, %v3347
      %3365 = vst.msk [vmem:[%s224 + $0x10] sm:$0x1f] %vm3362, %v3348
      %3366 = vst.msk [vmem:[%s224 + $0x18] sm:$0x1f] %vm3362, %v3349
      %3367 = vst.msk [vmem:[%s224 + $0x20] sm:$0x1f] %vm3362, %v3350
      %3368 = vst.msk [vmem:[%s224 + $0x28] sm:$0x1f] %vm3362, %v3351
      %3369 = vst.msk [vmem:[%s224 + $0x30] sm:$0x1f] %vm3362, %v3352
      %3370 = vst.msk [vmem:[%s224 + $0x38] sm:$0x1f] %vm3362, %v3353
      %3371 = vst.msk [vmem:[%s224 + $0x40] sm:$0x1f] %vm3362, %v3354
      %3372 = vst.msk [vmem:[%s224 + $0x48] sm:$0x1f] %vm3362, %v3355
      %3373 = vst.msk [vmem:[%s224 + $0x50] sm:$0x1f] %vm3362, %v3356
      %3374 = vst.msk [vmem:[%s224 + $0x58] sm:$0x1f] %vm3362, %v3357
      %3375 = vst.msk [vmem:[%s224 + $0x60] sm:$0x1f] %vm3362, %v3358
      %3376 = vst.msk [vmem:[%s224 + $0x68] sm:$0x1f] %vm3362, %v3359
      %3377 = vst.msk [vmem:[%s224 + $0x70] sm:$0x1f] %vm3362, %v3360
      %3378 = vst.msk [vmem:[%s224 + $0x78] sm:$0x1f] %vm3362, %v3361
      %3395 = vrot.lane.b32.xlu0 %v3346, 127
      %v3396 = vpop.permute.xlu0 %3395
      %3397 = vrot.lane.b32.xlu0 %v3347, 127
      %v3398 = vpop.permute.xlu0 %3397
      %3399 = vrot.lane.b32.xlu0 %v3348, 127
      %v3400 = vpop.permute.xlu0 %3399
      %3401 = vrot.lane.b32.xlu0 %v3349, 127
      %v3402 = vpop.permute.xlu0 %3401
      %3403 = vrot.lane.b32.xlu0 %v3350, 127
      %v3404 = vpop.permute.xlu0 %3403
      %3405 = vrot.lane.b32.xlu0 %v3351, 127
      %v3406 = vpop.permute.xlu0 %3405
      %3407 = vrot.lane.b32.xlu0 %v3352, 127
      %v3408 = vpop.permute.xlu0 %3407
      %3409 = vrot.lane.b32.xlu0 %v3353, 127
      %v3410 = vpop.permute.xlu0 %3409
      %3411 = vrot.lane.b32.xlu0 %v3354, 127
      %v3412 = vpop.permute.xlu0 %3411
      %3413 = vrot.lane.b32.xlu0 %v3355, 127
      %v3414 = vpop.permute.xlu0 %3413
      %3415 = vrot.lane.b32.xlu0 %v3356, 127
      %v3416 = vpop.permute.xlu0 %3415
      %3417 = vrot.lane.b32.xlu0 %v3357, 127
      %v3418 = vpop.permute.xlu0 %3417
      %3419 = vrot.lane.b32.xlu0 %v3358, 127
      %v3420 = vpop.permute.xlu0 %3419
      %3421 = vrot.lane.b32.xlu0 %v3359, 127
      %v3422 = vpop.permute.xlu0 %3421
      %3423 = vrot.lane.b32.xlu0 %v3360, 127
      %v3424 = vpop.permute.xlu0 %3423
      %3425 = vrot.lane.b32.xlu0 %v3361, 127
      %v3426 = vpop.permute.xlu0 %3425
      %vm3443 = vcmask 12296
      %3444 = vst.msk [vmem:[%s224] sm:$0x1f] %vm3443, %v3396
      %3445 = vst.msk [vmem:[%s224 + $0x8] sm:$0x1f] %vm3443, %v3398
      %3446 = vst.msk [vmem:[%s224 + $0x10] sm:$0x1f] %vm3443, %v3400
      %3447 = vst.msk [vmem:[%s224 + $0x18] sm:$0x1f] %vm3443, %v3402
      %3448 = vst.msk [vmem:[%s224 + $0x20] sm:$0x1f] %vm3443, %v3404
      %3449 = vst.msk [vmem:[%s224 + $0x28] sm:$0x1f] %vm3443, %v3406
      %3450 = vst.msk [vmem:[%s224 + $0x30] sm:$0x1f] %vm3443, %v3408
      %3451 = vst.msk [vmem:[%s224 + $0x38] sm:$0x1f] %vm3443, %v3410
      %3452 = vst.msk [vmem:[%s224 + $0x40] sm:$0x1f] %vm3443, %v3412
      %3453 = vst.msk [vmem:[%s224 + $0x48] sm:$0x1f] %vm3443, %v3414
      %3454 = vst.msk [vmem:[%s224 + $0x50] sm:$0x1f] %vm3443, %v3416
      %3455 = vst.msk [vmem:[%s224 + $0x58] sm:$0x1f] %vm3443, %v3418
      %3456 = vst.msk [vmem:[%s224 + $0x60] sm:$0x1f] %vm3443, %v3420
      %3457 = vst.msk [vmem:[%s224 + $0x68] sm:$0x1f] %vm3443, %v3422
      %3458 = vst.msk [vmem:[%s224 + $0x70] sm:$0x1f] %vm3443, %v3424
      %3459 = vst.msk [vmem:[%s224 + $0x78] sm:$0x1f] %vm3443, %v3426
      %3460 = vrot.lane.b32.xlu0 %v3346, 126
      %v3461 = vpop.permute.xlu0 %3460
      %3462 = vrot.lane.b32.xlu0 %v3347, 126
      %v3463 = vpop.permute.xlu0 %3462
      %3464 = vrot.lane.b32.xlu0 %v3348, 126
      %v3465 = vpop.permute.xlu0 %3464
      %3466 = vrot.lane.b32.xlu0 %v3349, 126
      %v3467 = vpop.permute.xlu0 %3466
      %3468 = vrot.lane.b32.xlu0 %v3350, 126
      %v3469 = vpop.permute.xlu0 %3468
      %3470 = vrot.lane.b32.xlu0 %v3351, 126
      %v3471 = vpop.permute.xlu0 %3470
      %3472 = vrot.lane.b32.xlu0 %v3352, 126
      %v3473 = vpop.permute.xlu0 %3472
      %3474 = vrot.lane.b32.xlu0 %v3353, 126
      %v3475 = vpop.permute.xlu0 %3474
      %3476 = vrot.lane.b32.xlu0 %v3354, 126
      %v3477 = vpop.permute.xlu0 %3476
      %3478 = vrot.lane.b32.xlu0 %v3355, 126
      %v3479 = vpop.permute.xlu0 %3478
      %3480 = vrot.lane.b32.xlu0 %v3356, 126
      %v3481 = vpop.permute.xlu0 %3480
      %3482 = vrot.lane.b32.xlu0 %v3357, 126
      %v3483 = vpop.permute.xlu0 %3482
      %3484 = vrot.lane.b32.xlu0 %v3358, 126
      %v3485 = vpop.permute.xlu0 %3484
      %3486 = vrot.lane.b32.xlu0 %v3359, 126
      %v3487 = vpop.permute.xlu0 %3486
      %3488 = vrot.lane.b32.xlu0 %v3360, 126
      %v3489 = vpop.permute.xlu0 %3488
      %3490 = vrot.lane.b32.xlu0 %v3361, 126
      %v3491 = vpop.permute.xlu0 %3490
      %vm3508 = vcmask 20496
      %3509 = vst.msk [vmem:[%s224] sm:$0x1f] %vm3508, %v3461
      %3510 = vst.msk [vmem:[%s224 + $0x8] sm:$0x1f] %vm3508, %v3463
      %3511 = vst.msk [vmem:[%s224 + $0x10] sm:$0x1f] %vm3508, %v3465
      %3512 = vst.msk [vmem:[%s224 + $0x18] sm:$0x1f] %vm3508, %v3467
      %3513 = vst.msk [vmem:[%s224 + $0x20] sm:$0x1f] %vm3508, %v3469
      %3514 = vst.msk [vmem:[%s224 + $0x28] sm:$0x1f] %vm3508, %v3471
      %3515 = vst.msk [vmem:[%s224 + $0x30] sm:$0x1f] %vm3508, %v3473
      %3516 = vst.msk [vmem:[%s224 + $0x38] sm:$0x1f] %vm3508, %v3475
      %3517 = vst.msk [vmem:[%s224 + $0x40] sm:$0x1f] %vm3508, %v3477
      %3518 = vst.msk [vmem:[%s224 + $0x48] sm:$0x1f] %vm3508, %v3479
      %3519 = vst.msk [vmem:[%s224 + $0x50] sm:$0x1f] %vm3508, %v3481
      %3520 = vst.msk [vmem:[%s224 + $0x58] sm:$0x1f] %vm3508, %v3483
      %3521 = vst.msk [vmem:[%s224 + $0x60] sm:$0x1f] %vm3508, %v3485
      %3522 = vst.msk [vmem:[%s224 + $0x68] sm:$0x1f] %vm3508, %v3487
      %3523 = vst.msk [vmem:[%s224 + $0x70] sm:$0x1f] %vm3508, %v3489
      %3524 = vst.msk [vmem:[%s224 + $0x78] sm:$0x1f] %vm3508, %v3491
      %3525 = vrot.lane.b32.xlu0 %v3346, 125
      %v3526 = vpop.permute.xlu0 %3525
      %3527 = vrot.lane.b32.xlu0 %v3347, 125
      %v3528 = vpop.permute.xlu0 %3527
      %3529 = vrot.lane.b32.xlu0 %v3348, 125
      %v3530 = vpop.permute.xlu0 %3529
      %3531 = vrot.lane.b32.xlu0 %v3349, 125
      %v3532 = vpop.permute.xlu0 %3531
      %3533 = vrot.lane.b32.xlu0 %v3350, 125
      %v3534 = vpop.permute.xlu0 %3533
      %3535 = vrot.lane.b32.xlu0 %v3351, 125
      %v3536 = vpop.permute.xlu0 %3535
      %3537 = vrot.lane.b32.xlu0 %v3352, 125
      %v3538 = vpop.permute.xlu0 %3537
      %3539 = vrot.lane.b32.xlu0 %v3353, 125
      %v3540 = vpop.permute.xlu0 %3539
      %3541 = vrot.lane.b32.xlu0 %v3354, 125
      %v3542 = vpop.permute.xlu0 %3541
      %3543 = vrot.lane.b32.xlu0 %v3355, 125
      %v3544 = vpop.permute.xlu0 %3543
      %3545 = vrot.lane.b32.xlu0 %v3356, 125
      %v3546 = vpop.permute.xlu0 %3545
      %3547 = vrot.lane.b32.xlu0 %v3357, 125
      %v3548 = vpop.permute.xlu0 %3547
      %3549 = vrot.lane.b32.xlu0 %v3358, 125
      %v3550 = vpop.permute.xlu0 %3549
      %3551 = vrot.lane.b32.xlu0 %v3359, 125
      %v3552 = vpop.permute.xlu0 %3551
      %3553 = vrot.lane.b32.xlu0 %v3360, 125
      %v3554 = vpop.permute.xlu0 %3553
      %3555 = vrot.lane.b32.xlu0 %v3361, 125
      %v3556 = vpop.permute.xlu0 %3555
      %vm3573 = vcmask 28696
      %3574 = vst.msk [vmem:[%s224] sm:$0x1f] %vm3573, %v3526
      %3575 = vst.msk [vmem:[%s224 + $0x8] sm:$0x1f] %vm3573, %v3528
      %3576 = vst.msk [vmem:[%s224 + $0x10] sm:$0x1f] %vm3573, %v3530
      %3577 = vst.msk [vmem:[%s224 + $0x18] sm:$0x1f] %vm3573, %v3532
      %3578 = vst.msk [vmem:[%s224 + $0x20] sm:$0x1f] %vm3573, %v3534
      %3579 = vst.msk [vmem:[%s224 + $0x28] sm:$0x1f] %vm3573, %v3536
      %3580 = vst.msk [vmem:[%s224 + $0x30] sm:$0x1f] %vm3573, %v3538
      %3581 = vst.msk [vmem:[%s224 + $0x38] sm:$0x1f] %vm3573, %v3540
      %3582 = vst.msk [vmem:[%s224 + $0x40] sm:$0x1f] %vm3573, %v3542
      %3583 = vst.msk [vmem:[%s224 + $0x48] sm:$0x1f] %vm3573, %v3544
      %3584 = vst.msk [vmem:[%s224 + $0x50] sm:$0x1f] %vm3573, %v3546
      %3585 = vst.msk [vmem:[%s224 + $0x58] sm:$0x1f] %vm3573, %v3548
      %3586 = vst.msk [vmem:[%s224 + $0x60] sm:$0x1f] %vm3573, %v3550
      %3587 = vst.msk [vmem:[%s224 + $0x68] sm:$0x1f] %vm3573, %v3552
      %3588 = vst.msk [vmem:[%s224 + $0x70] sm:$0x1f] %vm3573, %v3554
      %3589 = vst.msk [vmem:[%s224 + $0x78] sm:$0x1f] %vm3573, %v3556
      %3590 = vrot.lane.b32.xlu0 %v3346, 124
      %v3591 = vpop.permute.xlu0 %3590
      %3592 = vrot.lane.b32.xlu0 %v3347, 124
      %v3593 = vpop.permute.xlu0 %3592
      %3594 = vrot.lane.b32.xlu0 %v3348, 124
      %v3595 = vpop.permute.xlu0 %3594
      %3596 = vrot.lane.b32.xlu0 %v3349, 124
      %v3597 = vpop.permute.xlu0 %3596
      %3598 = vrot.lane.b32.xlu0 %v3350, 124
      %v3599 = vpop.permute.xlu0 %3598
      %3600 = vrot.lane.b32.xlu0 %v3351, 124
      %v3601 = vpop.permute.xlu0 %3600
      %3602 = vrot.lane.b32.xlu0 %v3352, 124
      %v3603 = vpop.permute.xlu0 %3602
      %3604 = vrot.lane.b32.xlu0 %v3353, 124
      %v3605 = vpop.permute.xlu0 %3604
      %3606 = vrot.lane.b32.xlu0 %v3354, 124
      %v3607 = vpop.permute.xlu0 %3606
      %3608 = vrot.lane.b32.xlu0 %v3355, 124
      %v3609 = vpop.permute.xlu0 %3608
      %3610 = vrot.lane.b32.xlu0 %v3356, 124
      %v3611 = vpop.permute.xlu0 %3610
      %3612 = vrot.lane.b32.xlu0 %v3357, 124
      %v3613 = vpop.permute.xlu0 %3612
      %3614 = vrot.lane.b32.xlu0 %v3358, 124
      %v3615 = vpop.permute.xlu0 %3614
      %3616 = vrot.lane.b32.xlu0 %v3359, 124
      %v3617 = vpop.permute.xlu0 %3616
      %3618 = vrot.lane.b32.xlu0 %v3360, 124
      %v3619 = vpop.permute.xlu0 %3618
      %3620 = vrot.lane.b32.xlu0 %v3361, 124
      %v3621 = vpop.permute.xlu0 %3620
      %vm3638 = vcmask 36896
      %3639 = vst.msk [vmem:[%s224] sm:$0x1f] %vm3638, %v3591
      %3640 = vst.msk [vmem:[%s224 + $0x8] sm:$0x1f] %vm3638, %v3593
      %3641 = vst.msk [vmem:[%s224 + $0x10] sm:$0x1f] %vm3638, %v3595
      %3642 = vst.msk [vmem:[%s224 + $0x18] sm:$0x1f] %vm3638, %v3597
      %3643 = vst.msk [vmem:[%s224 + $0x20] sm:$0x1f] %vm3638, %v3599
      %3644 = vst.msk [vmem:[%s224 + $0x28] sm:$0x1f] %vm3638, %v3601
      %3645 = vst.msk [vmem:[%s224 + $0x30] sm:$0x1f] %vm3638, %v3603
      %3646 = vst.msk [vmem:[%s224 + $0x38] sm:$0x1f] %vm3638, %v3605
      %3647 = vst.msk [vmem:[%s224 + $0x40] sm:$0x1f] %vm3638, %v3607
      %3648 = vst.msk [vmem:[%s224 + $0x48] sm:$0x1f] %vm3638, %v3609
      %3649 = vst.msk [vmem:[%s224 + $0x50] sm:$0x1f] %vm3638, %v3611
      %3650 = vst.msk [vmem:[%s224 + $0x58] sm:$0x1f] %vm3638, %v3613
      %3651 = vst.msk [vmem:[%s224 + $0x60] sm:$0x1f] %vm3638, %v3615
      %3652 = vst.msk [vmem:[%s224 + $0x68] sm:$0x1f] %vm3638, %v3617
      %3653 = vst.msk [vmem:[%s224 + $0x70] sm:$0x1f] %vm3638, %v3619
      %3654 = vst.msk [vmem:[%s224 + $0x78] sm:$0x1f] %vm3638, %v3621
      %p3655 = scmp.lt.s32.totalorder %s16, 3
      %s3656 = scalar_select %p3655, %s16, 3
      %s3657 = smul.addr %s3656, 16
      %s3658 = smul.addr %s3657, 8
      %s3659 = scalar_lea.vmem %s5, %s3658
      // Predicated region
      $region41: #{net_forward.2} parent=39 // pred_check
        %p3660 = pneg %p144
      $region42: #{net_forward.2} parent=39 // pred_check_branch
        %3662 = sbr.rel (%p3660) target = $region44
      $region43: #{net_forward.2} parent=39 // pred_region
        _
      $region44: #{net_forward.2} parent=39 // pred_fallthru
        _
    $region40: #{net_forward.2} parent=5 // pred_fallthru
      _
    %p3663 = scmp.le.s32.totalorder 2, %s11
    // Predicated region
    $region45: #{net_forward.2} parent=5 // pred_check
      %p3664 = pneg %p3663
    $region46: #{net_forward.2} parent=5 // pred_check_branch
      %3666 = sbr.rel (%p3664) target = $region48
    $region47: #{net_forward.2} parent=5 // pred_region
      %s3667 = ssub.s32 %s11, 2
      // Predicated region
      $region49: #{net_forward.2} parent=47 // pred_check
        %p3668 = pneg %p150
      $region50: #{net_forward.2} parent=47 // pred_check_branch
        %3670 = sbr.rel (%p3668) target = $region52
      $region51: #{net_forward.2} parent=47 // pred_region
        %p3671 = scmp.lt.s32.totalorder %s17, 3
        %s3672 = scalar_select %p3671, %s17, 3
        %s3673 = smul.addr %s3672, 16
        %s3674 = smul.addr %s3673, 8
        %s3675 = scalar_lea.vmem %s5, %s3674
      $region52: #{net_forward.2} parent=47 // pred_fallthru
        _
    $region48: #{net_forward.2} parent=5 // pred_fallthru
      _
  $region6: #{net_forward.2} parent=0 // loop_footer
    %s15 = sadd.s32 1, %s11
  $region7: #{net_forward.2} parent=0 // loop_footer_branch
    %10 = sbr.rel target = $region3
  $region8: #{net_forward.2} parent=0 // loop_exit
    _

</llo_original>
